<compile_context>
chip_gen: v5e
topology: v5e:2x2
jax: 0.10.0
libtpu: 0.0.40
codegen_flags: <defaults>
</compile_context>

<pallas_src>
import numpy as np
import jax
import jax.numpy as jnp
from jax.experimental import pallas as pl
from jax.experimental.pallas import tpu as pltpu

P_MULTIRES = 10
D_MULTIRES = 4
P_EMBED_DIM = 3 + 3 * 2 * P_MULTIRES   # 63
D_EMBED_DIM = 3 + 3 * 2 * D_MULTIRES   # 27
IN_DIM = P_EMBED_DIM + D_EMBED_DIM     # 90
HIDDEN = 128
OUT_DIM = 2
N_FREQ = 3 * (P_MULTIRES + D_MULTIRES)  # 42
MAX_TILE_N = 1024                       # per-tile VMEM ~4-5 MiB -> safe on v5e/v6e/v7x


def _build_perm():
    """Maps kernel feature column -> original embedding column.

    Kernel feature layout: [p(3), d(3), sin(scaled)(42), cos(scaled)(42), zeros(38)]
    where scaled = [p*2^0 .. p*2^9, d*2^0 .. d*2^3] (freq-major, xyz inner).
    Original layout: [p, sin(p*2^0), cos(p*2^0), ..., cos(p*2^9), d, sin(d*2^0), ..., cos(d*2^3)].
    """
    perm = np.zeros(IN_DIM, dtype=np.int32)
    perm[0:3] = np.arange(3)                        # raw points
    perm[3:6] = P_EMBED_DIM + np.arange(3)          # raw dirs
    sin_base = 6
    cos_base = 6 + N_FREQ                           # 48
    for j in range(P_MULTIRES):
        for c in range(3):
            perm[sin_base + 3 * j + c] = 3 + 6 * j + c
            perm[cos_base + 3 * j + c] = 6 + 6 * j + c
    for j in range(D_MULTIRES):
        for c in range(3):
            perm[sin_base + 3 * P_MULTIRES + 3 * j + c] = P_EMBED_DIM + 3 + 6 * j + c
            perm[cos_base + 3 * P_MULTIRES + 3 * j + c] = P_EMBED_DIM + 6 + 6 * j + c
    return perm


def _build_freq_phase():
    """(8, 128) f32 constant F.

    In-kernel:  scaled[:, k] = sum_{c<6} pd[:, c] * F[c, k]  +  F[6, k]
    Rows 0..5 place channel c (px,py,pz,dx,dy,dz) with its 2^j frequency into the right
    feature column; row 6 adds +pi/2 on the cos columns so cos(x) == sin(x + pi/2); row 7
    and columns 90..127 are zero (feat padding).
    """
    F = np.zeros((8, HIDDEN), dtype=np.float32)
    for c in range(3):
        F[c, c] = 1.0            # raw p_c -> col c
        F[3 + c, 3 + c] = 1.0    # raw d_c -> col 3+c
    sin_base = 6
    cos_base = 6 + N_FREQ        # 48
    half_pi = np.float32(np.pi / 2)
    for j in range(P_MULTIRES):
        for c in range(3):
            F[c, sin_base + 3 * j + c] = 2.0 ** j
            F[c, cos_base + 3 * j + c] = 2.0 ** j
            F[6, cos_base + 3 * j + c] = half_pi
    for j in range(D_MULTIRES):
        for c in range(3):
            F[3 + c, sin_base + 3 * P_MULTIRES + 3 * j + c] = 2.0 ** j
            F[3 + c, cos_base + 3 * P_MULTIRES + 3 * j + c] = 2.0 ** j
            F[6, cos_base + 3 * P_MULTIRES + 3 * j + c] = half_pi
    return F


_PERM = _build_perm()
_FREQ_PHASE = _build_freq_phase()


def vis_kernel(pd_ref, w_ref, b_ref, f_ref, o_ref):
    pd = pd_ref[...]                     # (T, 8)  f32 : [px,py,pz,dx,dy,dz,0,0]
    F = f_ref[...]                       # (8, 128) f32 : freq/placement rows + phase row 6

    # Lane-dense NeRF embedding.  Pure VPU broadcast-multiply/adds; everything stays f32
    # before the sin so the 2^9 frequency scaling keeps full phase precision.
    scaled = pd[:, 0:1] * F[0:1, :]
    for c in range(1, 6):
        scaled = scaled + pd[:, c:c + 1] * F[c:c + 1, :]
    scaled = scaled + F[6:7, :]          # +pi/2 on cos columns, 0 elsewhere

    col = jax.lax.broadcasted_iota(jnp.int32, scaled.shape, 1)
    # cols 0..5 pass through raw p/d; cols 6..89 -> sin / cos (via phase); cols 90..127 stay 0.
    feat = jnp.where(col < 6, scaled, jnp.sin(scaled))     # (T, 128) f32

    h = feat.astype(jnp.bfloat16)
    for k in range(4):                   # hidden Linear + ReLU
        z = jnp.dot(h, w_ref[k], preferred_element_type=jnp.float32) + b_ref[k]
        h = jnp.maximum(z, 0.0).astype(jnp.bfloat16)
    z = jnp.dot(h, w_ref[4], preferred_element_type=jnp.float32) + b_ref[4]
    o_ref[...] = z[:, :OUT_DIM]          # lane-narrow store: only 2 useful columns hit HBM


def _pick_tile(n):
    """Largest row tile.  A single grid step when N fits (the grid is a serial loop on
    v5e/v6e, so extra steps only add ~0.35 us each); for large N the grid naturally has
    many 'parallel' steps, which also keeps both v7x TensorCores busy."""
    if n <= MAX_TILE_N:
        return max(8, ((n + 7) // 8) * 8)
    return MAX_TILE_N


@jax.jit
def vis_network(points, view_dirs, *params):
    w0, b0, w1, b1, w2, b2, w3, b3, w4, b4 = params
    points = points.astype(jnp.float32)
    view_dirs = view_dirs.astype(jnp.float32)
    n = points.shape[0]
    tile_n = _pick_tile(n)
    n_pad = pl.cdiv(n, tile_n) * tile_n

    # One lane-dense (n_pad, 8) input: [p(3), d(3), 0, 0]; the row padding fuses with this
    # packing pass, so there is no separate pad traffic over HBM.
    pd = jnp.concatenate([points, view_dirs, jnp.zeros((n, 2), jnp.float32)], axis=-1)
    pd = jnp.pad(pd, ((0, n_pad - n), (0, 0)))

    # Host-side weight packing: permute + K-pad w0 (90 -> 128), N-pad w4/b4 (2 -> 128),
    # one bf16 weight ref + one f32 bias ref, both resident via constant index_map.
    w0p = jnp.zeros((HIDDEN, HIDDEN), jnp.float32).at[:IN_DIM].set(w0[_PERM, :])
    w4p = jnp.zeros((HIDDEN, HIDDEN), jnp.float32).at[:, :OUT_DIM].set(w4)
    b4p = jnp.zeros((1, HIDDEN), jnp.float32).at[:, :OUT_DIM].set(b4)
    W = jnp.stack([w0p, w1, w2, w3, w4p]).astype(jnp.bfloat16)    # (5, 128, 128) bf16
    B = jnp.stack([b0, b1, b2, b3, b4p]).astype(jnp.float32)      # (5, 1, 128)   f32
    F = jnp.asarray(_FREQ_PHASE)                                  # (8, 128)      f32

    cost = pl.CostEstimate(
        flops=int(2 * n_pad * 5 * HIDDEN * HIDDEN),
        transcendentals=int(n_pad * HIDDEN),                      # one sin over the 128-lane slab
        bytes_accessed=int(n_pad * (8 * 4 + OUT_DIM * 4)
                           + 5 * HIDDEN * HIDDEN * 2 + 5 * HIDDEN * 4 + 8 * HIDDEN * 4),
    )

    out = pl.pallas_call(
        vis_kernel,
        out_shape=jax.ShapeDtypeStruct((n_pad, OUT_DIM), jnp.float32),
        grid_spec=pltpu.PrefetchScalarGridSpec(
            num_scalar_prefetch=0,
            grid=(n_pad // tile_n,),
            in_specs=[pl.BlockSpec((tile_n, 8), lambda i: (i, 0)),
                      pl.BlockSpec((5, HIDDEN, HIDDEN), lambda i: (0, 0, 0)),
                      pl.BlockSpec((5, 1, HIDDEN), lambda i: (0, 0, 0)),
                      pl.BlockSpec((8, HIDDEN), lambda i: (0, 0))],
            out_specs=pl.BlockSpec((tile_n, OUT_DIM), lambda i: (i, 0)),
        ),
        compiler_params=pltpu.CompilerParams(
            dimension_semantics=("parallel",)),
        cost_estimate=cost,
    )(pd, W, B, F)
    return out[:n]


def init_params(key):
    """Deterministic Linear params (PyTorch-style uniform +-1/sqrt(fan_in))."""
    dims = [IN_DIM, HIDDEN, HIDDEN, HIDDEN, HIDDEN, OUT_DIM]
    params = []
    for i in range(len(dims) - 1):
        key, kw, kb = jax.random.split(key, 3)
        fan_in, fan_out = dims[i], dims[i + 1]
        bound = 1.0 / jnp.sqrt(jnp.float32(fan_in))
        w = jax.random.uniform(kw, (fan_in, fan_out), jnp.float32, -bound, bound)
        b = jax.random.uniform(kb, (1, fan_out), jnp.float32, -bound, bound)
        params += [w, b]
    return params


def _embed_ref(x, n_freqs):
    # NeRF embedder: log_sampling=True, include_input=True, periodic_fns=[sin, cos]
    outs = [x]
    for i in range(n_freqs):
        freq = 2.0 ** i
        outs.append(jnp.sin(x * freq))
        outs.append(jnp.cos(x * freq))
    return jnp.concatenate(outs, axis=-1)


def vis_network_ref(points, view_dirs, *params):
    """Pure-JAX f32 reference mirroring the PyTorch forward (original weight layout)."""
    w0, b0, w1, b1, w2, b2, w3, b3, w4, b4 = params
    h = jnp.concatenate([_embed_ref(points, P_MULTIRES),
                         _embed_ref(view_dirs, D_MULTIRES)], axis=-1)
    h = jnp.maximum(h @ w0 + b0, 0.0)
    h = jnp.maximum(h @ w1 + b1, 0.0)
    h = jnp.maximum(h @ w2 + b2, 0.0)
    h = jnp.maximum(h @ w3 + b3, 0.0)
    return h @ w4 + b4


if __name__ == "__main__":
    key = jax.random.PRNGKey(0)
    k_pts, k_dirs, k_param = jax.random.split(key, 3)
    params = init_params(k_param)

    def check(n, kp, kd):
        pts = jax.random.normal(kp, (n, 3), jnp.float32)
        dirs = jax.random.normal(kd, (n, 3), jnp.float32)
        dirs = dirs / jnp.linalg.norm(dirs, axis=-1, keepdims=True)
        out = jax.block_until_ready(vis_network(pts, dirs, *params))
        ref = vis_network_ref(pts, dirs, *params)
        assert out.shape == (n, OUT_DIM), out.shape
        # bf16 matmuls (f32 accumulation) -> loose tolerance vs the f32 reference
        err = float(jnp.max(jnp.abs(out - ref)))
        assert jnp.allclose(out, ref, atol=5e-2, rtol=5e-2), err

    check(200, k_pts, k_dirs)                    # single-tile path (tile=200, grid=1)
    k2a, k2b = jax.random.split(k_dirs)
    check(1500, k2a, k2b)                        # multi-step grid + row-padding path (tile=1024)

    print("KERNEL_OK")
</pallas_src>

<mosaic_0001>
module attributes {stable_mosaic.version = 11 : i64} {
  func.func @vis_kernel(%arg0: i32, %arg1: memref<200x8xf32, #tpu.memory_space<vmem>>, %arg2: memref<5x128x128xbf16, #tpu.memory_space<vmem>>, %arg3: memref<5x1x128xf32, #tpu.memory_space<vmem>>, %arg4: memref<8x128xf32, #tpu.memory_space<vmem>>, %arg5: memref<200x2xf32, #tpu.memory_space<vmem>>) attributes {dimension_semantics = [#tpu.dimension_semantics<parallel>], iteration_bounds = array<i64: 1>, scalar_prefetch = 0 : i64, scratch_operands = 0 : i64, tpu.core_type = #tpu.core_type<tc>, window_params = [{transform_indices = @transform_0, window_bounds = array<i64: 200, 8>}, {pipeline_mode = #tpu.pipeline_mode<synchronous>, transform_indices = @transform_1, window_bounds = array<i64: 5, 128, 128>}, {pipeline_mode = #tpu.pipeline_mode<synchronous>, transform_indices = @transform_2, window_bounds = array<i64: 5, 1, 128>}, {pipeline_mode = #tpu.pipeline_mode<synchronous>, transform_indices = @transform_3, window_bounds = array<i64: 8, 128>}, {transform_indices = @transform_4, window_bounds = array<i64: 200, 2>}]} {
    %c0 = arith.constant 0 : index
    %c0_0 = arith.constant 0 : index
    %0 = vector.load %arg1[%c0, %c0_0] : memref<200x8xf32, #tpu.memory_space<vmem>>, vector<200x8xf32>
    %c0_1 = arith.constant 0 : index
    %c0_2 = arith.constant 0 : index
    %1 = vector.load %arg4[%c0_1, %c0_2] : memref<8x128xf32, #tpu.memory_space<vmem>>, vector<8x128xf32>
    %2 = vector.extract_strided_slice %0 {offsets = [0, 0], sizes = [200, 1], strides = [1, 1]} : vector<200x8xf32> to vector<200x1xf32>
    %3 = vector.extract_strided_slice %1 {offsets = [0, 0], sizes = [1, 128], strides = [1, 1]} : vector<8x128xf32> to vector<1x128xf32>
    %4 = vector.broadcast %2 : vector<200x1xf32> to vector<200x128xf32>
    %5 = vector.broadcast %3 : vector<1x128xf32> to vector<200x128xf32>
    %6 = arith.mulf %4, %5 : vector<200x128xf32>
    %7 = vector.extract_strided_slice %0 {offsets = [0, 1], sizes = [200, 1], strides = [1, 1]} : vector<200x8xf32> to vector<200x1xf32>
    %8 = vector.extract_strided_slice %1 {offsets = [1, 0], sizes = [1, 128], strides = [1, 1]} : vector<8x128xf32> to vector<1x128xf32>
    %9 = vector.broadcast %7 : vector<200x1xf32> to vector<200x128xf32>
    %10 = vector.broadcast %8 : vector<1x128xf32> to vector<200x128xf32>
    %11 = arith.mulf %9, %10 : vector<200x128xf32>
    %12 = arith.addf %6, %11 : vector<200x128xf32>
    %13 = vector.extract_strided_slice %0 {offsets = [0, 2], sizes = [200, 1], strides = [1, 1]} : vector<200x8xf32> to vector<200x1xf32>
    %14 = vector.extract_strided_slice %1 {offsets = [2, 0], sizes = [1, 128], strides = [1, 1]} : vector<8x128xf32> to vector<1x128xf32>
    %15 = vector.broadcast %13 : vector<200x1xf32> to vector<200x128xf32>
    %16 = vector.broadcast %14 : vector<1x128xf32> to vector<200x128xf32>
    %17 = arith.mulf %15, %16 : vector<200x128xf32>
    %18 = arith.addf %12, %17 : vector<200x128xf32>
    %19 = vector.extract_strided_slice %0 {offsets = [0, 3], sizes = [200, 1], strides = [1, 1]} : vector<200x8xf32> to vector<200x1xf32>
    %20 = vector.extract_strided_slice %1 {offsets = [3, 0], sizes = [1, 128], strides = [1, 1]} : vector<8x128xf32> to vector<1x128xf32>
    %21 = vector.broadcast %19 : vector<200x1xf32> to vector<200x128xf32>
    %22 = vector.broadcast %20 : vector<1x128xf32> to vector<200x128xf32>
    %23 = arith.mulf %21, %22 : vector<200x128xf32>
    %24 = arith.addf %18, %23 : vector<200x128xf32>
    %25 = vector.extract_strided_slice %0 {offsets = [0, 4], sizes = [200, 1], strides = [1, 1]} : vector<200x8xf32> to vector<200x1xf32>
    %26 = vector.extract_strided_slice %1 {offsets = [4, 0], sizes = [1, 128], strides = [1, 1]} : vector<8x128xf32> to vector<1x128xf32>
    %27 = vector.broadcast %25 : vector<200x1xf32> to vector<200x128xf32>
    %28 = vector.broadcast %26 : vector<1x128xf32> to vector<200x128xf32>
    %29 = arith.mulf %27, %28 : vector<200x128xf32>
    %30 = arith.addf %24, %29 : vector<200x128xf32>
    %31 = vector.extract_strided_slice %0 {offsets = [0, 5], sizes = [200, 1], strides = [1, 1]} : vector<200x8xf32> to vector<200x1xf32>
    %32 = vector.extract_strided_slice %1 {offsets = [5, 0], sizes = [1, 128], strides = [1, 1]} : vector<8x128xf32> to vector<1x128xf32>
    %33 = vector.broadcast %31 : vector<200x1xf32> to vector<200x128xf32>
    %34 = vector.broadcast %32 : vector<1x128xf32> to vector<200x128xf32>
    %35 = arith.mulf %33, %34 : vector<200x128xf32>
    %36 = arith.addf %30, %35 : vector<200x128xf32>
    %37 = vector.extract_strided_slice %1 {offsets = [6, 0], sizes = [1, 128], strides = [1, 1]} : vector<8x128xf32> to vector<1x128xf32>
    %38 = vector.broadcast %37 : vector<1x128xf32> to vector<200x128xf32>
    %39 = arith.addf %36, %38 : vector<200x128xf32>
    %40 = tpu.iota {dimensions = array<i32: 1>} : vector<200x128xi32>
    %c6_i32 = arith.constant 6 : i32
    %41 = vector.broadcast %c6_i32 : i32 to vector<200x128xi32>
    %42 = arith.cmpi slt, %40, %41 : vector<200x128xi32>
    %43 = math.sin %39 : vector<200x128xf32>
    %44 = arith.select %42, %39, %43 : vector<200x128xi1>, vector<200x128xf32>
    %45 = arith.truncf %44 : vector<200x128xf32> to vector<200x128xbf16>
    %c0_3 = arith.constant 0 : index
    %c0_4 = arith.constant 0 : index
    %c0_5 = arith.constant 0 : index
    %46 = vector.load %arg2[%c0_3, %c0_4, %c0_5] : memref<5x128x128xbf16, #tpu.memory_space<vmem>>, vector<1x128x128xbf16>
    %47 = vector.shape_cast %46 : vector<1x128x128xbf16> to vector<128x128xbf16>
    %cst = arith.constant dense<0.000000e+00> : vector<200x128xf32>
    %48 = tpu.matmul %45, %47, %cst {dimension_numbers = #tpu.dot_dimension_numbers<[1], [0], [0], [1], [0, 0, 1, 1], [], []>} : vector<200x128xbf16>, vector<128x128xbf16>, vector<200x128xf32> -> vector<200x128xf32>
    %c0_6 = arith.constant 0 : index
    %c0_7 = arith.constant 0 : index
    %c0_8 = arith.constant 0 : index
    %49 = vector.load %arg3[%c0_6, %c0_7, %c0_8] : memref<5x1x128xf32, #tpu.memory_space<vmem>>, vector<1x1x128xf32>
    %50 = vector.shape_cast %49 : vector<1x1x128xf32> to vector<1x128xf32>
    %51 = vector.broadcast %50 : vector<1x128xf32> to vector<200x128xf32>
    %52 = arith.addf %48, %51 : vector<200x128xf32>
    %cst_9 = arith.constant 0.000000e+00 : f32
    %53 = vector.broadcast %cst_9 : f32 to vector<200x128xf32>
    %54 = arith.maximumf %52, %53 : vector<200x128xf32>
    %55 = arith.truncf %54 : vector<200x128xf32> to vector<200x128xbf16>
    %c1 = arith.constant 1 : index
    %c0_10 = arith.constant 0 : index
    %c0_11 = arith.constant 0 : index
    %56 = vector.load %arg2[%c1, %c0_10, %c0_11] : memref<5x128x128xbf16, #tpu.memory_space<vmem>>, vector<1x128x128xbf16>
    %57 = vector.shape_cast %56 : vector<1x128x128xbf16> to vector<128x128xbf16>
    %cst_12 = arith.constant dense<0.000000e+00> : vector<200x128xf32>
    %58 = tpu.matmul %55, %57, %cst_12 {dimension_numbers = #tpu.dot_dimension_numbers<[1], [0], [0], [1], [0, 0, 1, 1], [], []>} : vector<200x128xbf16>, vector<128x128xbf16>, vector<200x128xf32> -> vector<200x128xf32>
    %c1_13 = arith.constant 1 : index
    %c0_14 = arith.constant 0 : index
    %c0_15 = arith.constant 0 : index
    %59 = vector.load %arg3[%c1_13, %c0_14, %c0_15] : memref<5x1x128xf32, #tpu.memory_space<vmem>>, vector<1x1x128xf32>
    %60 = vector.shape_cast %59 : vector<1x1x128xf32> to vector<1x128xf32>
    %61 = vector.broadcast %60 : vector<1x128xf32> to vector<200x128xf32>
    %62 = arith.addf %58, %61 : vector<200x128xf32>
    %cst_16 = arith.constant 0.000000e+00 : f32
    %63 = vector.broadcast %cst_16 : f32 to vector<200x128xf32>
    %64 = arith.maximumf %62, %63 : vector<200x128xf32>
    %65 = arith.truncf %64 : vector<200x128xf32> to vector<200x128xbf16>
    %c2 = arith.constant 2 : index
    %c0_17 = arith.constant 0 : index
    %c0_18 = arith.constant 0 : index
    %66 = vector.load %arg2[%c2, %c0_17, %c0_18] : memref<5x128x128xbf16, #tpu.memory_space<vmem>>, vector<1x128x128xbf16>
    %67 = vector.shape_cast %66 : vector<1x128x128xbf16> to vector<128x128xbf16>
    %cst_19 = arith.constant dense<0.000000e+00> : vector<200x128xf32>
    %68 = tpu.matmul %65, %67, %cst_19 {dimension_numbers = #tpu.dot_dimension_numbers<[1], [0], [0], [1], [0, 0, 1, 1], [], []>} : vector<200x128xbf16>, vector<128x128xbf16>, vector<200x128xf32> -> vector<200x128xf32>
    %c2_20 = arith.constant 2 : index
    %c0_21 = arith.constant 0 : index
    %c0_22 = arith.constant 0 : index
    %69 = vector.load %arg3[%c2_20, %c0_21, %c0_22] : memref<5x1x128xf32, #tpu.memory_space<vmem>>, vector<1x1x128xf32>
    %70 = vector.shape_cast %69 : vector<1x1x128xf32> to vector<1x128xf32>
    %71 = vector.broadcast %70 : vector<1x128xf32> to vector<200x128xf32>
    %72 = arith.addf %68, %71 : vector<200x128xf32>
    %cst_23 = arith.constant 0.000000e+00 : f32
    %73 = vector.broadcast %cst_23 : f32 to vector<200x128xf32>
    %74 = arith.maximumf %72, %73 : vector<200x128xf32>
    %75 = arith.truncf %74 : vector<200x128xf32> to vector<200x128xbf16>
    %c3 = arith.constant 3 : index
    %c0_24 = arith.constant 0 : index
    %c0_25 = arith.constant 0 : index
    %76 = vector.load %arg2[%c3, %c0_24, %c0_25] : memref<5x128x128xbf16, #tpu.memory_space<vmem>>, vector<1x128x128xbf16>
    %77 = vector.shape_cast %76 : vector<1x128x128xbf16> to vector<128x128xbf16>
    %cst_26 = arith.constant dense<0.000000e+00> : vector<200x128xf32>
    %78 = tpu.matmul %75, %77, %cst_26 {dimension_numbers = #tpu.dot_dimension_numbers<[1], [0], [0], [1], [0, 0, 1, 1], [], []>} : vector<200x128xbf16>, vector<128x128xbf16>, vector<200x128xf32> -> vector<200x128xf32>
    %c3_27 = arith.constant 3 : index
    %c0_28 = arith.constant 0 : index
    %c0_29 = arith.constant 0 : index
    %79 = vector.load %arg3[%c3_27, %c0_28, %c0_29] : memref<5x1x128xf32, #tpu.memory_space<vmem>>, vector<1x1x128xf32>
    %80 = vector.shape_cast %79 : vector<1x1x128xf32> to vector<1x128xf32>
    %81 = vector.broadcast %80 : vector<1x128xf32> to vector<200x128xf32>
    %82 = arith.addf %78, %81 : vector<200x128xf32>
    %cst_30 = arith.constant 0.000000e+00 : f32
    %83 = vector.broadcast %cst_30 : f32 to vector<200x128xf32>
    %84 = arith.maximumf %82, %83 : vector<200x128xf32>
    %85 = arith.truncf %84 : vector<200x128xf32> to vector<200x128xbf16>
    %c4 = arith.constant 4 : index
    %c0_31 = arith.constant 0 : index
    %c0_32 = arith.constant 0 : index
    %86 = vector.load %arg2[%c4, %c0_31, %c0_32] : memref<5x128x128xbf16, #tpu.memory_space<vmem>>, vector<1x128x128xbf16>
    %87 = vector.shape_cast %86 : vector<1x128x128xbf16> to vector<128x128xbf16>
    %cst_33 = arith.constant dense<0.000000e+00> : vector<200x128xf32>
    %88 = tpu.matmul %85, %87, %cst_33 {dimension_numbers = #tpu.dot_dimension_numbers<[1], [0], [0], [1], [0, 0, 1, 1], [], []>} : vector<200x128xbf16>, vector<128x128xbf16>, vector<200x128xf32> -> vector<200x128xf32>
    %c4_34 = arith.constant 4 : index
    %c0_35 = arith.constant 0 : index
    %c0_36 = arith.constant 0 : index
    %89 = vector.load %arg3[%c4_34, %c0_35, %c0_36] : memref<5x1x128xf32, #tpu.memory_space<vmem>>, vector<1x1x128xf32>
    %90 = vector.shape_cast %89 : vector<1x1x128xf32> to vector<1x128xf32>
    %91 = vector.broadcast %90 : vector<1x128xf32> to vector<200x128xf32>
    %92 = arith.addf %88, %91 : vector<200x128xf32>
    %93 = vector.extract_strided_slice %92 {offsets = [0, 0], sizes = [200, 2], strides = [1, 1]} : vector<200x128xf32> to vector<200x2xf32>
    %c0_37 = arith.constant 0 : index
    %c0_38 = arith.constant 0 : index
    %94 = vector.load %arg5[%c0_37, %c0_38] : memref<200x2xf32, #tpu.memory_space<vmem>>, vector<200x2xf32>
    tpu.vector_store %arg5[%c0_37, %c0_38], %93 {strides = array<i32>} : memref<200x2xf32, #tpu.memory_space<vmem>>, vector<200x2xf32>,
    return
  }
  func.func @transform_0(%arg0: i32) -> (i32, i32) {
    %c0_i32 = arith.constant 0 : i32
    %c0_i32_0 = arith.constant 0 : i32
    return %arg0, %c0_i32 : i32, i32
  }
  func.func @transform_1(%arg0: i32) -> (i32, i32, i32) {
    %c0_i32 = arith.constant 0 : i32
    %c0_i32_0 = arith.constant 0 : i32
    %c0_i32_1 = arith.constant 0 : i32
    %c0_i32_2 = arith.constant 0 : i32
    return %c0_i32, %c0_i32_0, %c0_i32_1 : i32, i32, i32
  }
  func.func @transform_2(%arg0: i32) -> (i32, i32, i32) {
    %c0_i32 = arith.constant 0 : i32
    %c0_i32_0 = arith.constant 0 : i32
    %c0_i32_1 = arith.constant 0 : i32
    %c0_i32_2 = arith.constant 0 : i32
    return %c0_i32, %c0_i32_0, %c0_i32_1 : i32, i32, i32
  }
  func.func @transform_3(%arg0: i32) -> (i32, i32) {
    %c0_i32 = arith.constant 0 : i32
    %c0_i32_0 = arith.constant 0 : i32
    %c0_i32_1 = arith.constant 0 : i32
    return %c0_i32, %c0_i32_0 : i32, i32
  }
  func.func @transform_4(%arg0: i32) -> (i32, i32) {
    %c0_i32 = arith.constant 0 : i32
    %c0_i32_0 = arith.constant 0 : i32
    return %arg0, %c0_i32 : i32, i32
  }
}

</mosaic_0001>

<llo_original>
// kernel: vis_network.1
$region0: #{vis_network.1}
  #allocation0 [shape = 'u32[]', space=smem, size = 0x4, offset = 0x4, fixed_abs, tag = 'smem constant byte address 0x4 - core index']
  #allocation1 [shape = 'u32[72,128]{1,0:T(1,128)}', space=vmem, size = 0x9000, scoped, tag = 'internal scratch']
  %s0 = inlined_call_operand.vmem [shape: f32[200,8], index: 0, kind: input, shape index: {}]
  %s1 = inlined_call_operand.vmem [shape: bf16[5,128,128], index: 1, kind: input, shape index: {}]
  %s2 = inlined_call_operand.vmem [shape: f32[5,1,128], index: 2, kind: input, shape index: {}]
  %s3 = inlined_call_operand.vmem [shape: f32[8,128], index: 3, kind: input, shape index: {}]
  %s4 = inlined_call_operand.vmem [shape: f32[200,2], index: 4, kind: output, shape index: {}]
  %s5 = sld [smem:[#allocation0]]
  $region26: #{vis_network.1} parent=0
    _
  %s7 = ssub.s32 1, %s5
  %s8 = scalar_select 0, %s7, %s5
  // Predicated region
  $region2: #{vis_network.1} parent=0 // pred_check
    _
  $region3: #{vis_network.1} parent=0 // pred_check_branch
    %10 = sbr.rel (0) target = $region5
  $region4: #{vis_network.1} parent=0 // pred_region
    _
  $region5: #{vis_network.1} parent=0 // pred_fallthru
    _
  // Predicated region
  $region6: #{vis_network.1} parent=0 // pred_check
    _
  $region7: #{vis_network.1} parent=0 // pred_check_branch
    %12 = sbr.rel (0) target = $region9
  $region8: #{vis_network.1} parent=0 // pred_region
    _
  $region9: #{vis_network.1} parent=0 // pred_fallthru
    _
  // Predicated region
  $region10: #{vis_network.1} parent=0 // pred_check
    _
  $region11: #{vis_network.1} parent=0 // pred_check_branch
    %14 = sbr.rel (0) target = $region13
  $region12: #{vis_network.1} parent=0 // pred_region
    _
  $region13: #{vis_network.1} parent=0 // pred_fallthru
    _
  // Predicated region
  $region14: #{vis_network.1} parent=0 // pred_check
    _
  $region15: #{vis_network.1} parent=0 // pred_check_branch
    %16 = sbr.rel (0) target = $region17
  $region16: #{vis_network.1} parent=0 // pred_region
    _
  $region17: #{vis_network.1} parent=0 // pred_fallthru
    _
  %v17 = vld [vmem:[%s0] sm:$0xff]
  %v18 = vld [vmem:[%s0 + $0x8] sm:$0xff]
  %v19 = vld [vmem:[%s0 + $0x10] sm:$0xff]
  %v20 = vld [vmem:[%s0 + $0x18] sm:$0xff]
  %v21 = vld [vmem:[%s0 + $0x20] sm:$0xff]
  %v22 = vld [vmem:[%s0 + $0x28] sm:$0xff]
  %v23 = vld [vmem:[%s0 + $0x30] sm:$0xff]
  %v24 = vld [vmem:[%s0 + $0x38] sm:$0xff]
  %v25 = vld [vmem:[%s0 + $0x40] sm:$0xff]
  %v26 = vld [vmem:[%s0 + $0x48] sm:$0xff]
  %v27 = vld [vmem:[%s0 + $0x50] sm:$0xff]
  %v28 = vld [vmem:[%s0 + $0x58] sm:$0xff]
  %v29 = vld [vmem:[%s0 + $0x60] sm:$0xff]
  %v30 = vld [vmem:[%s0 + $0x68] sm:$0xff]
  %v31 = vld [vmem:[%s0 + $0x70] sm:$0xff]
  %v32 = vld [vmem:[%s0 + $0x78] sm:$0xff]
  %v33 = vld [vmem:[%s0 + $0x80] sm:$0xff]
  %v34 = vld [vmem:[%s0 + $0x88] sm:$0xff]
  %v35 = vld [vmem:[%s0 + $0x90] sm:$0xff]
  %v36 = vld [vmem:[%s0 + $0x98] sm:$0xff]
  %v37 = vld [vmem:[%s0 + $0xa0] sm:$0xff]
  %v38 = vld [vmem:[%s0 + $0xa8] sm:$0xff]
  %v39 = vld [vmem:[%s0 + $0xb0] sm:$0xff]
  %v40 = vld [vmem:[%s0 + $0xb8] sm:$0xff]
  %v41 = vld [vmem:[%s0 + $0xc0] sm:$0xff]
  %v42 = vld [vmem:[%s3] sm:$0xff]
  %44 = vset.pattern.permute.xlu0 0
  %45 = vperm.xlu0 %44, %v17
  %v46 = vpop.permute.xlu0 %45
  %49 = vset.pattern.permute.xlu0 0
  %50 = vperm.xlu0 %49, %v18
  %v51 = vpop.permute.xlu0 %50
  %54 = vset.pattern.permute.xlu0 0
  %55 = vperm.xlu0 %54, %v19
  %v56 = vpop.permute.xlu0 %55
  %59 = vset.pattern.permute.xlu0 0
  %60 = vperm.xlu0 %59, %v20
  %v61 = vpop.permute.xlu0 %60
  %64 = vset.pattern.permute.xlu0 0
  %65 = vperm.xlu0 %64, %v21
  %v66 = vpop.permute.xlu0 %65
  %69 = vset.pattern.permute.xlu0 0
  %70 = vperm.xlu0 %69, %v22
  %v71 = vpop.permute.xlu0 %70
  %74 = vset.pattern.permute.xlu0 0
  %75 = vperm.xlu0 %74, %v23
  %v76 = vpop.permute.xlu0 %75
  %79 = vset.pattern.permute.xlu0 0
  %80 = vperm.xlu0 %79, %v24
  %v81 = vpop.permute.xlu0 %80
  %84 = vset.pattern.permute.xlu0 0
  %85 = vperm.xlu0 %84, %v25
  %v86 = vpop.permute.xlu0 %85
  %89 = vset.pattern.permute.xlu0 0
  %90 = vperm.xlu0 %89, %v26
  %v91 = vpop.permute.xlu0 %90
  %94 = vset.pattern.permute.xlu0 0
  %95 = vperm.xlu0 %94, %v27
  %v96 = vpop.permute.xlu0 %95
  %99 = vset.pattern.permute.xlu0 0
  %100 = vperm.xlu0 %99, %v28
  %v101 = vpop.permute.xlu0 %100
  %104 = vset.pattern.permute.xlu0 0
  %105 = vperm.xlu0 %104, %v29
  %v106 = vpop.permute.xlu0 %105
  %109 = vset.pattern.permute.xlu0 0
  %110 = vperm.xlu0 %109, %v30
  %v111 = vpop.permute.xlu0 %110
  %114 = vset.pattern.permute.xlu0 0
  %115 = vperm.xlu0 %114, %v31
  %v116 = vpop.permute.xlu0 %115
  %119 = vset.pattern.permute.xlu0 0
  %120 = vperm.xlu0 %119, %v32
  %v121 = vpop.permute.xlu0 %120
  %124 = vset.pattern.permute.xlu0 0
  %125 = vperm.xlu0 %124, %v33
  %v126 = vpop.permute.xlu0 %125
  %129 = vset.pattern.permute.xlu0 0
  %130 = vperm.xlu0 %129, %v34
  %v131 = vpop.permute.xlu0 %130
  %134 = vset.pattern.permute.xlu0 0
  %135 = vperm.xlu0 %134, %v35
  %v136 = vpop.permute.xlu0 %135
  %139 = vset.pattern.permute.xlu0 0
  %140 = vperm.xlu0 %139, %v36
  %v141 = vpop.permute.xlu0 %140
  %144 = vset.pattern.permute.xlu0 0
  %145 = vperm.xlu0 %144, %v37
  %v146 = vpop.permute.xlu0 %145
  %149 = vset.pattern.permute.xlu0 0
  %150 = vperm.xlu0 %149, %v38
  %v151 = vpop.permute.xlu0 %150
  %154 = vset.pattern.permute.xlu0 0
  %155 = vperm.xlu0 %154, %v39
  %v156 = vpop.permute.xlu0 %155
  %159 = vset.pattern.permute.xlu0 0
  %160 = vperm.xlu0 %159, %v40
  %v161 = vpop.permute.xlu0 %160
  %164 = vset.pattern.permute.xlu0 0
  %165 = vperm.xlu0 %164, %v41
  %v166 = vpop.permute.xlu0 %165
  %v168 = vperm.slane %v42, 0
  %v169 = vmul.f32 %v46, %v168
  %v170 = vmul.f32 %v51, %v168
  %v171 = vmul.f32 %v56, %v168
  %v172 = vmul.f32 %v61, %v168
  %v173 = vmul.f32 %v66, %v168
  %v174 = vmul.f32 %v71, %v168
  %v175 = vmul.f32 %v76, %v168
  %v176 = vmul.f32 %v81, %v168
  %v177 = vmul.f32 %v86, %v168
  %v178 = vmul.f32 %v91, %v168
  %v179 = vmul.f32 %v96, %v168
  %v180 = vmul.f32 %v101, %v168
  %v181 = vmul.f32 %v106, %v168
  %v182 = vmul.f32 %v111, %v168
  %v183 = vmul.f32 %v116, %v168
  %v184 = vmul.f32 %v121, %v168
  %v185 = vmul.f32 %v126, %v168
  %v186 = vmul.f32 %v131, %v168
  %v187 = vmul.f32 %v136, %v168
  %v188 = vmul.f32 %v141, %v168
  %v189 = vmul.f32 %v146, %v168
  %v190 = vmul.f32 %v151, %v168
  %v191 = vmul.f32 %v156, %v168
  %v192 = vmul.f32 %v161, %v168
  %v193 = vmul.f32 %v166, %v168
  %194 = vset.pattern.permute.xlu0 1
  %195 = vperm.xlu0 %194, %v17
  %v196 = vpop.permute.xlu0 %195
  %198 = vset.pattern.permute.xlu0 1
  %199 = vperm.xlu0 %198, %v18
  %v200 = vpop.permute.xlu0 %199
  %202 = vset.pattern.permute.xlu0 1
  %203 = vperm.xlu0 %202, %v19
  %v204 = vpop.permute.xlu0 %203
  %206 = vset.pattern.permute.xlu0 1
  %207 = vperm.xlu0 %206, %v20
  %v208 = vpop.permute.xlu0 %207
  %210 = vset.pattern.permute.xlu0 1
  %211 = vperm.xlu0 %210, %v21
  %v212 = vpop.permute.xlu0 %211
  %214 = vset.pattern.permute.xlu0 1
  %215 = vperm.xlu0 %214, %v22
  %v216 = vpop.permute.xlu0 %215
  %218 = vset.pattern.permute.xlu0 1
  %219 = vperm.xlu0 %218, %v23
  %v220 = vpop.permute.xlu0 %219
  %222 = vset.pattern.permute.xlu0 1
  %223 = vperm.xlu0 %222, %v24
  %v224 = vpop.permute.xlu0 %223
  %226 = vset.pattern.permute.xlu0 1
  %227 = vperm.xlu0 %226, %v25
  %v228 = vpop.permute.xlu0 %227
  %230 = vset.pattern.permute.xlu0 1
  %231 = vperm.xlu0 %230, %v26
  %v232 = vpop.permute.xlu0 %231
  %234 = vset.pattern.permute.xlu0 1
  %235 = vperm.xlu0 %234, %v27
  %v236 = vpop.permute.xlu0 %235
  %238 = vset.pattern.permute.xlu0 1
  %239 = vperm.xlu0 %238, %v28
  %v240 = vpop.permute.xlu0 %239
  %242 = vset.pattern.permute.xlu0 1
  %243 = vperm.xlu0 %242, %v29
  %v244 = vpop.permute.xlu0 %243
  %246 = vset.pattern.permute.xlu0 1
  %247 = vperm.xlu0 %246, %v30
  %v248 = vpop.permute.xlu0 %247
  %250 = vset.pattern.permute.xlu0 1
  %251 = vperm.xlu0 %250, %v31
  %v252 = vpop.permute.xlu0 %251
  %254 = vset.pattern.permute.xlu0 1
  %255 = vperm.xlu0 %254, %v32
  %v256 = vpop.permute.xlu0 %255
  %258 = vset.pattern.permute.xlu0 1
  %259 = vperm.xlu0 %258, %v33
  %v260 = vpop.permute.xlu0 %259
  %262 = vset.pattern.permute.xlu0 1
  %263 = vperm.xlu0 %262, %v34
  %v264 = vpop.permute.xlu0 %263
  %266 = vset.pattern.permute.xlu0 1
  %267 = vperm.xlu0 %266, %v35
  %v268 = vpop.permute.xlu0 %267
  %270 = vset.pattern.permute.xlu0 1
  %271 = vperm.xlu0 %270, %v36
  %v272 = vpop.permute.xlu0 %271
  %274 = vset.pattern.permute.xlu0 1
  %275 = vperm.xlu0 %274, %v37
  %v276 = vpop.permute.xlu0 %275
  %278 = vset.pattern.permute.xlu0 1
  %279 = vperm.xlu0 %278, %v38
  %v280 = vpop.permute.xlu0 %279
  %282 = vset.pattern.permute.xlu0 1
  %283 = vperm.xlu0 %282, %v39
  %v284 = vpop.permute.xlu0 %283
  %286 = vset.pattern.permute.xlu0 1
  %287 = vperm.xlu0 %286, %v40
  %v288 = vpop.permute.xlu0 %287
  %290 = vset.pattern.permute.xlu0 1
  %291 = vperm.xlu0 %290, %v41
  %v292 = vpop.permute.xlu0 %291
  %v294 = vperm.slane %v42, 1
  %v295 = vmul.f32 %v196, %v294
  %v296 = vmul.f32 %v200, %v294
  %v297 = vmul.f32 %v204, %v294
  %v298 = vmul.f32 %v208, %v294
  %v299 = vmul.f32 %v212, %v294
  %v300 = vmul.f32 %v216, %v294
  %v301 = vmul.f32 %v220, %v294
  %v302 = vmul.f32 %v224, %v294
  %v303 = vmul.f32 %v228, %v294
  %v304 = vmul.f32 %v232, %v294
  %v305 = vmul.f32 %v236, %v294
  %v306 = vmul.f32 %v240, %v294
  %v307 = vmul.f32 %v244, %v294
  %v308 = vmul.f32 %v248, %v294
  %v309 = vmul.f32 %v252, %v294
  %v310 = vmul.f32 %v256, %v294
  %v311 = vmul.f32 %v260, %v294
  %v312 = vmul.f32 %v264, %v294
  %v313 = vmul.f32 %v268, %v294
  %v314 = vmul.f32 %v272, %v294
  %v315 = vmul.f32 %v276, %v294
  %v316 = vmul.f32 %v280, %v294
  %v317 = vmul.f32 %v284, %v294
  %v318 = vmul.f32 %v288, %v294
  %v319 = vmul.f32 %v292, %v294
  %v320 = vadd.f32 %v169, %v295
  %v321 = vadd.f32 %v170, %v296
  %v322 = vadd.f32 %v171, %v297
  %v323 = vadd.f32 %v172, %v298
  %v324 = vadd.f32 %v173, %v299
  %v325 = vadd.f32 %v174, %v300
  %v326 = vadd.f32 %v175, %v301
  %v327 = vadd.f32 %v176, %v302
  %v328 = vadd.f32 %v177, %v303
  %v329 = vadd.f32 %v178, %v304
  %v330 = vadd.f32 %v179, %v305
  %v331 = vadd.f32 %v180, %v306
  %v332 = vadd.f32 %v181, %v307
  %v333 = vadd.f32 %v182, %v308
  %v334 = vadd.f32 %v183, %v309
  %v335 = vadd.f32 %v184, %v310
  %v336 = vadd.f32 %v185, %v311
  %v337 = vadd.f32 %v186, %v312
  %v338 = vadd.f32 %v187, %v313
  %v339 = vadd.f32 %v188, %v314
  %v340 = vadd.f32 %v189, %v315
  %v341 = vadd.f32 %v190, %v316
  %v342 = vadd.f32 %v191, %v317
  %v343 = vadd.f32 %v192, %v318
  %v344 = vadd.f32 %v193, %v319
  %345 = vset.pattern.permute.xlu0 2
  %346 = vperm.xlu0 %345, %v17
  %v347 = vpop.permute.xlu0 %346
  %349 = vset.pattern.permute.xlu0 2
  %350 = vperm.xlu0 %349, %v18
  %v351 = vpop.permute.xlu0 %350
  %353 = vset.pattern.permute.xlu0 2
  %354 = vperm.xlu0 %353, %v19
  %v355 = vpop.permute.xlu0 %354
  %357 = vset.pattern.permute.xlu0 2
  %358 = vperm.xlu0 %357, %v20
  %v359 = vpop.permute.xlu0 %358
  %361 = vset.pattern.permute.xlu0 2
  %362 = vperm.xlu0 %361, %v21
  %v363 = vpop.permute.xlu0 %362
  %365 = vset.pattern.permute.xlu0 2
  %366 = vperm.xlu0 %365, %v22
  %v367 = vpop.permute.xlu0 %366
  %369 = vset.pattern.permute.xlu0 2
  %370 = vperm.xlu0 %369, %v23
  %v371 = vpop.permute.xlu0 %370
  %373 = vset.pattern.permute.xlu0 2
  %374 = vperm.xlu0 %373, %v24
  %v375 = vpop.permute.xlu0 %374
  %377 = vset.pattern.permute.xlu0 2
  %378 = vperm.xlu0 %377, %v25
  %v379 = vpop.permute.xlu0 %378
  %381 = vset.pattern.permute.xlu0 2
  %382 = vperm.xlu0 %381, %v26
  %v383 = vpop.permute.xlu0 %382
  %385 = vset.pattern.permute.xlu0 2
  %386 = vperm.xlu0 %385, %v27
  %v387 = vpop.permute.xlu0 %386
  %389 = vset.pattern.permute.xlu0 2
  %390 = vperm.xlu0 %389, %v28
  %v391 = vpop.permute.xlu0 %390
  %393 = vset.pattern.permute.xlu0 2
  %394 = vperm.xlu0 %393, %v29
  %v395 = vpop.permute.xlu0 %394
  %397 = vset.pattern.permute.xlu0 2
  %398 = vperm.xlu0 %397, %v30
  %v399 = vpop.permute.xlu0 %398
  %401 = vset.pattern.permute.xlu0 2
  %402 = vperm.xlu0 %401, %v31
  %v403 = vpop.permute.xlu0 %402
  %405 = vset.pattern.permute.xlu0 2
  %406 = vperm.xlu0 %405, %v32
  %v407 = vpop.permute.xlu0 %406
  %409 = vset.pattern.permute.xlu0 2
  %410 = vperm.xlu0 %409, %v33
  %v411 = vpop.permute.xlu0 %410
  %413 = vset.pattern.permute.xlu0 2
  %414 = vperm.xlu0 %413, %v34
  %v415 = vpop.permute.xlu0 %414
  %417 = vset.pattern.permute.xlu0 2
  %418 = vperm.xlu0 %417, %v35
  %v419 = vpop.permute.xlu0 %418
  %421 = vset.pattern.permute.xlu0 2
  %422 = vperm.xlu0 %421, %v36
  %v423 = vpop.permute.xlu0 %422
  %425 = vset.pattern.permute.xlu0 2
  %426 = vperm.xlu0 %425, %v37
  %v427 = vpop.permute.xlu0 %426
  %429 = vset.pattern.permute.xlu0 2
  %430 = vperm.xlu0 %429, %v38
  %v431 = vpop.permute.xlu0 %430
  %433 = vset.pattern.permute.xlu0 2
  %434 = vperm.xlu0 %433, %v39
  %v435 = vpop.permute.xlu0 %434
  %437 = vset.pattern.permute.xlu0 2
  %438 = vperm.xlu0 %437, %v40
  %v439 = vpop.permute.xlu0 %438
  %441 = vset.pattern.permute.xlu0 2
  %442 = vperm.xlu0 %441, %v41
  %v443 = vpop.permute.xlu0 %442
  %v445 = vperm.slane %v42, 2
  %v446 = vmul.f32 %v347, %v445
  %v447 = vmul.f32 %v351, %v445
  %v448 = vmul.f32 %v355, %v445
  %v449 = vmul.f32 %v359, %v445
  %v450 = vmul.f32 %v363, %v445
  %v451 = vmul.f32 %v367, %v445
  %v452 = vmul.f32 %v371, %v445
  %v453 = vmul.f32 %v375, %v445
  %v454 = vmul.f32 %v379, %v445
  %v455 = vmul.f32 %v383, %v445
  %v456 = vmul.f32 %v387, %v445
  %v457 = vmul.f32 %v391, %v445
  %v458 = vmul.f32 %v395, %v445
  %v459 = vmul.f32 %v399, %v445
  %v460 = vmul.f32 %v403, %v445
  %v461 = vmul.f32 %v407, %v445
  %v462 = vmul.f32 %v411, %v445
  %v463 = vmul.f32 %v415, %v445
  %v464 = vmul.f32 %v419, %v445
  %v465 = vmul.f32 %v423, %v445
  %v466 = vmul.f32 %v427, %v445
  %v467 = vmul.f32 %v431, %v445
  %v468 = vmul.f32 %v435, %v445
  %v469 = vmul.f32 %v439, %v445
  %v470 = vmul.f32 %v443, %v445
  %v471 = vadd.f32 %v320, %v446
  %v472 = vadd.f32 %v321, %v447
  %v473 = vadd.f32 %v322, %v448
  %v474 = vadd.f32 %v323, %v449
  %v475 = vadd.f32 %v324, %v450
  %v476 = vadd.f32 %v325, %v451
  %v477 = vadd.f32 %v326, %v452
  %v478 = vadd.f32 %v327, %v453
  %v479 = vadd.f32 %v328, %v454
  %v480 = vadd.f32 %v329, %v455
  %v481 = vadd.f32 %v330, %v456
  %v482 = vadd.f32 %v331, %v457
  %v483 = vadd.f32 %v332, %v458
  %v484 = vadd.f32 %v333, %v459
  %v485 = vadd.f32 %v334, %v460
  %v486 = vadd.f32 %v335, %v461
  %v487 = vadd.f32 %v336, %v462
  %v488 = vadd.f32 %v337, %v463
  %v489 = vadd.f32 %v338, %v464
  %v490 = vadd.f32 %v339, %v465
  %v491 = vadd.f32 %v340, %v466
  %v492 = vadd.f32 %v341, %v467
  %v493 = vadd.f32 %v342, %v468
  %v494 = vadd.f32 %v343, %v469
  %v495 = vadd.f32 %v344, %v470
  %496 = vset.pattern.permute.xlu0 3
  %497 = vperm.xlu0 %496, %v17
  %v498 = vpop.permute.xlu0 %497
  %500 = vset.pattern.permute.xlu0 3
  %501 = vperm.xlu0 %500, %v18
  %v502 = vpop.permute.xlu0 %501
  %504 = vset.pattern.permute.xlu0 3
  %505 = vperm.xlu0 %504, %v19
  %v506 = vpop.permute.xlu0 %505
  %508 = vset.pattern.permute.xlu0 3
  %509 = vperm.xlu0 %508, %v20
  %v510 = vpop.permute.xlu0 %509
  %512 = vset.pattern.permute.xlu0 3
  %513 = vperm.xlu0 %512, %v21
  %v514 = vpop.permute.xlu0 %513
  %516 = vset.pattern.permute.xlu0 3
  %517 = vperm.xlu0 %516, %v22
  %v518 = vpop.permute.xlu0 %517
  %520 = vset.pattern.permute.xlu0 3
  %521 = vperm.xlu0 %520, %v23
  %v522 = vpop.permute.xlu0 %521
  %524 = vset.pattern.permute.xlu0 3
  %525 = vperm.xlu0 %524, %v24
  %v526 = vpop.permute.xlu0 %525
  %528 = vset.pattern.permute.xlu0 3
  %529 = vperm.xlu0 %528, %v25
  %v530 = vpop.permute.xlu0 %529
  %532 = vset.pattern.permute.xlu0 3
  %533 = vperm.xlu0 %532, %v26
  %v534 = vpop.permute.xlu0 %533
  %536 = vset.pattern.permute.xlu0 3
  %537 = vperm.xlu0 %536, %v27
  %v538 = vpop.permute.xlu0 %537
  %540 = vset.pattern.permute.xlu0 3
  %541 = vperm.xlu0 %540, %v28
  %v542 = vpop.permute.xlu0 %541
  %544 = vset.pattern.permute.xlu0 3
  %545 = vperm.xlu0 %544, %v29
  %v546 = vpop.permute.xlu0 %545
  %548 = vset.pattern.permute.xlu0 3
  %549 = vperm.xlu0 %548, %v30
  %v550 = vpop.permute.xlu0 %549
  %552 = vset.pattern.permute.xlu0 3
  %553 = vperm.xlu0 %552, %v31
  %v554 = vpop.permute.xlu0 %553
  %556 = vset.pattern.permute.xlu0 3
  %557 = vperm.xlu0 %556, %v32
  %v558 = vpop.permute.xlu0 %557
  %560 = vset.pattern.permute.xlu0 3
  %561 = vperm.xlu0 %560, %v33
  %v562 = vpop.permute.xlu0 %561
  %564 = vset.pattern.permute.xlu0 3
  %565 = vperm.xlu0 %564, %v34
  %v566 = vpop.permute.xlu0 %565
  %568 = vset.pattern.permute.xlu0 3
  %569 = vperm.xlu0 %568, %v35
  %v570 = vpop.permute.xlu0 %569
  %572 = vset.pattern.permute.xlu0 3
  %573 = vperm.xlu0 %572, %v36
  %v574 = vpop.permute.xlu0 %573
  %576 = vset.pattern.permute.xlu0 3
  %577 = vperm.xlu0 %576, %v37
  %v578 = vpop.permute.xlu0 %577
  %580 = vset.pattern.permute.xlu0 3
  %581 = vperm.xlu0 %580, %v38
  %v582 = vpop.permute.xlu0 %581
  %584 = vset.pattern.permute.xlu0 3
  %585 = vperm.xlu0 %584, %v39
  %v586 = vpop.permute.xlu0 %585
  %588 = vset.pattern.permute.xlu0 3
  %589 = vperm.xlu0 %588, %v40
  %v590 = vpop.permute.xlu0 %589
  %592 = vset.pattern.permute.xlu0 3
  %593 = vperm.xlu0 %592, %v41
  %v594 = vpop.permute.xlu0 %593
  %v596 = vperm.slane %v42, 3
  %v597 = vmul.f32 %v498, %v596
  %v598 = vmul.f32 %v502, %v596
  %v599 = vmul.f32 %v506, %v596
  %v600 = vmul.f32 %v510, %v596
  %v601 = vmul.f32 %v514, %v596
  %v602 = vmul.f32 %v518, %v596
  %v603 = vmul.f32 %v522, %v596
  %v604 = vmul.f32 %v526, %v596
  %v605 = vmul.f32 %v530, %v596
  %v606 = vmul.f32 %v534, %v596
  %v607 = vmul.f32 %v538, %v596
  %v608 = vmul.f32 %v542, %v596
  %v609 = vmul.f32 %v546, %v596
  %v610 = vmul.f32 %v550, %v596
  %v611 = vmul.f32 %v554, %v596
  %v612 = vmul.f32 %v558, %v596
  %v613 = vmul.f32 %v562, %v596
  %v614 = vmul.f32 %v566, %v596
  %v615 = vmul.f32 %v570, %v596
  %v616 = vmul.f32 %v574, %v596
  %v617 = vmul.f32 %v578, %v596
  %v618 = vmul.f32 %v582, %v596
  %v619 = vmul.f32 %v586, %v596
  %v620 = vmul.f32 %v590, %v596
  %v621 = vmul.f32 %v594, %v596
  %v622 = vadd.f32 %v471, %v597
  %v623 = vadd.f32 %v472, %v598
  %v624 = vadd.f32 %v473, %v599
  %v625 = vadd.f32 %v474, %v600
  %v626 = vadd.f32 %v475, %v601
  %v627 = vadd.f32 %v476, %v602
  %v628 = vadd.f32 %v477, %v603
  %v629 = vadd.f32 %v478, %v604
  %v630 = vadd.f32 %v479, %v605
  %v631 = vadd.f32 %v480, %v606
  %v632 = vadd.f32 %v481, %v607
  %v633 = vadd.f32 %v482, %v608
  %v634 = vadd.f32 %v483, %v609
  %v635 = vadd.f32 %v484, %v610
  %v636 = vadd.f32 %v485, %v611
  %v637 = vadd.f32 %v486, %v612
  %v638 = vadd.f32 %v487, %v613
  %v639 = vadd.f32 %v488, %v614
  %v640 = vadd.f32 %v489, %v615
  %v641 = vadd.f32 %v490, %v616
  %v642 = vadd.f32 %v491, %v617
  %v643 = vadd.f32 %v492, %v618
  %v644 = vadd.f32 %v493, %v619
  %v645 = vadd.f32 %v494, %v620
  %v646 = vadd.f32 %v495, %v621
  %647 = vset.pattern.permute.xlu0 4
  %648 = vperm.xlu0 %647, %v17
  %v649 = vpop.permute.xlu0 %648
  %651 = vset.pattern.permute.xlu0 4
  %652 = vperm.xlu0 %651, %v18
  %v653 = vpop.permute.xlu0 %652
  %655 = vset.pattern.permute.xlu0 4
  %656 = vperm.xlu0 %655, %v19
  %v657 = vpop.permute.xlu0 %656
  %659 = vset.pattern.permute.xlu0 4
  %660 = vperm.xlu0 %659, %v20
  %v661 = vpop.permute.xlu0 %660
  %663 = vset.pattern.permute.xlu0 4
  %664 = vperm.xlu0 %663, %v21
  %v665 = vpop.permute.xlu0 %664
  %667 = vset.pattern.permute.xlu0 4
  %668 = vperm.xlu0 %667, %v22
  %v669 = vpop.permute.xlu0 %668
  %671 = vset.pattern.permute.xlu0 4
  %672 = vperm.xlu0 %671, %v23
  %v673 = vpop.permute.xlu0 %672
  %675 = vset.pattern.permute.xlu0 4
  %676 = vperm.xlu0 %675, %v24
  %v677 = vpop.permute.xlu0 %676
  %679 = vset.pattern.permute.xlu0 4
  %680 = vperm.xlu0 %679, %v25
  %v681 = vpop.permute.xlu0 %680
  %683 = vset.pattern.permute.xlu0 4
  %684 = vperm.xlu0 %683, %v26
  %v685 = vpop.permute.xlu0 %684
  %687 = vset.pattern.permute.xlu0 4
  %688 = vperm.xlu0 %687, %v27
  %v689 = vpop.permute.xlu0 %688
  %691 = vset.pattern.permute.xlu0 4
  %692 = vperm.xlu0 %691, %v28
  %v693 = vpop.permute.xlu0 %692
  %695 = vset.pattern.permute.xlu0 4
  %696 = vperm.xlu0 %695, %v29
  %v697 = vpop.permute.xlu0 %696
  %699 = vset.pattern.permute.xlu0 4
  %700 = vperm.xlu0 %699, %v30
  %v701 = vpop.permute.xlu0 %700
  %703 = vset.pattern.permute.xlu0 4
  %704 = vperm.xlu0 %703, %v31
  %v705 = vpop.permute.xlu0 %704
  %707 = vset.pattern.permute.xlu0 4
  %708 = vperm.xlu0 %707, %v32
  %v709 = vpop.permute.xlu0 %708
  %711 = vset.pattern.permute.xlu0 4
  %712 = vperm.xlu0 %711, %v33
  %v713 = vpop.permute.xlu0 %712
  %715 = vset.pattern.permute.xlu0 4
  %716 = vperm.xlu0 %715, %v34
  %v717 = vpop.permute.xlu0 %716
  %719 = vset.pattern.permute.xlu0 4
  %720 = vperm.xlu0 %719, %v35
  %v721 = vpop.permute.xlu0 %720
  %723 = vset.pattern.permute.xlu0 4
  %724 = vperm.xlu0 %723, %v36
  %v725 = vpop.permute.xlu0 %724
  %727 = vset.pattern.permute.xlu0 4
  %728 = vperm.xlu0 %727, %v37
  %v729 = vpop.permute.xlu0 %728
  %731 = vset.pattern.permute.xlu0 4
  %732 = vperm.xlu0 %731, %v38
  %v733 = vpop.permute.xlu0 %732
  %735 = vset.pattern.permute.xlu0 4
  %736 = vperm.xlu0 %735, %v39
  %v737 = vpop.permute.xlu0 %736
  %739 = vset.pattern.permute.xlu0 4
  %740 = vperm.xlu0 %739, %v40
  %v741 = vpop.permute.xlu0 %740
  %743 = vset.pattern.permute.xlu0 4
  %744 = vperm.xlu0 %743, %v41
  %v745 = vpop.permute.xlu0 %744
  %v747 = vperm.slane %v42, 4
  %v748 = vmul.f32 %v649, %v747
  %v749 = vmul.f32 %v653, %v747
  %v750 = vmul.f32 %v657, %v747
  %v751 = vmul.f32 %v661, %v747
  %v752 = vmul.f32 %v665, %v747
  %v753 = vmul.f32 %v669, %v747
  %v754 = vmul.f32 %v673, %v747
  %v755 = vmul.f32 %v677, %v747
  %v756 = vmul.f32 %v681, %v747
  %v757 = vmul.f32 %v685, %v747
  %v758 = vmul.f32 %v689, %v747
  %v759 = vmul.f32 %v693, %v747
  %v760 = vmul.f32 %v697, %v747
  %v761 = vmul.f32 %v701, %v747
  %v762 = vmul.f32 %v705, %v747
  %v763 = vmul.f32 %v709, %v747
  %v764 = vmul.f32 %v713, %v747
  %v765 = vmul.f32 %v717, %v747
  %v766 = vmul.f32 %v721, %v747
  %v767 = vmul.f32 %v725, %v747
  %v768 = vmul.f32 %v729, %v747
  %v769 = vmul.f32 %v733, %v747
  %v770 = vmul.f32 %v737, %v747
  %v771 = vmul.f32 %v741, %v747
  %v772 = vmul.f32 %v745, %v747
  %v773 = vadd.f32 %v622, %v748
  %v774 = vadd.f32 %v623, %v749
  %v775 = vadd.f32 %v624, %v750
  %v776 = vadd.f32 %v625, %v751
  %v777 = vadd.f32 %v626, %v752
  %v778 = vadd.f32 %v627, %v753
  %v779 = vadd.f32 %v628, %v754
  %v780 = vadd.f32 %v629, %v755
  %v781 = vadd.f32 %v630, %v756
  %v782 = vadd.f32 %v631, %v757
  %v783 = vadd.f32 %v632, %v758
  %v784 = vadd.f32 %v633, %v759
  %v785 = vadd.f32 %v634, %v760
  %v786 = vadd.f32 %v635, %v761
  %v787 = vadd.f32 %v636, %v762
  %v788 = vadd.f32 %v637, %v763
  %v789 = vadd.f32 %v638, %v764
  %v790 = vadd.f32 %v639, %v765
  %v791 = vadd.f32 %v640, %v766
  %v792 = vadd.f32 %v641, %v767
  %v793 = vadd.f32 %v642, %v768
  %v794 = vadd.f32 %v643, %v769
  %v795 = vadd.f32 %v644, %v770
  %v796 = vadd.f32 %v645, %v771
  %v797 = vadd.f32 %v646, %v772
  %798 = vset.pattern.permute.xlu0 5
  %799 = vperm.xlu0 %798, %v17
  %v800 = vpop.permute.xlu0 %799
  %802 = vset.pattern.permute.xlu0 5
  %803 = vperm.xlu0 %802, %v18
  %v804 = vpop.permute.xlu0 %803
  %806 = vset.pattern.permute.xlu0 5
  %807 = vperm.xlu0 %806, %v19
  %v808 = vpop.permute.xlu0 %807
  %810 = vset.pattern.permute.xlu0 5
  %811 = vperm.xlu0 %810, %v20
  %v812 = vpop.permute.xlu0 %811
  %814 = vset.pattern.permute.xlu0 5
  %815 = vperm.xlu0 %814, %v21
  %v816 = vpop.permute.xlu0 %815
  %818 = vset.pattern.permute.xlu0 5
  %819 = vperm.xlu0 %818, %v22
  %v820 = vpop.permute.xlu0 %819
  %822 = vset.pattern.permute.xlu0 5
  %823 = vperm.xlu0 %822, %v23
  %v824 = vpop.permute.xlu0 %823
  %826 = vset.pattern.permute.xlu0 5
  %827 = vperm.xlu0 %826, %v24
  %v828 = vpop.permute.xlu0 %827
  %830 = vset.pattern.permute.xlu0 5
  %831 = vperm.xlu0 %830, %v25
  %v832 = vpop.permute.xlu0 %831
  %834 = vset.pattern.permute.xlu0 5
  %835 = vperm.xlu0 %834, %v26
  %v836 = vpop.permute.xlu0 %835
  %838 = vset.pattern.permute.xlu0 5
  %839 = vperm.xlu0 %838, %v27
  %v840 = vpop.permute.xlu0 %839
  %842 = vset.pattern.permute.xlu0 5
  %843 = vperm.xlu0 %842, %v28
  %v844 = vpop.permute.xlu0 %843
  %846 = vset.pattern.permute.xlu0 5
  %847 = vperm.xlu0 %846, %v29
  %v848 = vpop.permute.xlu0 %847
  %850 = vset.pattern.permute.xlu0 5
  %851 = vperm.xlu0 %850, %v30
  %v852 = vpop.permute.xlu0 %851
  %854 = vset.pattern.permute.xlu0 5
  %855 = vperm.xlu0 %854, %v31
  %v856 = vpop.permute.xlu0 %855
  %858 = vset.pattern.permute.xlu0 5
  %859 = vperm.xlu0 %858, %v32
  %v860 = vpop.permute.xlu0 %859
  %862 = vset.pattern.permute.xlu0 5
  %863 = vperm.xlu0 %862, %v33
  %v864 = vpop.permute.xlu0 %863
  %866 = vset.pattern.permute.xlu0 5
  %867 = vperm.xlu0 %866, %v34
  %v868 = vpop.permute.xlu0 %867
  %870 = vset.pattern.permute.xlu0 5
  %871 = vperm.xlu0 %870, %v35
  %v872 = vpop.permute.xlu0 %871
  %874 = vset.pattern.permute.xlu0 5
  %875 = vperm.xlu0 %874, %v36
  %v876 = vpop.permute.xlu0 %875
  %878 = vset.pattern.permute.xlu0 5
  %879 = vperm.xlu0 %878, %v37
  %v880 = vpop.permute.xlu0 %879
  %882 = vset.pattern.permute.xlu0 5
  %883 = vperm.xlu0 %882, %v38
  %v884 = vpop.permute.xlu0 %883
  %886 = vset.pattern.permute.xlu0 5
  %887 = vperm.xlu0 %886, %v39
  %v888 = vpop.permute.xlu0 %887
  %890 = vset.pattern.permute.xlu0 5
  %891 = vperm.xlu0 %890, %v40
  %v892 = vpop.permute.xlu0 %891
  %894 = vset.pattern.permute.xlu0 5
  %895 = vperm.xlu0 %894, %v41
  %v896 = vpop.permute.xlu0 %895
  %v898 = vperm.slane %v42, 5
  %v899 = vmul.f32 %v800, %v898
  %v900 = vmul.f32 %v804, %v898
  %v901 = vmul.f32 %v808, %v898
  %v902 = vmul.f32 %v812, %v898
  %v903 = vmul.f32 %v816, %v898
  %v904 = vmul.f32 %v820, %v898
  %v905 = vmul.f32 %v824, %v898
  %v906 = vmul.f32 %v828, %v898
  %v907 = vmul.f32 %v832, %v898
  %v908 = vmul.f32 %v836, %v898
  %v909 = vmul.f32 %v840, %v898
  %v910 = vmul.f32 %v844, %v898
  %v911 = vmul.f32 %v848, %v898
  %v912 = vmul.f32 %v852, %v898
  %v913 = vmul.f32 %v856, %v898
  %v914 = vmul.f32 %v860, %v898
  %v915 = vmul.f32 %v864, %v898
  %v916 = vmul.f32 %v868, %v898
  %v917 = vmul.f32 %v872, %v898
  %v918 = vmul.f32 %v876, %v898
  %v919 = vmul.f32 %v880, %v898
  %v920 = vmul.f32 %v884, %v898
  %v921 = vmul.f32 %v888, %v898
  %v922 = vmul.f32 %v892, %v898
  %v923 = vmul.f32 %v896, %v898
  %v924 = vadd.f32 %v773, %v899
  %v925 = vadd.f32 %v774, %v900
  %v926 = vadd.f32 %v775, %v901
  %v927 = vadd.f32 %v776, %v902
  %v928 = vadd.f32 %v777, %v903
  %v929 = vadd.f32 %v778, %v904
  %v930 = vadd.f32 %v779, %v905
  %v931 = vadd.f32 %v780, %v906
  %v932 = vadd.f32 %v781, %v907
  %v933 = vadd.f32 %v782, %v908
  %v934 = vadd.f32 %v783, %v909
  %v935 = vadd.f32 %v784, %v910
  %v936 = vadd.f32 %v785, %v911
  %v937 = vadd.f32 %v786, %v912
  %v938 = vadd.f32 %v787, %v913
  %v939 = vadd.f32 %v788, %v914
  %v940 = vadd.f32 %v789, %v915
  %v941 = vadd.f32 %v790, %v916
  %v942 = vadd.f32 %v791, %v917
  %v943 = vadd.f32 %v792, %v918
  %v944 = vadd.f32 %v793, %v919
  %v945 = vadd.f32 %v794, %v920
  %v946 = vadd.f32 %v795, %v921
  %v947 = vadd.f32 %v796, %v922
  %v948 = vadd.f32 %v797, %v923
  %v949 = vperm.slane %v42, 6
  %v950 = vadd.f32 %v924, %v949
  %v951 = vadd.f32 %v925, %v949
  %v952 = vadd.f32 %v926, %v949
  %v953 = vadd.f32 %v927, %v949
  %v954 = vadd.f32 %v928, %v949
  %v955 = vadd.f32 %v929, %v949
  %v956 = vadd.f32 %v930, %v949
  %v957 = vadd.f32 %v931, %v949
  %v958 = vadd.f32 %v932, %v949
  %v959 = vadd.f32 %v933, %v949
  %v960 = vadd.f32 %v934, %v949
  %v961 = vadd.f32 %v935, %v949
  %v962 = vadd.f32 %v936, %v949
  %v963 = vadd.f32 %v937, %v949
  %v964 = vadd.f32 %v938, %v949
  %v965 = vadd.f32 %v939, %v949
  %v966 = vadd.f32 %v940, %v949
  %v967 = vadd.f32 %v941, %v949
  %v968 = vadd.f32 %v942, %v949
  %v969 = vadd.f32 %v943, %v949
  %v970 = vadd.f32 %v944, %v949
  %v971 = vadd.f32 %v945, %v949
  %v972 = vadd.f32 %v946, %v949
  %v973 = vadd.f32 %v947, %v949
  %v974 = vadd.f32 %v948, %v949
  %v975 = vlaneseq
  %v976 = vand.u32 %v975, 127
  %vm977 = vcmp.lt.s32.totalorder %v976, 6
  %v978 = vand.u32 2147483647, %v950
  %vm979 = vcmp.le.f32.partialorder %v978, 0.7853982
  %vm980 = vcmp.lt.s32.totalorder %v950, 0
  %v981 = vand.u32 %v950, 2139095040
  %v982 = vshrl.u32 %v981, 23
  %v983 = vsub.s32 %v982, 127
  %v984 = vand.u32 2147483647, %v950
  %v985 = vand.u32 %v984, 8388607
  %v986 = vor.u32 %v985, 8388608
  %v987 = vsub.s32 0, %v986
  %v988 = vadd.s32 %v983, 1
  %vm989 = vcmp.gt.s32.totalorder %v988, 0
  %v990 = vsel %vm989, %v988, 0
  %v991 = vshrl.u32 %v990, 5
  %v992 = vand.u32 %v990, 31
  %v993 = vsub.s32 32, %v992
  %v994 = vshrl.u32 683565275, %v993
  %v995 = vshll.u32 683565275, %v992
  %v996 = vshrl.u32 2475754826, %v993
  %v997 = vor.u32 %v995, %v996
  %v998 = vshll.u32 2475754826, %v992
  %v999 = vshrl.u32 2131351028, %v993
  %v1000 = vor.u32 %v998, %v999
  %v1001 = vshll.u32 2131351028, %v992
  %v1002 = vshrl.u32 2102212464, %v993
  %v1003 = vor.u32 %v1001, %v1002
  %v1004 = vshll.u32 2102212464, %v992
  %v1005 = vshrl.u32 920167782, %v993
  %v1006 = vor.u32 %v1004, %v1005
  %v1007 = vshll.u32 920167782, %v992
  %v1008 = vshrl.u32 1326507024, %v993
  %v1009 = vor.u32 %v1007, %v1008
  %vm1010 = vcmp.lt.s32.totalorder %v991, 1
  %vm1011 = vcmp.lt.s32.totalorder %v991, 2
  %vm1012 = vcmp.lt.s32.totalorder %v991, 3
  %vm1013 = vcmp.lt.s32.totalorder %v991, 4
  %v1014 = vsel %vm1010, %v994, %v997
  %v1015 = vsel %vm1013, %v1003, 2102212464
  %v1016 = vsel %vm1012, %v1000, %v1015
  %v1017 = vsel %vm1011, %v1014, %v1016
  %v1018 = vsel %vm1010, %v997, %v1000
  %v1019 = vsel %vm1013, %v1006, 920167782
  %v1020 = vsel %vm1012, %v1003, %v1019
  %v1021 = vsel %vm1011, %v1018, %v1020
  %v1022 = vsel %vm1010, %v1000, %v1003
  %v1023 = vsel %vm1013, %v1009, 1326507024
  %v1024 = vsel %vm1012, %v1006, %v1023
  %v1025 = vsel %vm1011, %v1022, %v1024
  %v1026 = vshll.u32 %v986, 8
  %v1027 = vand.u32 %v1026, 65535
  %v1028 = vshrl.u32 %v1026, 16
  %v1029 = vand.u32 %v1025, 65535
  %v1030 = vshrl.u32 %v1025, 16
  %v1031 = vmul.u32 %v1027, %v1029
  %v1032 = vmul.u32 %v1027, %v1030
  %v1033 = vmul.u32 %v1028, %v1029
  %v1034 = vmul.u32 %v1028, %v1030
  %v1035 = vshll.u32 %v1032, 16
  %v1036 = vshrl.u32 %v1032, 16
  %v1037 = vshll.u32 %v1033, 16
  %v1038 = vshrl.u32 %v1033, 16
  %vm1039 = vc.u32 %v1031, %v1035
  %v1040 = vsel %vm1039, 1, 0
  %v1041 = vadd.s32 %v1031, %v1035
  %v1042 = vadd.s32 %v1034, %v1040
  %vm1043 = vc.u32 %v1041, %v1037
  %v1044 = vsel %vm1043, 1, 0
  %v1045 = vadd.s32 %v1041, %v1037
  %v1046 = vadd.s32 %v1042, %v1044
  %v1047 = vadd.s32 %v1046, %v1036
  %v1048 = vadd.s32 %v1047, %v1038
  %v1049 = vand.u32 %v1026, 65535
  %v1050 = vshrl.u32 %v1026, 16
  %v1051 = vand.u32 %v1021, 65535
  %v1052 = vshrl.u32 %v1021, 16
  %v1053 = vmul.u32 %v1049, %v1051
  %v1054 = vmul.u32 %v1049, %v1052
  %v1055 = vmul.u32 %v1050, %v1051
  %v1056 = vmul.u32 %v1050, %v1052
  %v1057 = vshll.u32 %v1054, 16
  %v1058 = vshrl.u32 %v1054, 16
  %v1059 = vshll.u32 %v1055, 16
  %v1060 = vshrl.u32 %v1055, 16
  %vm1061 = vc.u32 %v1053, %v1057
  %v1062 = vsel %vm1061, 1, 0
  %v1063 = vadd.s32 %v1053, %v1057
  %v1064 = vadd.s32 %v1056, %v1062
  %vm1065 = vc.u32 %v1063, %v1059
  %v1066 = vsel %vm1065, 1, 0
  %v1067 = vadd.s32 %v1063, %v1059
  %v1068 = vadd.s32 %v1064, %v1066
  %v1069 = vadd.s32 %v1068, %v1058
  %v1070 = vadd.s32 %v1069, %v1060
  %v1071 = vmul.u32 %v1026, %v1017
  %v1072 = vadd.s32 %v1048, %v1067
  %vm1073 = vc.u32 %v1048, %v1067
  %v1074 = vadd.s32 %v1070, 1
  %v1075 = vsel %vm1073, %v1074, %v1070
  %v1076 = vadd.s32 %v1071, %v1075
  %v1077 = vadd.s32 %v1076, 536870912
  %v1078 = vshrl.u32 %v1077, 30
  %v1079 = vshll.u32 %v1078, 30
  %v1080 = vsub.s32 %v1076, %v1079
  %vm1081 = vcmp.lt.s32.totalorder %v1080, 0
  %v1082 = vsub.s32 0, %v1080
  %v1083 = vsel %vm1081, %v1082, %v1080
  %v1084 = vclz %v1083
  %v1085 = vsub.s32 %v1084, 2
  %vm1086 = vcmp.gt.s32.totalorder 0, %v1085
  %v1087 = vsel %vm1086, 0, %v1085
  %v1088 = vsub.s32 32, %v1087
  %v1089 = vshll.u32 %v1080, %v1087
  %v1090 = vshrl.u32 %v1072, %v1088
  %v1091 = vor.u32 %v1089, %v1090
  %v1092 = vsub.s32 4294967266, %v1087
  %v1093 = vadd.s32 %v1092, 127
  %v1094 = vshll.u32 %v1093, 23
  %v1095 = vor.u32 4788187, %v1094
  %v1096 = vand.u32 2147483647, %v1095
  %v1098 = vcvt.s32.f32 %v1091
  %v1099 = vmul.f32 %v1098, %v1096
  %v1100 = vxor.u32 %v1099, 2147483648
  %v1101 = vsel %vm980, %v1100, %v1099
  %v1102 = vsub.s32 4, %v1078
  %v1103 = vsel %vm980, %v1102, %v1078
  %v1104 = vsel %vm979, %v950, %v1101
  %v1105 = vsel %vm979, 0, %v1103
  %v1106 = vmul.f32 %v1104, %v1104
  %v1107 = vmul.f32 %v1106, -0.001358992
  %v1108 = vadd.f32 %v1107, 0.041655596
  %v1109 = vmul.f32 %v1106, %v1108
  %v1110 = vadd.f32 %v1109, -0.4999988
  %v1111 = vmul.f32 %v1106, %v1110
  %v1112 = vadd.f32 1.0, %v1111
  %v1113 = vmul.f32 %v1104, %v1104
  %v1114 = vmul.f32 %v1113, -0.00019511016
  %v1115 = vadd.f32 %v1114, 0.008332121
  %v1116 = vmul.f32 %v1113, %v1115
  %v1117 = vadd.f32 %v1116, -0.16666654
  %v1118 = vmul.f32 %v1113, %v1117
  %v1119 = vadd.f32 %v1118, 1.0
  %v1120 = vmul.f32 %v1119, %v1104
  %vm1121 = vweird.f32 %v950
  %v1122 = vadd.s32 %v1105, 3
  %v1123 = vand.u32 %v1122, 3
  %vm1124 = vcmp.lt.s32.totalorder %v1123, 2
  %vm1125 = vcmp.eq.s32.totalorder %v1123, 0
  %v1126 = vxor.u32 %v1120, 2147483648
  %v1127 = vsel %vm1125, %v1112, %v1126
  %vm1128 = vcmp.eq.s32.totalorder %v1123, 2
  %v1129 = vxor.u32 %v1112, 2147483648
  %v1130 = vsel %vm1128, %v1129, %v1120
  %v1131 = vsel %vm1124, %v1127, %v1130
  %v1132 = vsel %vm1121, nan, %v1131
  %v1133 = vand.u32 2147483647, %v951
  %vm1134 = vcmp.le.f32.partialorder %v1133, 0.7853982
  %vm1135 = vcmp.lt.s32.totalorder %v951, 0
  %v1136 = vand.u32 %v951, 2139095040
  %v1137 = vshrl.u32 %v1136, 23
  %v1138 = vsub.s32 %v1137, 127
  %v1139 = vand.u32 2147483647, %v951
  %v1140 = vand.u32 %v1139, 8388607
  %v1141 = vor.u32 %v1140, 8388608
  %v1142 = vsub.s32 0, %v1141
  %v1143 = vadd.s32 %v1138, 1
  %vm1144 = vcmp.gt.s32.totalorder %v1143, 0
  %v1145 = vsel %vm1144, %v1143, 0
  %v1146 = vshrl.u32 %v1145, 5
  %v1147 = vand.u32 %v1145, 31
  %v1148 = vsub.s32 32, %v1147
  %v1149 = vshrl.u32 683565275, %v1148
  %v1150 = vshll.u32 683565275, %v1147
  %v1151 = vshrl.u32 2475754826, %v1148
  %v1152 = vor.u32 %v1150, %v1151
  %v1153 = vshll.u32 2475754826, %v1147
  %v1154 = vshrl.u32 2131351028, %v1148
  %v1155 = vor.u32 %v1153, %v1154
  %v1156 = vshll.u32 2131351028, %v1147
  %v1157 = vshrl.u32 2102212464, %v1148
  %v1158 = vor.u32 %v1156, %v1157
  %v1159 = vshll.u32 2102212464, %v1147
  %v1160 = vshrl.u32 920167782, %v1148
  %v1161 = vor.u32 %v1159, %v1160
  %v1162 = vshll.u32 920167782, %v1147
  %v1163 = vshrl.u32 1326507024, %v1148
  %v1164 = vor.u32 %v1162, %v1163
  %vm1165 = vcmp.lt.s32.totalorder %v1146, 1
  %vm1166 = vcmp.lt.s32.totalorder %v1146, 2
  %vm1167 = vcmp.lt.s32.totalorder %v1146, 3
  %vm1168 = vcmp.lt.s32.totalorder %v1146, 4
  %v1169 = vsel %vm1165, %v1149, %v1152
  %v1170 = vsel %vm1168, %v1158, 2102212464
  %v1171 = vsel %vm1167, %v1155, %v1170
  %v1172 = vsel %vm1166, %v1169, %v1171
  %v1173 = vsel %vm1165, %v1152, %v1155
  %v1174 = vsel %vm1168, %v1161, 920167782
  %v1175 = vsel %vm1167, %v1158, %v1174
  %v1176 = vsel %vm1166, %v1173, %v1175
  %v1177 = vsel %vm1165, %v1155, %v1158
  %v1178 = vsel %vm1168, %v1164, 1326507024
  %v1179 = vsel %vm1167, %v1161, %v1178
  %v1180 = vsel %vm1166, %v1177, %v1179
  %v1181 = vshll.u32 %v1141, 8
  %v1182 = vand.u32 %v1181, 65535
  %v1183 = vshrl.u32 %v1181, 16
  %v1184 = vand.u32 %v1180, 65535
  %v1185 = vshrl.u32 %v1180, 16
  %v1186 = vmul.u32 %v1182, %v1184
  %v1187 = vmul.u32 %v1182, %v1185
  %v1188 = vmul.u32 %v1183, %v1184
  %v1189 = vmul.u32 %v1183, %v1185
  %v1190 = vshll.u32 %v1187, 16
  %v1191 = vshrl.u32 %v1187, 16
  %v1192 = vshll.u32 %v1188, 16
  %v1193 = vshrl.u32 %v1188, 16
  %vm1194 = vc.u32 %v1186, %v1190
  %v1195 = vsel %vm1194, 1, 0
  %v1196 = vadd.s32 %v1186, %v1190
  %v1197 = vadd.s32 %v1189, %v1195
  %vm1198 = vc.u32 %v1196, %v1192
  %v1199 = vsel %vm1198, 1, 0
  %v1200 = vadd.s32 %v1196, %v1192
  %v1201 = vadd.s32 %v1197, %v1199
  %v1202 = vadd.s32 %v1201, %v1191
  %v1203 = vadd.s32 %v1202, %v1193
  %v1204 = vand.u32 %v1181, 65535
  %v1205 = vshrl.u32 %v1181, 16
  %v1206 = vand.u32 %v1176, 65535
  %v1207 = vshrl.u32 %v1176, 16
  %v1208 = vmul.u32 %v1204, %v1206
  %v1209 = vmul.u32 %v1204, %v1207
  %v1210 = vmul.u32 %v1205, %v1206
  %v1211 = vmul.u32 %v1205, %v1207
  %v1212 = vshll.u32 %v1209, 16
  %v1213 = vshrl.u32 %v1209, 16
  %v1214 = vshll.u32 %v1210, 16
  %v1215 = vshrl.u32 %v1210, 16
  %vm1216 = vc.u32 %v1208, %v1212
  %v1217 = vsel %vm1216, 1, 0
  %v1218 = vadd.s32 %v1208, %v1212
  %v1219 = vadd.s32 %v1211, %v1217
  %vm1220 = vc.u32 %v1218, %v1214
  %v1221 = vsel %vm1220, 1, 0
  %v1222 = vadd.s32 %v1218, %v1214
  %v1223 = vadd.s32 %v1219, %v1221
  %v1224 = vadd.s32 %v1223, %v1213
  %v1225 = vadd.s32 %v1224, %v1215
  %v1226 = vmul.u32 %v1181, %v1172
  %v1227 = vadd.s32 %v1203, %v1222
  %vm1228 = vc.u32 %v1203, %v1222
  %v1229 = vadd.s32 %v1225, 1
  %v1230 = vsel %vm1228, %v1229, %v1225
  %v1231 = vadd.s32 %v1226, %v1230
  %v1232 = vadd.s32 %v1231, 536870912
  %v1233 = vshrl.u32 %v1232, 30
  %v1234 = vshll.u32 %v1233, 30
  %v1235 = vsub.s32 %v1231, %v1234
  %vm1236 = vcmp.lt.s32.totalorder %v1235, 0
  %v1237 = vsub.s32 0, %v1235
  %v1238 = vsel %vm1236, %v1237, %v1235
  %v1239 = vclz %v1238
  %v1240 = vsub.s32 %v1239, 2
  %vm1241 = vcmp.gt.s32.totalorder 0, %v1240
  %v1242 = vsel %vm1241, 0, %v1240
  %v1243 = vsub.s32 32, %v1242
  %v1244 = vshll.u32 %v1235, %v1242
  %v1245 = vshrl.u32 %v1227, %v1243
  %v1246 = vor.u32 %v1244, %v1245
  %v1247 = vsub.s32 4294967266, %v1242
  %v1248 = vadd.s32 %v1247, 127
  %v1249 = vshll.u32 %v1248, 23
  %v1250 = vor.u32 4788187, %v1249
  %v1251 = vand.u32 2147483647, %v1250
  %v1253 = vcvt.s32.f32 %v1246
  %v1254 = vmul.f32 %v1253, %v1251
  %v1255 = vxor.u32 %v1254, 2147483648
  %v1256 = vsel %vm1135, %v1255, %v1254
  %v1257 = vsub.s32 4, %v1233
  %v1258 = vsel %vm1135, %v1257, %v1233
  %v1259 = vsel %vm1134, %v951, %v1256
  %v1260 = vsel %vm1134, 0, %v1258
  %v1261 = vmul.f32 %v1259, %v1259
  %v1262 = vmul.f32 %v1261, -0.001358992
  %v1263 = vadd.f32 %v1262, 0.041655596
  %v1264 = vmul.f32 %v1261, %v1263
  %v1265 = vadd.f32 %v1264, -0.4999988
  %v1266 = vmul.f32 %v1261, %v1265
  %v1267 = vadd.f32 1.0, %v1266
  %v1268 = vmul.f32 %v1259, %v1259
  %v1269 = vmul.f32 %v1268, -0.00019511016
  %v1270 = vadd.f32 %v1269, 0.008332121
  %v1271 = vmul.f32 %v1268, %v1270
  %v1272 = vadd.f32 %v1271, -0.16666654
  %v1273 = vmul.f32 %v1268, %v1272
  %v1274 = vadd.f32 %v1273, 1.0
  %v1275 = vmul.f32 %v1274, %v1259
  %vm1276 = vweird.f32 %v951
  %v1277 = vadd.s32 %v1260, 3
  %v1278 = vand.u32 %v1277, 3
  %vm1279 = vcmp.lt.s32.totalorder %v1278, 2
  %vm1280 = vcmp.eq.s32.totalorder %v1278, 0
  %v1281 = vxor.u32 %v1275, 2147483648
  %v1282 = vsel %vm1280, %v1267, %v1281
  %vm1283 = vcmp.eq.s32.totalorder %v1278, 2
  %v1284 = vxor.u32 %v1267, 2147483648
  %v1285 = vsel %vm1283, %v1284, %v1275
  %v1286 = vsel %vm1279, %v1282, %v1285
  %v1287 = vsel %vm1276, nan, %v1286
  %v1288 = vand.u32 2147483647, %v952
  %vm1289 = vcmp.le.f32.partialorder %v1288, 0.7853982
  %vm1290 = vcmp.lt.s32.totalorder %v952, 0
  %v1291 = vand.u32 %v952, 2139095040
  %v1292 = vshrl.u32 %v1291, 23
  %v1293 = vsub.s32 %v1292, 127
  %v1294 = vand.u32 2147483647, %v952
  %v1295 = vand.u32 %v1294, 8388607
  %v1296 = vor.u32 %v1295, 8388608
  %v1297 = vsub.s32 0, %v1296
  %v1298 = vadd.s32 %v1293, 1
  %vm1299 = vcmp.gt.s32.totalorder %v1298, 0
  %v1300 = vsel %vm1299, %v1298, 0
  %v1301 = vshrl.u32 %v1300, 5
  %v1302 = vand.u32 %v1300, 31
  %v1303 = vsub.s32 32, %v1302
  %v1304 = vshrl.u32 683565275, %v1303
  %v1305 = vshll.u32 683565275, %v1302
  %v1306 = vshrl.u32 2475754826, %v1303
  %v1307 = vor.u32 %v1305, %v1306
  %v1308 = vshll.u32 2475754826, %v1302
  %v1309 = vshrl.u32 2131351028, %v1303
  %v1310 = vor.u32 %v1308, %v1309
  %v1311 = vshll.u32 2131351028, %v1302
  %v1312 = vshrl.u32 2102212464, %v1303
  %v1313 = vor.u32 %v1311, %v1312
  %v1314 = vshll.u32 2102212464, %v1302
  %v1315 = vshrl.u32 920167782, %v1303
  %v1316 = vor.u32 %v1314, %v1315
  %v1317 = vshll.u32 920167782, %v1302
  %v1318 = vshrl.u32 1326507024, %v1303
  %v1319 = vor.u32 %v1317, %v1318
  %vm1320 = vcmp.lt.s32.totalorder %v1301, 1
  %vm1321 = vcmp.lt.s32.totalorder %v1301, 2
  %vm1322 = vcmp.lt.s32.totalorder %v1301, 3
  %vm1323 = vcmp.lt.s32.totalorder %v1301, 4
  %v1324 = vsel %vm1320, %v1304, %v1307
  %v1325 = vsel %vm1323, %v1313, 2102212464
  %v1326 = vsel %vm1322, %v1310, %v1325
  %v1327 = vsel %vm1321, %v1324, %v1326
  %v1328 = vsel %vm1320, %v1307, %v1310
  %v1329 = vsel %vm1323, %v1316, 920167782
  %v1330 = vsel %vm1322, %v1313, %v1329
  %v1331 = vsel %vm1321, %v1328, %v1330
  %v1332 = vsel %vm1320, %v1310, %v1313
  %v1333 = vsel %vm1323, %v1319, 1326507024
  %v1334 = vsel %vm1322, %v1316, %v1333
  %v1335 = vsel %vm1321, %v1332, %v1334
  %v1336 = vshll.u32 %v1296, 8
  %v1337 = vand.u32 %v1336, 65535
  %v1338 = vshrl.u32 %v1336, 16
  %v1339 = vand.u32 %v1335, 65535
  %v1340 = vshrl.u32 %v1335, 16
  %v1341 = vmul.u32 %v1337, %v1339
  %v1342 = vmul.u32 %v1337, %v1340
  %v1343 = vmul.u32 %v1338, %v1339
  %v1344 = vmul.u32 %v1338, %v1340
  %v1345 = vshll.u32 %v1342, 16
  %v1346 = vshrl.u32 %v1342, 16
  %v1347 = vshll.u32 %v1343, 16
  %v1348 = vshrl.u32 %v1343, 16
  %vm1349 = vc.u32 %v1341, %v1345
  %v1350 = vsel %vm1349, 1, 0
  %v1351 = vadd.s32 %v1341, %v1345
  %v1352 = vadd.s32 %v1344, %v1350
  %vm1353 = vc.u32 %v1351, %v1347
  %v1354 = vsel %vm1353, 1, 0
  %v1355 = vadd.s32 %v1351, %v1347
  %v1356 = vadd.s32 %v1352, %v1354
  %v1357 = vadd.s32 %v1356, %v1346
  %v1358 = vadd.s32 %v1357, %v1348
  %v1359 = vand.u32 %v1336, 65535
  %v1360 = vshrl.u32 %v1336, 16
  %v1361 = vand.u32 %v1331, 65535
  %v1362 = vshrl.u32 %v1331, 16
  %v1363 = vmul.u32 %v1359, %v1361
  %v1364 = vmul.u32 %v1359, %v1362
  %v1365 = vmul.u32 %v1360, %v1361
  %v1366 = vmul.u32 %v1360, %v1362
  %v1367 = vshll.u32 %v1364, 16
  %v1368 = vshrl.u32 %v1364, 16
  %v1369 = vshll.u32 %v1365, 16
  %v1370 = vshrl.u32 %v1365, 16
  %vm1371 = vc.u32 %v1363, %v1367
  %v1372 = vsel %vm1371, 1, 0
  %v1373 = vadd.s32 %v1363, %v1367
  %v1374 = vadd.s32 %v1366, %v1372
  %vm1375 = vc.u32 %v1373, %v1369
  %v1376 = vsel %vm1375, 1, 0
  %v1377 = vadd.s32 %v1373, %v1369
  %v1378 = vadd.s32 %v1374, %v1376
  %v1379 = vadd.s32 %v1378, %v1368
  %v1380 = vadd.s32 %v1379, %v1370
  %v1381 = vmul.u32 %v1336, %v1327
  %v1382 = vadd.s32 %v1358, %v1377
  %vm1383 = vc.u32 %v1358, %v1377
  %v1384 = vadd.s32 %v1380, 1
  %v1385 = vsel %vm1383, %v1384, %v1380
  %v1386 = vadd.s32 %v1381, %v1385
  %v1387 = vadd.s32 %v1386, 536870912
  %v1388 = vshrl.u32 %v1387, 30
  %v1389 = vshll.u32 %v1388, 30
  %v1390 = vsub.s32 %v1386, %v1389
  %vm1391 = vcmp.lt.s32.totalorder %v1390, 0
  %v1392 = vsub.s32 0, %v1390
  %v1393 = vsel %vm1391, %v1392, %v1390
  %v1394 = vclz %v1393
  %v1395 = vsub.s32 %v1394, 2
  %vm1396 = vcmp.gt.s32.totalorder 0, %v1395
  %v1397 = vsel %vm1396, 0, %v1395
  %v1398 = vsub.s32 32, %v1397
  %v1399 = vshll.u32 %v1390, %v1397
  %v1400 = vshrl.u32 %v1382, %v1398
  %v1401 = vor.u32 %v1399, %v1400
  %v1402 = vsub.s32 4294967266, %v1397
  %v1403 = vadd.s32 %v1402, 127
  %v1404 = vshll.u32 %v1403, 23
  %v1405 = vor.u32 4788187, %v1404
  %v1406 = vand.u32 2147483647, %v1405
  %v1408 = vcvt.s32.f32 %v1401
  %v1409 = vmul.f32 %v1408, %v1406
  %v1410 = vxor.u32 %v1409, 2147483648
  %v1411 = vsel %vm1290, %v1410, %v1409
  %v1412 = vsub.s32 4, %v1388
  %v1413 = vsel %vm1290, %v1412, %v1388
  %v1414 = vsel %vm1289, %v952, %v1411
  %v1415 = vsel %vm1289, 0, %v1413
  %v1416 = vmul.f32 %v1414, %v1414
  %v1417 = vmul.f32 %v1416, -0.001358992
  %v1418 = vadd.f32 %v1417, 0.041655596
  %v1419 = vmul.f32 %v1416, %v1418
  %v1420 = vadd.f32 %v1419, -0.4999988
  %v1421 = vmul.f32 %v1416, %v1420
  %v1422 = vadd.f32 1.0, %v1421
  %v1423 = vmul.f32 %v1414, %v1414
  %v1424 = vmul.f32 %v1423, -0.00019511016
  %v1425 = vadd.f32 %v1424, 0.008332121
  %v1426 = vmul.f32 %v1423, %v1425
  %v1427 = vadd.f32 %v1426, -0.16666654
  %v1428 = vmul.f32 %v1423, %v1427
  %v1429 = vadd.f32 %v1428, 1.0
  %v1430 = vmul.f32 %v1429, %v1414
  %vm1431 = vweird.f32 %v952
  %v1432 = vadd.s32 %v1415, 3
  %v1433 = vand.u32 %v1432, 3
  %vm1434 = vcmp.lt.s32.totalorder %v1433, 2
  %vm1435 = vcmp.eq.s32.totalorder %v1433, 0
  %v1436 = vxor.u32 %v1430, 2147483648
  %v1437 = vsel %vm1435, %v1422, %v1436
  %vm1438 = vcmp.eq.s32.totalorder %v1433, 2
  %v1439 = vxor.u32 %v1422, 2147483648
  %v1440 = vsel %vm1438, %v1439, %v1430
  %v1441 = vsel %vm1434, %v1437, %v1440
  %v1442 = vsel %vm1431, nan, %v1441
  %v1443 = vand.u32 2147483647, %v953
  %vm1444 = vcmp.le.f32.partialorder %v1443, 0.7853982
  %vm1445 = vcmp.lt.s32.totalorder %v953, 0
  %v1446 = vand.u32 %v953, 2139095040
  %v1447 = vshrl.u32 %v1446, 23
  %v1448 = vsub.s32 %v1447, 127
  %v1449 = vand.u32 2147483647, %v953
  %v1450 = vand.u32 %v1449, 8388607
  %v1451 = vor.u32 %v1450, 8388608
  %v1452 = vsub.s32 0, %v1451
  %v1453 = vadd.s32 %v1448, 1
  %vm1454 = vcmp.gt.s32.totalorder %v1453, 0
  %v1455 = vsel %vm1454, %v1453, 0
  %v1456 = vshrl.u32 %v1455, 5
  %v1457 = vand.u32 %v1455, 31
  %v1458 = vsub.s32 32, %v1457
  %v1459 = vshrl.u32 683565275, %v1458
  %v1460 = vshll.u32 683565275, %v1457
  %v1461 = vshrl.u32 2475754826, %v1458
  %v1462 = vor.u32 %v1460, %v1461
  %v1463 = vshll.u32 2475754826, %v1457
  %v1464 = vshrl.u32 2131351028, %v1458
  %v1465 = vor.u32 %v1463, %v1464
  %v1466 = vshll.u32 2131351028, %v1457
  %v1467 = vshrl.u32 2102212464, %v1458
  %v1468 = vor.u32 %v1466, %v1467
  %v1469 = vshll.u32 2102212464, %v1457
  %v1470 = vshrl.u32 920167782, %v1458
  %v1471 = vor.u32 %v1469, %v1470
  %v1472 = vshll.u32 920167782, %v1457
  %v1473 = vshrl.u32 1326507024, %v1458
  %v1474 = vor.u32 %v1472, %v1473
  %vm1475 = vcmp.lt.s32.totalorder %v1456, 1
  %vm1476 = vcmp.lt.s32.totalorder %v1456, 2
  %vm1477 = vcmp.lt.s32.totalorder %v1456, 3
  %vm1478 = vcmp.lt.s32.totalorder %v1456, 4
  %v1479 = vsel %vm1475, %v1459, %v1462
  %v1480 = vsel %vm1478, %v1468, 2102212464
  %v1481 = vsel %vm1477, %v1465, %v1480
  %v1482 = vsel %vm1476, %v1479, %v1481
  %v1483 = vsel %vm1475, %v1462, %v1465
  %v1484 = vsel %vm1478, %v1471, 920167782
  %v1485 = vsel %vm1477, %v1468, %v1484
  %v1486 = vsel %vm1476, %v1483, %v1485
  %v1487 = vsel %vm1475, %v1465, %v1468
  %v1488 = vsel %vm1478, %v1474, 1326507024
  %v1489 = vsel %vm1477, %v1471, %v1488
  %v1490 = vsel %vm1476, %v1487, %v1489
  %v1491 = vshll.u32 %v1451, 8
  %v1492 = vand.u32 %v1491, 65535
  %v1493 = vshrl.u32 %v1491, 16
  %v1494 = vand.u32 %v1490, 65535
  %v1495 = vshrl.u32 %v1490, 16
  %v1496 = vmul.u32 %v1492, %v1494
  %v1497 = vmul.u32 %v1492, %v1495
  %v1498 = vmul.u32 %v1493, %v1494
  %v1499 = vmul.u32 %v1493, %v1495
  %v1500 = vshll.u32 %v1497, 16
  %v1501 = vshrl.u32 %v1497, 16
  %v1502 = vshll.u32 %v1498, 16
  %v1503 = vshrl.u32 %v1498, 16
  %vm1504 = vc.u32 %v1496, %v1500
  %v1505 = vsel %vm1504, 1, 0
  %v1506 = vadd.s32 %v1496, %v1500
  %v1507 = vadd.s32 %v1499, %v1505
  %vm1508 = vc.u32 %v1506, %v1502
  %v1509 = vsel %vm1508, 1, 0
  %v1510 = vadd.s32 %v1506, %v1502
  %v1511 = vadd.s32 %v1507, %v1509
  %v1512 = vadd.s32 %v1511, %v1501
  %v1513 = vadd.s32 %v1512, %v1503
  %v1514 = vand.u32 %v1491, 65535
  %v1515 = vshrl.u32 %v1491, 16
  %v1516 = vand.u32 %v1486, 65535
  %v1517 = vshrl.u32 %v1486, 16
  %v1518 = vmul.u32 %v1514, %v1516
  %v1519 = vmul.u32 %v1514, %v1517
  %v1520 = vmul.u32 %v1515, %v1516
  %v1521 = vmul.u32 %v1515, %v1517
  %v1522 = vshll.u32 %v1519, 16
  %v1523 = vshrl.u32 %v1519, 16
  %v1524 = vshll.u32 %v1520, 16
  %v1525 = vshrl.u32 %v1520, 16
  %vm1526 = vc.u32 %v1518, %v1522
  %v1527 = vsel %vm1526, 1, 0
  %v1528 = vadd.s32 %v1518, %v1522
  %v1529 = vadd.s32 %v1521, %v1527
  %vm1530 = vc.u32 %v1528, %v1524
  %v1531 = vsel %vm1530, 1, 0
  %v1532 = vadd.s32 %v1528, %v1524
  %v1533 = vadd.s32 %v1529, %v1531
  %v1534 = vadd.s32 %v1533, %v1523
  %v1535 = vadd.s32 %v1534, %v1525
  %v1536 = vmul.u32 %v1491, %v1482
  %v1537 = vadd.s32 %v1513, %v1532
  %vm1538 = vc.u32 %v1513, %v1532
  %v1539 = vadd.s32 %v1535, 1
  %v1540 = vsel %vm1538, %v1539, %v1535
  %v1541 = vadd.s32 %v1536, %v1540
  %v1542 = vadd.s32 %v1541, 536870912
  %v1543 = vshrl.u32 %v1542, 30
  %v1544 = vshll.u32 %v1543, 30
  %v1545 = vsub.s32 %v1541, %v1544
  %vm1546 = vcmp.lt.s32.totalorder %v1545, 0
  %v1547 = vsub.s32 0, %v1545
  %v1548 = vsel %vm1546, %v1547, %v1545
  %v1549 = vclz %v1548
  %v1550 = vsub.s32 %v1549, 2
  %vm1551 = vcmp.gt.s32.totalorder 0, %v1550
  %v1552 = vsel %vm1551, 0, %v1550
  %v1553 = vsub.s32 32, %v1552
  %v1554 = vshll.u32 %v1545, %v1552
  %v1555 = vshrl.u32 %v1537, %v1553
  %v1556 = vor.u32 %v1554, %v1555
  %v1557 = vsub.s32 4294967266, %v1552
  %v1558 = vadd.s32 %v1557, 127
  %v1559 = vshll.u32 %v1558, 23
  %v1560 = vor.u32 4788187, %v1559
  %v1561 = vand.u32 2147483647, %v1560
  %v1563 = vcvt.s32.f32 %v1556
  %v1564 = vmul.f32 %v1563, %v1561
  %v1565 = vxor.u32 %v1564, 2147483648
  %v1566 = vsel %vm1445, %v1565, %v1564
  %v1567 = vsub.s32 4, %v1543
  %v1568 = vsel %vm1445, %v1567, %v1543
  %v1569 = vsel %vm1444, %v953, %v1566
  %v1570 = vsel %vm1444, 0, %v1568
  %v1571 = vmul.f32 %v1569, %v1569
  %v1572 = vmul.f32 %v1571, -0.001358992
  %v1573 = vadd.f32 %v1572, 0.041655596
  %v1574 = vmul.f32 %v1571, %v1573
  %v1575 = vadd.f32 %v1574, -0.4999988
  %v1576 = vmul.f32 %v1571, %v1575
  %v1577 = vadd.f32 1.0, %v1576
  %v1578 = vmul.f32 %v1569, %v1569
  %v1579 = vmul.f32 %v1578, -0.00019511016
  %v1580 = vadd.f32 %v1579, 0.008332121
  %v1581 = vmul.f32 %v1578, %v1580
  %v1582 = vadd.f32 %v1581, -0.16666654
  %v1583 = vmul.f32 %v1578, %v1582
  %v1584 = vadd.f32 %v1583, 1.0
  %v1585 = vmul.f32 %v1584, %v1569
  %vm1586 = vweird.f32 %v953
  %v1587 = vadd.s32 %v1570, 3
  %v1588 = vand.u32 %v1587, 3
  %vm1589 = vcmp.lt.s32.totalorder %v1588, 2
  %vm1590 = vcmp.eq.s32.totalorder %v1588, 0
  %v1591 = vxor.u32 %v1585, 2147483648
  %v1592 = vsel %vm1590, %v1577, %v1591
  %vm1593 = vcmp.eq.s32.totalorder %v1588, 2
  %v1594 = vxor.u32 %v1577, 2147483648
  %v1595 = vsel %vm1593, %v1594, %v1585
  %v1596 = vsel %vm1589, %v1592, %v1595
  %v1597 = vsel %vm1586, nan, %v1596
  %v1598 = vand.u32 2147483647, %v954
  %vm1599 = vcmp.le.f32.partialorder %v1598, 0.7853982
  %vm1600 = vcmp.lt.s32.totalorder %v954, 0
  %v1601 = vand.u32 %v954, 2139095040
  %v1602 = vshrl.u32 %v1601, 23
  %v1603 = vsub.s32 %v1602, 127
  %v1604 = vand.u32 2147483647, %v954
  %v1605 = vand.u32 %v1604, 8388607
  %v1606 = vor.u32 %v1605, 8388608
  %v1607 = vsub.s32 0, %v1606
  %v1608 = vadd.s32 %v1603, 1
  %vm1609 = vcmp.gt.s32.totalorder %v1608, 0
  %v1610 = vsel %vm1609, %v1608, 0
  %v1611 = vshrl.u32 %v1610, 5
  %v1612 = vand.u32 %v1610, 31
  %v1613 = vsub.s32 32, %v1612
  %v1614 = vshrl.u32 683565275, %v1613
  %v1615 = vshll.u32 683565275, %v1612
  %v1616 = vshrl.u32 2475754826, %v1613
  %v1617 = vor.u32 %v1615, %v1616
  %v1618 = vshll.u32 2475754826, %v1612
  %v1619 = vshrl.u32 2131351028, %v1613
  %v1620 = vor.u32 %v1618, %v1619
  %v1621 = vshll.u32 2131351028, %v1612
  %v1622 = vshrl.u32 2102212464, %v1613
  %v1623 = vor.u32 %v1621, %v1622
  %v1624 = vshll.u32 2102212464, %v1612
  %v1625 = vshrl.u32 920167782, %v1613
  %v1626 = vor.u32 %v1624, %v1625
  %v1627 = vshll.u32 920167782, %v1612
  %v1628 = vshrl.u32 1326507024, %v1613
  %v1629 = vor.u32 %v1627, %v1628
  %vm1630 = vcmp.lt.s32.totalorder %v1611, 1
  %vm1631 = vcmp.lt.s32.totalorder %v1611, 2
  %vm1632 = vcmp.lt.s32.totalorder %v1611, 3
  %vm1633 = vcmp.lt.s32.totalorder %v1611, 4
  %v1634 = vsel %vm1630, %v1614, %v1617
  %v1635 = vsel %vm1633, %v1623, 2102212464
  %v1636 = vsel %vm1632, %v1620, %v1635
  %v1637 = vsel %vm1631, %v1634, %v1636
  %v1638 = vsel %vm1630, %v1617, %v1620
  %v1639 = vsel %vm1633, %v1626, 920167782
  %v1640 = vsel %vm1632, %v1623, %v1639
  %v1641 = vsel %vm1631, %v1638, %v1640
  %v1642 = vsel %vm1630, %v1620, %v1623
  %v1643 = vsel %vm1633, %v1629, 1326507024
  %v1644 = vsel %vm1632, %v1626, %v1643
  %v1645 = vsel %vm1631, %v1642, %v1644
  %v1646 = vshll.u32 %v1606, 8
  %v1647 = vand.u32 %v1646, 65535
  %v1648 = vshrl.u32 %v1646, 16
  %v1649 = vand.u32 %v1645, 65535
  %v1650 = vshrl.u32 %v1645, 16
  %v1651 = vmul.u32 %v1647, %v1649
  %v1652 = vmul.u32 %v1647, %v1650
  %v1653 = vmul.u32 %v1648, %v1649
  %v1654 = vmul.u32 %v1648, %v1650
  %v1655 = vshll.u32 %v1652, 16
  %v1656 = vshrl.u32 %v1652, 16
  %v1657 = vshll.u32 %v1653, 16
  %v1658 = vshrl.u32 %v1653, 16
  %vm1659 = vc.u32 %v1651, %v1655
  %v1660 = vsel %vm1659, 1, 0
  %v1661 = vadd.s32 %v1651, %v1655
  %v1662 = vadd.s32 %v1654, %v1660
  %vm1663 = vc.u32 %v1661, %v1657
  %v1664 = vsel %vm1663, 1, 0
  %v1665 = vadd.s32 %v1661, %v1657
  %v1666 = vadd.s32 %v1662, %v1664
  %v1667 = vadd.s32 %v1666, %v1656
  %v1668 = vadd.s32 %v1667, %v1658
  %v1669 = vand.u32 %v1646, 65535
  %v1670 = vshrl.u32 %v1646, 16
  %v1671 = vand.u32 %v1641, 65535
  %v1672 = vshrl.u32 %v1641, 16
  %v1673 = vmul.u32 %v1669, %v1671
  %v1674 = vmul.u32 %v1669, %v1672
  %v1675 = vmul.u32 %v1670, %v1671
  %v1676 = vmul.u32 %v1670, %v1672
  %v1677 = vshll.u32 %v1674, 16
  %v1678 = vshrl.u32 %v1674, 16
  %v1679 = vshll.u32 %v1675, 16
  %v1680 = vshrl.u32 %v1675, 16
  %vm1681 = vc.u32 %v1673, %v1677
  %v1682 = vsel %vm1681, 1, 0
  %v1683 = vadd.s32 %v1673, %v1677
  %v1684 = vadd.s32 %v1676, %v1682
  %vm1685 = vc.u32 %v1683, %v1679
  %v1686 = vsel %vm1685, 1, 0
  %v1687 = vadd.s32 %v1683, %v1679
  %v1688 = vadd.s32 %v1684, %v1686
  %v1689 = vadd.s32 %v1688, %v1678
  %v1690 = vadd.s32 %v1689, %v1680
  %v1691 = vmul.u32 %v1646, %v1637
  %v1692 = vadd.s32 %v1668, %v1687
  %vm1693 = vc.u32 %v1668, %v1687
  %v1694 = vadd.s32 %v1690, 1
  %v1695 = vsel %vm1693, %v1694, %v1690
  %v1696 = vadd.s32 %v1691, %v1695
  %v1697 = vadd.s32 %v1696, 536870912
  %v1698 = vshrl.u32 %v1697, 30
  %v1699 = vshll.u32 %v1698, 30
  %v1700 = vsub.s32 %v1696, %v1699
  %vm1701 = vcmp.lt.s32.totalorder %v1700, 0
  %v1702 = vsub.s32 0, %v1700
  %v1703 = vsel %vm1701, %v1702, %v1700
  %v1704 = vclz %v1703
  %v1705 = vsub.s32 %v1704, 2
  %vm1706 = vcmp.gt.s32.totalorder 0, %v1705
  %v1707 = vsel %vm1706, 0, %v1705
  %v1708 = vsub.s32 32, %v1707
  %v1709 = vshll.u32 %v1700, %v1707
  %v1710 = vshrl.u32 %v1692, %v1708
  %v1711 = vor.u32 %v1709, %v1710
  %v1712 = vsub.s32 4294967266, %v1707
  %v1713 = vadd.s32 %v1712, 127
  %v1714 = vshll.u32 %v1713, 23
  %v1715 = vor.u32 4788187, %v1714
  %v1716 = vand.u32 2147483647, %v1715
  %v1718 = vcvt.s32.f32 %v1711
  %v1719 = vmul.f32 %v1718, %v1716
  %v1720 = vxor.u32 %v1719, 2147483648
  %v1721 = vsel %vm1600, %v1720, %v1719
  %v1722 = vsub.s32 4, %v1698
  %v1723 = vsel %vm1600, %v1722, %v1698
  %v1724 = vsel %vm1599, %v954, %v1721
  %v1725 = vsel %vm1599, 0, %v1723
  %v1726 = vmul.f32 %v1724, %v1724
  %v1727 = vmul.f32 %v1726, -0.001358992
  %v1728 = vadd.f32 %v1727, 0.041655596
  %v1729 = vmul.f32 %v1726, %v1728
  %v1730 = vadd.f32 %v1729, -0.4999988
  %v1731 = vmul.f32 %v1726, %v1730
  %v1732 = vadd.f32 1.0, %v1731
  %v1733 = vmul.f32 %v1724, %v1724
  %v1734 = vmul.f32 %v1733, -0.00019511016
  %v1735 = vadd.f32 %v1734, 0.008332121
  %v1736 = vmul.f32 %v1733, %v1735
  %v1737 = vadd.f32 %v1736, -0.16666654
  %v1738 = vmul.f32 %v1733, %v1737
  %v1739 = vadd.f32 %v1738, 1.0
  %v1740 = vmul.f32 %v1739, %v1724
  %vm1741 = vweird.f32 %v954
  %v1742 = vadd.s32 %v1725, 3
  %v1743 = vand.u32 %v1742, 3
  %vm1744 = vcmp.lt.s32.totalorder %v1743, 2
  %vm1745 = vcmp.eq.s32.totalorder %v1743, 0
  %v1746 = vxor.u32 %v1740, 2147483648
  %v1747 = vsel %vm1745, %v1732, %v1746
  %vm1748 = vcmp.eq.s32.totalorder %v1743, 2
  %v1749 = vxor.u32 %v1732, 2147483648
  %v1750 = vsel %vm1748, %v1749, %v1740
  %v1751 = vsel %vm1744, %v1747, %v1750
  %v1752 = vsel %vm1741, nan, %v1751
  %v1753 = vand.u32 2147483647, %v955
  %vm1754 = vcmp.le.f32.partialorder %v1753, 0.7853982
  %vm1755 = vcmp.lt.s32.totalorder %v955, 0
  %v1756 = vand.u32 %v955, 2139095040
  %v1757 = vshrl.u32 %v1756, 23
  %v1758 = vsub.s32 %v1757, 127
  %v1759 = vand.u32 2147483647, %v955
  %v1760 = vand.u32 %v1759, 8388607
  %v1761 = vor.u32 %v1760, 8388608
  %v1762 = vsub.s32 0, %v1761
  %v1763 = vadd.s32 %v1758, 1
  %vm1764 = vcmp.gt.s32.totalorder %v1763, 0
  %v1765 = vsel %vm1764, %v1763, 0
  %v1766 = vshrl.u32 %v1765, 5
  %v1767 = vand.u32 %v1765, 31
  %v1768 = vsub.s32 32, %v1767
  %v1769 = vshrl.u32 683565275, %v1768
  %v1770 = vshll.u32 683565275, %v1767
  %v1771 = vshrl.u32 2475754826, %v1768
  %v1772 = vor.u32 %v1770, %v1771
  %v1773 = vshll.u32 2475754826, %v1767
  %v1774 = vshrl.u32 2131351028, %v1768
  %v1775 = vor.u32 %v1773, %v1774
  %v1776 = vshll.u32 2131351028, %v1767
  %v1777 = vshrl.u32 2102212464, %v1768
  %v1778 = vor.u32 %v1776, %v1777
  %v1779 = vshll.u32 2102212464, %v1767
  %v1780 = vshrl.u32 920167782, %v1768
  %v1781 = vor.u32 %v1779, %v1780
  %v1782 = vshll.u32 920167782, %v1767
  %v1783 = vshrl.u32 1326507024, %v1768
  %v1784 = vor.u32 %v1782, %v1783
  %vm1785 = vcmp.lt.s32.totalorder %v1766, 1
  %vm1786 = vcmp.lt.s32.totalorder %v1766, 2
  %vm1787 = vcmp.lt.s32.totalorder %v1766, 3
  %vm1788 = vcmp.lt.s32.totalorder %v1766, 4
  %v1789 = vsel %vm1785, %v1769, %v1772
  %v1790 = vsel %vm1788, %v1778, 2102212464
  %v1791 = vsel %vm1787, %v1775, %v1790
  %v1792 = vsel %vm1786, %v1789, %v1791
  %v1793 = vsel %vm1785, %v1772, %v1775
  %v1794 = vsel %vm1788, %v1781, 920167782
  %v1795 = vsel %vm1787, %v1778, %v1794
  %v1796 = vsel %vm1786, %v1793, %v1795
  %v1797 = vsel %vm1785, %v1775, %v1778
  %v1798 = vsel %vm1788, %v1784, 1326507024
  %v1799 = vsel %vm1787, %v1781, %v1798
  %v1800 = vsel %vm1786, %v1797, %v1799
  %v1801 = vshll.u32 %v1761, 8
  %v1802 = vand.u32 %v1801, 65535
  %v1803 = vshrl.u32 %v1801, 16
  %v1804 = vand.u32 %v1800, 65535
  %v1805 = vshrl.u32 %v1800, 16
  %v1806 = vmul.u32 %v1802, %v1804
  %v1807 = vmul.u32 %v1802, %v1805
  %v1808 = vmul.u32 %v1803, %v1804
  %v1809 = vmul.u32 %v1803, %v1805
  %v1810 = vshll.u32 %v1807, 16
  %v1811 = vshrl.u32 %v1807, 16
  %v1812 = vshll.u32 %v1808, 16
  %v1813 = vshrl.u32 %v1808, 16
  %vm1814 = vc.u32 %v1806, %v1810
  %v1815 = vsel %vm1814, 1, 0
  %v1816 = vadd.s32 %v1806, %v1810
  %v1817 = vadd.s32 %v1809, %v1815
  %vm1818 = vc.u32 %v1816, %v1812
  %v1819 = vsel %vm1818, 1, 0
  %v1820 = vadd.s32 %v1816, %v1812
  %v1821 = vadd.s32 %v1817, %v1819
  %v1822 = vadd.s32 %v1821, %v1811
  %v1823 = vadd.s32 %v1822, %v1813
  %v1824 = vand.u32 %v1801, 65535
  %v1825 = vshrl.u32 %v1801, 16
  %v1826 = vand.u32 %v1796, 65535
  %v1827 = vshrl.u32 %v1796, 16
  %v1828 = vmul.u32 %v1824, %v1826
  %v1829 = vmul.u32 %v1824, %v1827
  %v1830 = vmul.u32 %v1825, %v1826
  %v1831 = vmul.u32 %v1825, %v1827
  %v1832 = vshll.u32 %v1829, 16
  %v1833 = vshrl.u32 %v1829, 16
  %v1834 = vshll.u32 %v1830, 16
  %v1835 = vshrl.u32 %v1830, 16
  %vm1836 = vc.u32 %v1828, %v1832
  %v1837 = vsel %vm1836, 1, 0
  %v1838 = vadd.s32 %v1828, %v1832
  %v1839 = vadd.s32 %v1831, %v1837
  %vm1840 = vc.u32 %v1838, %v1834
  %v1841 = vsel %vm1840, 1, 0
  %v1842 = vadd.s32 %v1838, %v1834
  %v1843 = vadd.s32 %v1839, %v1841
  %v1844 = vadd.s32 %v1843, %v1833
  %v1845 = vadd.s32 %v1844, %v1835
  %v1846 = vmul.u32 %v1801, %v1792
  %v1847 = vadd.s32 %v1823, %v1842
  %vm1848 = vc.u32 %v1823, %v1842
  %v1849 = vadd.s32 %v1845, 1
  %v1850 = vsel %vm1848, %v1849, %v1845
  %v1851 = vadd.s32 %v1846, %v1850
  %v1852 = vadd.s32 %v1851, 536870912
  %v1853 = vshrl.u32 %v1852, 30
  %v1854 = vshll.u32 %v1853, 30
  %v1855 = vsub.s32 %v1851, %v1854
  %vm1856 = vcmp.lt.s32.totalorder %v1855, 0
  %v1857 = vsub.s32 0, %v1855
  %v1858 = vsel %vm1856, %v1857, %v1855
  %v1859 = vclz %v1858
  %v1860 = vsub.s32 %v1859, 2
  %vm1861 = vcmp.gt.s32.totalorder 0, %v1860
  %v1862 = vsel %vm1861, 0, %v1860
  %v1863 = vsub.s32 32, %v1862
  %v1864 = vshll.u32 %v1855, %v1862
  %v1865 = vshrl.u32 %v1847, %v1863
  %v1866 = vor.u32 %v1864, %v1865
  %v1867 = vsub.s32 4294967266, %v1862
  %v1868 = vadd.s32 %v1867, 127
  %v1869 = vshll.u32 %v1868, 23
  %v1870 = vor.u32 4788187, %v1869
  %v1871 = vand.u32 2147483647, %v1870
  %v1873 = vcvt.s32.f32 %v1866
  %v1874 = vmul.f32 %v1873, %v1871
  %v1875 = vxor.u32 %v1874, 2147483648
  %v1876 = vsel %vm1755, %v1875, %v1874
  %v1877 = vsub.s32 4, %v1853
  %v1878 = vsel %vm1755, %v1877, %v1853
  %v1879 = vsel %vm1754, %v955, %v1876
  %v1880 = vsel %vm1754, 0, %v1878
  %v1881 = vmul.f32 %v1879, %v1879
  %v1882 = vmul.f32 %v1881, -0.001358992
  %v1883 = vadd.f32 %v1882, 0.041655596
  %v1884 = vmul.f32 %v1881, %v1883
  %v1885 = vadd.f32 %v1884, -0.4999988
  %v1886 = vmul.f32 %v1881, %v1885
  %v1887 = vadd.f32 1.0, %v1886
  %v1888 = vmul.f32 %v1879, %v1879
  %v1889 = vmul.f32 %v1888, -0.00019511016
  %v1890 = vadd.f32 %v1889, 0.008332121
  %v1891 = vmul.f32 %v1888, %v1890
  %v1892 = vadd.f32 %v1891, -0.16666654
  %v1893 = vmul.f32 %v1888, %v1892
  %v1894 = vadd.f32 %v1893, 1.0
  %v1895 = vmul.f32 %v1894, %v1879
  %vm1896 = vweird.f32 %v955
  %v1897 = vadd.s32 %v1880, 3
  %v1898 = vand.u32 %v1897, 3
  %vm1899 = vcmp.lt.s32.totalorder %v1898, 2
  %vm1900 = vcmp.eq.s32.totalorder %v1898, 0
  %v1901 = vxor.u32 %v1895, 2147483648
  %v1902 = vsel %vm1900, %v1887, %v1901
  %vm1903 = vcmp.eq.s32.totalorder %v1898, 2
  %v1904 = vxor.u32 %v1887, 2147483648
  %v1905 = vsel %vm1903, %v1904, %v1895
  %v1906 = vsel %vm1899, %v1902, %v1905
  %v1907 = vsel %vm1896, nan, %v1906
  %v1908 = vand.u32 2147483647, %v956
  %vm1909 = vcmp.le.f32.partialorder %v1908, 0.7853982
  %vm1910 = vcmp.lt.s32.totalorder %v956, 0
  %v1911 = vand.u32 %v956, 2139095040
  %v1912 = vshrl.u32 %v1911, 23
  %v1913 = vsub.s32 %v1912, 127
  %v1914 = vand.u32 2147483647, %v956
  %v1915 = vand.u32 %v1914, 8388607
  %v1916 = vor.u32 %v1915, 8388608
  %v1917 = vsub.s32 0, %v1916
  %v1918 = vadd.s32 %v1913, 1
  %vm1919 = vcmp.gt.s32.totalorder %v1918, 0
  %v1920 = vsel %vm1919, %v1918, 0
  %v1921 = vshrl.u32 %v1920, 5
  %v1922 = vand.u32 %v1920, 31
  %v1923 = vsub.s32 32, %v1922
  %v1924 = vshrl.u32 683565275, %v1923
  %v1925 = vshll.u32 683565275, %v1922
  %v1926 = vshrl.u32 2475754826, %v1923
  %v1927 = vor.u32 %v1925, %v1926
  %v1928 = vshll.u32 2475754826, %v1922
  %v1929 = vshrl.u32 2131351028, %v1923
  %v1930 = vor.u32 %v1928, %v1929
  %v1931 = vshll.u32 2131351028, %v1922
  %v1932 = vshrl.u32 2102212464, %v1923
  %v1933 = vor.u32 %v1931, %v1932
  %v1934 = vshll.u32 2102212464, %v1922
  %v1935 = vshrl.u32 920167782, %v1923
  %v1936 = vor.u32 %v1934, %v1935
  %v1937 = vshll.u32 920167782, %v1922
  %v1938 = vshrl.u32 1326507024, %v1923
  %v1939 = vor.u32 %v1937, %v1938
  %vm1940 = vcmp.lt.s32.totalorder %v1921, 1
  %vm1941 = vcmp.lt.s32.totalorder %v1921, 2
  %vm1942 = vcmp.lt.s32.totalorder %v1921, 3
  %vm1943 = vcmp.lt.s32.totalorder %v1921, 4
  %v1944 = vsel %vm1940, %v1924, %v1927
  %v1945 = vsel %vm1943, %v1933, 2102212464
  %v1946 = vsel %vm1942, %v1930, %v1945
  %v1947 = vsel %vm1941, %v1944, %v1946
  %v1948 = vsel %vm1940, %v1927, %v1930
  %v1949 = vsel %vm1943, %v1936, 920167782
  %v1950 = vsel %vm1942, %v1933, %v1949
  %v1951 = vsel %vm1941, %v1948, %v1950
  %v1952 = vsel %vm1940, %v1930, %v1933
  %v1953 = vsel %vm1943, %v1939, 1326507024
  %v1954 = vsel %vm1942, %v1936, %v1953
  %v1955 = vsel %vm1941, %v1952, %v1954
  %v1956 = vshll.u32 %v1916, 8
  %v1957 = vand.u32 %v1956, 65535
  %v1958 = vshrl.u32 %v1956, 16
  %v1959 = vand.u32 %v1955, 65535
  %v1960 = vshrl.u32 %v1955, 16
  %v1961 = vmul.u32 %v1957, %v1959
  %v1962 = vmul.u32 %v1957, %v1960
  %v1963 = vmul.u32 %v1958, %v1959
  %v1964 = vmul.u32 %v1958, %v1960
  %v1965 = vshll.u32 %v1962, 16
  %v1966 = vshrl.u32 %v1962, 16
  %v1967 = vshll.u32 %v1963, 16
  %v1968 = vshrl.u32 %v1963, 16
  %vm1969 = vc.u32 %v1961, %v1965
  %v1970 = vsel %vm1969, 1, 0
  %v1971 = vadd.s32 %v1961, %v1965
  %v1972 = vadd.s32 %v1964, %v1970
  %vm1973 = vc.u32 %v1971, %v1967
  %v1974 = vsel %vm1973, 1, 0
  %v1975 = vadd.s32 %v1971, %v1967
  %v1976 = vadd.s32 %v1972, %v1974
  %v1977 = vadd.s32 %v1976, %v1966
  %v1978 = vadd.s32 %v1977, %v1968
  %v1979 = vand.u32 %v1956, 65535
  %v1980 = vshrl.u32 %v1956, 16
  %v1981 = vand.u32 %v1951, 65535
  %v1982 = vshrl.u32 %v1951, 16
  %v1983 = vmul.u32 %v1979, %v1981
  %v1984 = vmul.u32 %v1979, %v1982
  %v1985 = vmul.u32 %v1980, %v1981
  %v1986 = vmul.u32 %v1980, %v1982
  %v1987 = vshll.u32 %v1984, 16
  %v1988 = vshrl.u32 %v1984, 16
  %v1989 = vshll.u32 %v1985, 16
  %v1990 = vshrl.u32 %v1985, 16
  %vm1991 = vc.u32 %v1983, %v1987
  %v1992 = vsel %vm1991, 1, 0
  %v1993 = vadd.s32 %v1983, %v1987
  %v1994 = vadd.s32 %v1986, %v1992
  %vm1995 = vc.u32 %v1993, %v1989
  %v1996 = vsel %vm1995, 1, 0
  %v1997 = vadd.s32 %v1993, %v1989
  %v1998 = vadd.s32 %v1994, %v1996
  %v1999 = vadd.s32 %v1998, %v1988
  %v2000 = vadd.s32 %v1999, %v1990
  %v2001 = vmul.u32 %v1956, %v1947
  %v2002 = vadd.s32 %v1978, %v1997
  %vm2003 = vc.u32 %v1978, %v1997
  %v2004 = vadd.s32 %v2000, 1
  %v2005 = vsel %vm2003, %v2004, %v2000
  %v2006 = vadd.s32 %v2001, %v2005
  %v2007 = vadd.s32 %v2006, 536870912
  %v2008 = vshrl.u32 %v2007, 30
  %v2009 = vshll.u32 %v2008, 30
  %v2010 = vsub.s32 %v2006, %v2009
  %vm2011 = vcmp.lt.s32.totalorder %v2010, 0
  %v2012 = vsub.s32 0, %v2010
  %v2013 = vsel %vm2011, %v2012, %v2010
  %v2014 = vclz %v2013
  %v2015 = vsub.s32 %v2014, 2
  %vm2016 = vcmp.gt.s32.totalorder 0, %v2015
  %v2017 = vsel %vm2016, 0, %v2015
  %v2018 = vsub.s32 32, %v2017
  %v2019 = vshll.u32 %v2010, %v2017
  %v2020 = vshrl.u32 %v2002, %v2018
  %v2021 = vor.u32 %v2019, %v2020
  %v2022 = vsub.s32 4294967266, %v2017
  %v2023 = vadd.s32 %v2022, 127
  %v2024 = vshll.u32 %v2023, 23
  %v2025 = vor.u32 4788187, %v2024
  %v2026 = vand.u32 2147483647, %v2025
  %v2028 = vcvt.s32.f32 %v2021
  %v2029 = vmul.f32 %v2028, %v2026
  %v2030 = vxor.u32 %v2029, 2147483648
  %v2031 = vsel %vm1910, %v2030, %v2029
  %v2032 = vsub.s32 4, %v2008
  %v2033 = vsel %vm1910, %v2032, %v2008
  %v2034 = vsel %vm1909, %v956, %v2031
  %v2035 = vsel %vm1909, 0, %v2033
  %v2036 = vmul.f32 %v2034, %v2034
  %v2037 = vmul.f32 %v2036, -0.001358992
  %v2038 = vadd.f32 %v2037, 0.041655596
  %v2039 = vmul.f32 %v2036, %v2038
  %v2040 = vadd.f32 %v2039, -0.4999988
  %v2041 = vmul.f32 %v2036, %v2040
  %v2042 = vadd.f32 1.0, %v2041
  %v2043 = vmul.f32 %v2034, %v2034
  %v2044 = vmul.f32 %v2043, -0.00019511016
  %v2045 = vadd.f32 %v2044, 0.008332121
  %v2046 = vmul.f32 %v2043, %v2045
  %v2047 = vadd.f32 %v2046, -0.16666654
  %v2048 = vmul.f32 %v2043, %v2047
  %v2049 = vadd.f32 %v2048, 1.0
  %v2050 = vmul.f32 %v2049, %v2034
  %vm2051 = vweird.f32 %v956
  %v2052 = vadd.s32 %v2035, 3
  %v2053 = vand.u32 %v2052, 3
  %vm2054 = vcmp.lt.s32.totalorder %v2053, 2
  %vm2055 = vcmp.eq.s32.totalorder %v2053, 0
  %v2056 = vxor.u32 %v2050, 2147483648
  %v2057 = vsel %vm2055, %v2042, %v2056
  %vm2058 = vcmp.eq.s32.totalorder %v2053, 2
  %v2059 = vxor.u32 %v2042, 2147483648
  %v2060 = vsel %vm2058, %v2059, %v2050
  %v2061 = vsel %vm2054, %v2057, %v2060
  %v2062 = vsel %vm2051, nan, %v2061
  %v2063 = vand.u32 2147483647, %v957
  %vm2064 = vcmp.le.f32.partialorder %v2063, 0.7853982
  %vm2065 = vcmp.lt.s32.totalorder %v957, 0
  %v2066 = vand.u32 %v957, 2139095040
  %v2067 = vshrl.u32 %v2066, 23
  %v2068 = vsub.s32 %v2067, 127
  %v2069 = vand.u32 2147483647, %v957
  %v2070 = vand.u32 %v2069, 8388607
  %v2071 = vor.u32 %v2070, 8388608
  %v2072 = vsub.s32 0, %v2071
  %v2073 = vadd.s32 %v2068, 1
  %vm2074 = vcmp.gt.s32.totalorder %v2073, 0
  %v2075 = vsel %vm2074, %v2073, 0
  %v2076 = vshrl.u32 %v2075, 5
  %v2077 = vand.u32 %v2075, 31
  %v2078 = vsub.s32 32, %v2077
  %v2079 = vshrl.u32 683565275, %v2078
  %v2080 = vshll.u32 683565275, %v2077
  %v2081 = vshrl.u32 2475754826, %v2078
  %v2082 = vor.u32 %v2080, %v2081
  %v2083 = vshll.u32 2475754826, %v2077
  %v2084 = vshrl.u32 2131351028, %v2078
  %v2085 = vor.u32 %v2083, %v2084
  %v2086 = vshll.u32 2131351028, %v2077
  %v2087 = vshrl.u32 2102212464, %v2078
  %v2088 = vor.u32 %v2086, %v2087
  %v2089 = vshll.u32 2102212464, %v2077
  %v2090 = vshrl.u32 920167782, %v2078
  %v2091 = vor.u32 %v2089, %v2090
  %v2092 = vshll.u32 920167782, %v2077
  %v2093 = vshrl.u32 1326507024, %v2078
  %v2094 = vor.u32 %v2092, %v2093
  %vm2095 = vcmp.lt.s32.totalorder %v2076, 1
  %vm2096 = vcmp.lt.s32.totalorder %v2076, 2
  %vm2097 = vcmp.lt.s32.totalorder %v2076, 3
  %vm2098 = vcmp.lt.s32.totalorder %v2076, 4
  %v2099 = vsel %vm2095, %v2079, %v2082
  %v2100 = vsel %vm2098, %v2088, 2102212464
  %v2101 = vsel %vm2097, %v2085, %v2100
  %v2102 = vsel %vm2096, %v2099, %v2101
  %v2103 = vsel %vm2095, %v2082, %v2085
  %v2104 = vsel %vm2098, %v2091, 920167782
  %v2105 = vsel %vm2097, %v2088, %v2104
  %v2106 = vsel %vm2096, %v2103, %v2105
  %v2107 = vsel %vm2095, %v2085, %v2088
  %v2108 = vsel %vm2098, %v2094, 1326507024
  %v2109 = vsel %vm2097, %v2091, %v2108
  %v2110 = vsel %vm2096, %v2107, %v2109
  %v2111 = vshll.u32 %v2071, 8
  %v2112 = vand.u32 %v2111, 65535
  %v2113 = vshrl.u32 %v2111, 16
  %v2114 = vand.u32 %v2110, 65535
  %v2115 = vshrl.u32 %v2110, 16
  %v2116 = vmul.u32 %v2112, %v2114
  %v2117 = vmul.u32 %v2112, %v2115
  %v2118 = vmul.u32 %v2113, %v2114
  %v2119 = vmul.u32 %v2113, %v2115
  %v2120 = vshll.u32 %v2117, 16
  %v2121 = vshrl.u32 %v2117, 16
  %v2122 = vshll.u32 %v2118, 16
  %v2123 = vshrl.u32 %v2118, 16
  %vm2124 = vc.u32 %v2116, %v2120
  %v2125 = vsel %vm2124, 1, 0
  %v2126 = vadd.s32 %v2116, %v2120
  %v2127 = vadd.s32 %v2119, %v2125
  %vm2128 = vc.u32 %v2126, %v2122
  %v2129 = vsel %vm2128, 1, 0
  %v2130 = vadd.s32 %v2126, %v2122
  %v2131 = vadd.s32 %v2127, %v2129
  %v2132 = vadd.s32 %v2131, %v2121
  %v2133 = vadd.s32 %v2132, %v2123
  %v2134 = vand.u32 %v2111, 65535
  %v2135 = vshrl.u32 %v2111, 16
  %v2136 = vand.u32 %v2106, 65535
  %v2137 = vshrl.u32 %v2106, 16
  %v2138 = vmul.u32 %v2134, %v2136
  %v2139 = vmul.u32 %v2134, %v2137
  %v2140 = vmul.u32 %v2135, %v2136
  %v2141 = vmul.u32 %v2135, %v2137
  %v2142 = vshll.u32 %v2139, 16
  %v2143 = vshrl.u32 %v2139, 16
  %v2144 = vshll.u32 %v2140, 16
  %v2145 = vshrl.u32 %v2140, 16
  %vm2146 = vc.u32 %v2138, %v2142
  %v2147 = vsel %vm2146, 1, 0
  %v2148 = vadd.s32 %v2138, %v2142
  %v2149 = vadd.s32 %v2141, %v2147
  %vm2150 = vc.u32 %v2148, %v2144
  %v2151 = vsel %vm2150, 1, 0
  %v2152 = vadd.s32 %v2148, %v2144
  %v2153 = vadd.s32 %v2149, %v2151
  %v2154 = vadd.s32 %v2153, %v2143
  %v2155 = vadd.s32 %v2154, %v2145
  %v2156 = vmul.u32 %v2111, %v2102
  %v2157 = vadd.s32 %v2133, %v2152
  %vm2158 = vc.u32 %v2133, %v2152
  %v2159 = vadd.s32 %v2155, 1
  %v2160 = vsel %vm2158, %v2159, %v2155
  %v2161 = vadd.s32 %v2156, %v2160
  %v2162 = vadd.s32 %v2161, 536870912
  %v2163 = vshrl.u32 %v2162, 30
  %v2164 = vshll.u32 %v2163, 30
  %v2165 = vsub.s32 %v2161, %v2164
  %vm2166 = vcmp.lt.s32.totalorder %v2165, 0
  %v2167 = vsub.s32 0, %v2165
  %v2168 = vsel %vm2166, %v2167, %v2165
  %v2169 = vclz %v2168
  %v2170 = vsub.s32 %v2169, 2
  %vm2171 = vcmp.gt.s32.totalorder 0, %v2170
  %v2172 = vsel %vm2171, 0, %v2170
  %v2173 = vsub.s32 32, %v2172
  %v2174 = vshll.u32 %v2165, %v2172
  %v2175 = vshrl.u32 %v2157, %v2173
  %v2176 = vor.u32 %v2174, %v2175
  %v2177 = vsub.s32 4294967266, %v2172
  %v2178 = vadd.s32 %v2177, 127
  %v2179 = vshll.u32 %v2178, 23
  %v2180 = vor.u32 4788187, %v2179
  %v2181 = vand.u32 2147483647, %v2180
  %v2183 = vcvt.s32.f32 %v2176
  %v2184 = vmul.f32 %v2183, %v2181
  %v2185 = vxor.u32 %v2184, 2147483648
  %v2186 = vsel %vm2065, %v2185, %v2184
  %v2187 = vsub.s32 4, %v2163
  %v2188 = vsel %vm2065, %v2187, %v2163
  %v2189 = vsel %vm2064, %v957, %v2186
  %v2190 = vsel %vm2064, 0, %v2188
  %v2191 = vmul.f32 %v2189, %v2189
  %v2192 = vmul.f32 %v2191, -0.001358992
  %v2193 = vadd.f32 %v2192, 0.041655596
  %v2194 = vmul.f32 %v2191, %v2193
  %v2195 = vadd.f32 %v2194, -0.4999988
  %v2196 = vmul.f32 %v2191, %v2195
  %v2197 = vadd.f32 1.0, %v2196
  %v2198 = vmul.f32 %v2189, %v2189
  %v2199 = vmul.f32 %v2198, -0.00019511016
  %v2200 = vadd.f32 %v2199, 0.008332121
  %v2201 = vmul.f32 %v2198, %v2200
  %v2202 = vadd.f32 %v2201, -0.16666654
  %v2203 = vmul.f32 %v2198, %v2202
  %v2204 = vadd.f32 %v2203, 1.0
  %v2205 = vmul.f32 %v2204, %v2189
  %vm2206 = vweird.f32 %v957
  %v2207 = vadd.s32 %v2190, 3
  %v2208 = vand.u32 %v2207, 3
  %vm2209 = vcmp.lt.s32.totalorder %v2208, 2
  %vm2210 = vcmp.eq.s32.totalorder %v2208, 0
  %v2211 = vxor.u32 %v2205, 2147483648
  %v2212 = vsel %vm2210, %v2197, %v2211
  %vm2213 = vcmp.eq.s32.totalorder %v2208, 2
  %v2214 = vxor.u32 %v2197, 2147483648
  %v2215 = vsel %vm2213, %v2214, %v2205
  %v2216 = vsel %vm2209, %v2212, %v2215
  %v2217 = vsel %vm2206, nan, %v2216
  %v2218 = vand.u32 2147483647, %v958
  %vm2219 = vcmp.le.f32.partialorder %v2218, 0.7853982
  %vm2220 = vcmp.lt.s32.totalorder %v958, 0
  %v2221 = vand.u32 %v958, 2139095040
  %v2222 = vshrl.u32 %v2221, 23
  %v2223 = vsub.s32 %v2222, 127
  %v2224 = vand.u32 2147483647, %v958
  %v2225 = vand.u32 %v2224, 8388607
  %v2226 = vor.u32 %v2225, 8388608
  %v2227 = vsub.s32 0, %v2226
  %v2228 = vadd.s32 %v2223, 1
  %vm2229 = vcmp.gt.s32.totalorder %v2228, 0
  %v2230 = vsel %vm2229, %v2228, 0
  %v2231 = vshrl.u32 %v2230, 5
  %v2232 = vand.u32 %v2230, 31
  %v2233 = vsub.s32 32, %v2232
  %v2234 = vshrl.u32 683565275, %v2233
  %v2235 = vshll.u32 683565275, %v2232
  %v2236 = vshrl.u32 2475754826, %v2233
  %v2237 = vor.u32 %v2235, %v2236
  %v2238 = vshll.u32 2475754826, %v2232
  %v2239 = vshrl.u32 2131351028, %v2233
  %v2240 = vor.u32 %v2238, %v2239
  %v2241 = vshll.u32 2131351028, %v2232
  %v2242 = vshrl.u32 2102212464, %v2233
  %v2243 = vor.u32 %v2241, %v2242
  %v2244 = vshll.u32 2102212464, %v2232
  %v2245 = vshrl.u32 920167782, %v2233
  %v2246 = vor.u32 %v2244, %v2245
  %v2247 = vshll.u32 920167782, %v2232
  %v2248 = vshrl.u32 1326507024, %v2233
  %v2249 = vor.u32 %v2247, %v2248
  %vm2250 = vcmp.lt.s32.totalorder %v2231, 1
  %vm2251 = vcmp.lt.s32.totalorder %v2231, 2
  %vm2252 = vcmp.lt.s32.totalorder %v2231, 3
  %vm2253 = vcmp.lt.s32.totalorder %v2231, 4
  %v2254 = vsel %vm2250, %v2234, %v2237
  %v2255 = vsel %vm2253, %v2243, 2102212464
  %v2256 = vsel %vm2252, %v2240, %v2255
  %v2257 = vsel %vm2251, %v2254, %v2256
  %v2258 = vsel %vm2250, %v2237, %v2240
  %v2259 = vsel %vm2253, %v2246, 920167782
  %v2260 = vsel %vm2252, %v2243, %v2259
  %v2261 = vsel %vm2251, %v2258, %v2260
  %v2262 = vsel %vm2250, %v2240, %v2243
  %v2263 = vsel %vm2253, %v2249, 1326507024
  %v2264 = vsel %vm2252, %v2246, %v2263
  %v2265 = vsel %vm2251, %v2262, %v2264
  %v2266 = vshll.u32 %v2226, 8
  %v2267 = vand.u32 %v2266, 65535
  %v2268 = vshrl.u32 %v2266, 16
  %v2269 = vand.u32 %v2265, 65535
  %v2270 = vshrl.u32 %v2265, 16
  %v2271 = vmul.u32 %v2267, %v2269
  %v2272 = vmul.u32 %v2267, %v2270
  %v2273 = vmul.u32 %v2268, %v2269
  %v2274 = vmul.u32 %v2268, %v2270
  %v2275 = vshll.u32 %v2272, 16
  %v2276 = vshrl.u32 %v2272, 16
  %v2277 = vshll.u32 %v2273, 16
  %v2278 = vshrl.u32 %v2273, 16
  %vm2279 = vc.u32 %v2271, %v2275
  %v2280 = vsel %vm2279, 1, 0
  %v2281 = vadd.s32 %v2271, %v2275
  %v2282 = vadd.s32 %v2274, %v2280
  %vm2283 = vc.u32 %v2281, %v2277
  %v2284 = vsel %vm2283, 1, 0
  %v2285 = vadd.s32 %v2281, %v2277
  %v2286 = vadd.s32 %v2282, %v2284
  %v2287 = vadd.s32 %v2286, %v2276
  %v2288 = vadd.s32 %v2287, %v2278
  %v2289 = vand.u32 %v2266, 65535
  %v2290 = vshrl.u32 %v2266, 16
  %v2291 = vand.u32 %v2261, 65535
  %v2292 = vshrl.u32 %v2261, 16
  %v2293 = vmul.u32 %v2289, %v2291
  %v2294 = vmul.u32 %v2289, %v2292
  %v2295 = vmul.u32 %v2290, %v2291
  %v2296 = vmul.u32 %v2290, %v2292
  %v2297 = vshll.u32 %v2294, 16
  %v2298 = vshrl.u32 %v2294, 16
  %v2299 = vshll.u32 %v2295, 16
  %v2300 = vshrl.u32 %v2295, 16
  %vm2301 = vc.u32 %v2293, %v2297
  %v2302 = vsel %vm2301, 1, 0
  %v2303 = vadd.s32 %v2293, %v2297
  %v2304 = vadd.s32 %v2296, %v2302
  %vm2305 = vc.u32 %v2303, %v2299
  %v2306 = vsel %vm2305, 1, 0
  %v2307 = vadd.s32 %v2303, %v2299
  %v2308 = vadd.s32 %v2304, %v2306
  %v2309 = vadd.s32 %v2308, %v2298
  %v2310 = vadd.s32 %v2309, %v2300
  %v2311 = vmul.u32 %v2266, %v2257
  %v2312 = vadd.s32 %v2288, %v2307
  %vm2313 = vc.u32 %v2288, %v2307
  %v2314 = vadd.s32 %v2310, 1
  %v2315 = vsel %vm2313, %v2314, %v2310
  %v2316 = vadd.s32 %v2311, %v2315
  %v2317 = vadd.s32 %v2316, 536870912
  %v2318 = vshrl.u32 %v2317, 30
  %v2319 = vshll.u32 %v2318, 30
  %v2320 = vsub.s32 %v2316, %v2319
  %vm2321 = vcmp.lt.s32.totalorder %v2320, 0
  %v2322 = vsub.s32 0, %v2320
  %v2323 = vsel %vm2321, %v2322, %v2320
  %v2324 = vclz %v2323
  %v2325 = vsub.s32 %v2324, 2
  %vm2326 = vcmp.gt.s32.totalorder 0, %v2325
  %v2327 = vsel %vm2326, 0, %v2325
  %v2328 = vsub.s32 32, %v2327
  %v2329 = vshll.u32 %v2320, %v2327
  %v2330 = vshrl.u32 %v2312, %v2328
  %v2331 = vor.u32 %v2329, %v2330
  %v2332 = vsub.s32 4294967266, %v2327
  %v2333 = vadd.s32 %v2332, 127
  %v2334 = vshll.u32 %v2333, 23
  %v2335 = vor.u32 4788187, %v2334
  %v2336 = vand.u32 2147483647, %v2335
  %v2338 = vcvt.s32.f32 %v2331
  %v2339 = vmul.f32 %v2338, %v2336
  %v2340 = vxor.u32 %v2339, 2147483648
  %v2341 = vsel %vm2220, %v2340, %v2339
  %v2342 = vsub.s32 4, %v2318
  %v2343 = vsel %vm2220, %v2342, %v2318
  %v2344 = vsel %vm2219, %v958, %v2341
  %v2345 = vsel %vm2219, 0, %v2343
  %v2346 = vmul.f32 %v2344, %v2344
  %v2347 = vmul.f32 %v2346, -0.001358992
  %v2348 = vadd.f32 %v2347, 0.041655596
  %v2349 = vmul.f32 %v2346, %v2348
  %v2350 = vadd.f32 %v2349, -0.4999988
  %v2351 = vmul.f32 %v2346, %v2350
  %v2352 = vadd.f32 1.0, %v2351
  %v2353 = vmul.f32 %v2344, %v2344
  %v2354 = vmul.f32 %v2353, -0.00019511016
  %v2355 = vadd.f32 %v2354, 0.008332121
  %v2356 = vmul.f32 %v2353, %v2355
  %v2357 = vadd.f32 %v2356, -0.16666654
  %v2358 = vmul.f32 %v2353, %v2357
  %v2359 = vadd.f32 %v2358, 1.0
  %v2360 = vmul.f32 %v2359, %v2344
  %vm2361 = vweird.f32 %v958
  %v2362 = vadd.s32 %v2345, 3
  %v2363 = vand.u32 %v2362, 3
  %vm2364 = vcmp.lt.s32.totalorder %v2363, 2
  %vm2365 = vcmp.eq.s32.totalorder %v2363, 0
  %v2366 = vxor.u32 %v2360, 2147483648
  %v2367 = vsel %vm2365, %v2352, %v2366
  %vm2368 = vcmp.eq.s32.totalorder %v2363, 2
  %v2369 = vxor.u32 %v2352, 2147483648
  %v2370 = vsel %vm2368, %v2369, %v2360
  %v2371 = vsel %vm2364, %v2367, %v2370
  %v2372 = vsel %vm2361, nan, %v2371
  %v2373 = vand.u32 2147483647, %v959
  %vm2374 = vcmp.le.f32.partialorder %v2373, 0.7853982
  %vm2375 = vcmp.lt.s32.totalorder %v959, 0
  %v2376 = vand.u32 %v959, 2139095040
  %v2377 = vshrl.u32 %v2376, 23
  %v2378 = vsub.s32 %v2377, 127
  %v2379 = vand.u32 2147483647, %v959
  %v2380 = vand.u32 %v2379, 8388607
  %v2381 = vor.u32 %v2380, 8388608
  %v2382 = vsub.s32 0, %v2381
  %v2383 = vadd.s32 %v2378, 1
  %vm2384 = vcmp.gt.s32.totalorder %v2383, 0
  %v2385 = vsel %vm2384, %v2383, 0
  %v2386 = vshrl.u32 %v2385, 5
  %v2387 = vand.u32 %v2385, 31
  %v2388 = vsub.s32 32, %v2387
  %v2389 = vshrl.u32 683565275, %v2388
  %v2390 = vshll.u32 683565275, %v2387
  %v2391 = vshrl.u32 2475754826, %v2388
  %v2392 = vor.u32 %v2390, %v2391
  %v2393 = vshll.u32 2475754826, %v2387
  %v2394 = vshrl.u32 2131351028, %v2388
  %v2395 = vor.u32 %v2393, %v2394
  %v2396 = vshll.u32 2131351028, %v2387
  %v2397 = vshrl.u32 2102212464, %v2388
  %v2398 = vor.u32 %v2396, %v2397
  %v2399 = vshll.u32 2102212464, %v2387
  %v2400 = vshrl.u32 920167782, %v2388
  %v2401 = vor.u32 %v2399, %v2400
  %v2402 = vshll.u32 920167782, %v2387
  %v2403 = vshrl.u32 1326507024, %v2388
  %v2404 = vor.u32 %v2402, %v2403
  %vm2405 = vcmp.lt.s32.totalorder %v2386, 1
  %vm2406 = vcmp.lt.s32.totalorder %v2386, 2
  %vm2407 = vcmp.lt.s32.totalorder %v2386, 3
  %vm2408 = vcmp.lt.s32.totalorder %v2386, 4
  %v2409 = vsel %vm2405, %v2389, %v2392
  %v2410 = vsel %vm2408, %v2398, 2102212464
  %v2411 = vsel %vm2407, %v2395, %v2410
  %v2412 = vsel %vm2406, %v2409, %v2411
  %v2413 = vsel %vm2405, %v2392, %v2395
  %v2414 = vsel %vm2408, %v2401, 920167782
  %v2415 = vsel %vm2407, %v2398, %v2414
  %v2416 = vsel %vm2406, %v2413, %v2415
  %v2417 = vsel %vm2405, %v2395, %v2398
  %v2418 = vsel %vm2408, %v2404, 1326507024
  %v2419 = vsel %vm2407, %v2401, %v2418
  %v2420 = vsel %vm2406, %v2417, %v2419
  %v2421 = vshll.u32 %v2381, 8
  %v2422 = vand.u32 %v2421, 65535
  %v2423 = vshrl.u32 %v2421, 16
  %v2424 = vand.u32 %v2420, 65535
  %v2425 = vshrl.u32 %v2420, 16
  %v2426 = vmul.u32 %v2422, %v2424
  %v2427 = vmul.u32 %v2422, %v2425
  %v2428 = vmul.u32 %v2423, %v2424
  %v2429 = vmul.u32 %v2423, %v2425
  %v2430 = vshll.u32 %v2427, 16
  %v2431 = vshrl.u32 %v2427, 16
  %v2432 = vshll.u32 %v2428, 16
  %v2433 = vshrl.u32 %v2428, 16
  %vm2434 = vc.u32 %v2426, %v2430
  %v2435 = vsel %vm2434, 1, 0
  %v2436 = vadd.s32 %v2426, %v2430
  %v2437 = vadd.s32 %v2429, %v2435
  %vm2438 = vc.u32 %v2436, %v2432
  %v2439 = vsel %vm2438, 1, 0
  %v2440 = vadd.s32 %v2436, %v2432
  %v2441 = vadd.s32 %v2437, %v2439
  %v2442 = vadd.s32 %v2441, %v2431
  %v2443 = vadd.s32 %v2442, %v2433
  %v2444 = vand.u32 %v2421, 65535
  %v2445 = vshrl.u32 %v2421, 16
  %v2446 = vand.u32 %v2416, 65535
  %v2447 = vshrl.u32 %v2416, 16
  %v2448 = vmul.u32 %v2444, %v2446
  %v2449 = vmul.u32 %v2444, %v2447
  %v2450 = vmul.u32 %v2445, %v2446
  %v2451 = vmul.u32 %v2445, %v2447
  %v2452 = vshll.u32 %v2449, 16
  %v2453 = vshrl.u32 %v2449, 16
  %v2454 = vshll.u32 %v2450, 16
  %v2455 = vshrl.u32 %v2450, 16
  %vm2456 = vc.u32 %v2448, %v2452
  %v2457 = vsel %vm2456, 1, 0
  %v2458 = vadd.s32 %v2448, %v2452
  %v2459 = vadd.s32 %v2451, %v2457
  %vm2460 = vc.u32 %v2458, %v2454
  %v2461 = vsel %vm2460, 1, 0
  %v2462 = vadd.s32 %v2458, %v2454
  %v2463 = vadd.s32 %v2459, %v2461
  %v2464 = vadd.s32 %v2463, %v2453
  %v2465 = vadd.s32 %v2464, %v2455
  %v2466 = vmul.u32 %v2421, %v2412
  %v2467 = vadd.s32 %v2443, %v2462
  %vm2468 = vc.u32 %v2443, %v2462
  %v2469 = vadd.s32 %v2465, 1
  %v2470 = vsel %vm2468, %v2469, %v2465
  %v2471 = vadd.s32 %v2466, %v2470
  %v2472 = vadd.s32 %v2471, 536870912
  %v2473 = vshrl.u32 %v2472, 30
  %v2474 = vshll.u32 %v2473, 30
  %v2475 = vsub.s32 %v2471, %v2474
  %vm2476 = vcmp.lt.s32.totalorder %v2475, 0
  %v2477 = vsub.s32 0, %v2475
  %v2478 = vsel %vm2476, %v2477, %v2475
  %v2479 = vclz %v2478
  %v2480 = vsub.s32 %v2479, 2
  %vm2481 = vcmp.gt.s32.totalorder 0, %v2480
  %v2482 = vsel %vm2481, 0, %v2480
  %v2483 = vsub.s32 32, %v2482
  %v2484 = vshll.u32 %v2475, %v2482
  %v2485 = vshrl.u32 %v2467, %v2483
  %v2486 = vor.u32 %v2484, %v2485
  %v2487 = vsub.s32 4294967266, %v2482
  %v2488 = vadd.s32 %v2487, 127
  %v2489 = vshll.u32 %v2488, 23
  %v2490 = vor.u32 4788187, %v2489
  %v2491 = vand.u32 2147483647, %v2490
  %v2493 = vcvt.s32.f32 %v2486
  %v2494 = vmul.f32 %v2493, %v2491
  %v2495 = vxor.u32 %v2494, 2147483648
  %v2496 = vsel %vm2375, %v2495, %v2494
  %v2497 = vsub.s32 4, %v2473
  %v2498 = vsel %vm2375, %v2497, %v2473
  %v2499 = vsel %vm2374, %v959, %v2496
  %v2500 = vsel %vm2374, 0, %v2498
  %v2501 = vmul.f32 %v2499, %v2499
  %v2502 = vmul.f32 %v2501, -0.001358992
  %v2503 = vadd.f32 %v2502, 0.041655596
  %v2504 = vmul.f32 %v2501, %v2503
  %v2505 = vadd.f32 %v2504, -0.4999988
  %v2506 = vmul.f32 %v2501, %v2505
  %v2507 = vadd.f32 1.0, %v2506
  %v2508 = vmul.f32 %v2499, %v2499
  %v2509 = vmul.f32 %v2508, -0.00019511016
  %v2510 = vadd.f32 %v2509, 0.008332121
  %v2511 = vmul.f32 %v2508, %v2510
  %v2512 = vadd.f32 %v2511, -0.16666654
  %v2513 = vmul.f32 %v2508, %v2512
  %v2514 = vadd.f32 %v2513, 1.0
  %v2515 = vmul.f32 %v2514, %v2499
  %vm2516 = vweird.f32 %v959
  %v2517 = vadd.s32 %v2500, 3
  %v2518 = vand.u32 %v2517, 3
  %vm2519 = vcmp.lt.s32.totalorder %v2518, 2
  %vm2520 = vcmp.eq.s32.totalorder %v2518, 0
  %v2521 = vxor.u32 %v2515, 2147483648
  %v2522 = vsel %vm2520, %v2507, %v2521
  %vm2523 = vcmp.eq.s32.totalorder %v2518, 2
  %v2524 = vxor.u32 %v2507, 2147483648
  %v2525 = vsel %vm2523, %v2524, %v2515
  %v2526 = vsel %vm2519, %v2522, %v2525
  %v2527 = vsel %vm2516, nan, %v2526
  %v2528 = vand.u32 2147483647, %v960
  %vm2529 = vcmp.le.f32.partialorder %v2528, 0.7853982
  %vm2530 = vcmp.lt.s32.totalorder %v960, 0
  %v2531 = vand.u32 %v960, 2139095040
  %v2532 = vshrl.u32 %v2531, 23
  %v2533 = vsub.s32 %v2532, 127
  %v2534 = vand.u32 2147483647, %v960
  %v2535 = vand.u32 %v2534, 8388607
  %v2536 = vor.u32 %v2535, 8388608
  %v2537 = vsub.s32 0, %v2536
  %v2538 = vadd.s32 %v2533, 1
  %vm2539 = vcmp.gt.s32.totalorder %v2538, 0
  %v2540 = vsel %vm2539, %v2538, 0
  %v2541 = vshrl.u32 %v2540, 5
  %v2542 = vand.u32 %v2540, 31
  %v2543 = vsub.s32 32, %v2542
  %v2544 = vshrl.u32 683565275, %v2543
  %v2545 = vshll.u32 683565275, %v2542
  %v2546 = vshrl.u32 2475754826, %v2543
  %v2547 = vor.u32 %v2545, %v2546
  %v2548 = vshll.u32 2475754826, %v2542
  %v2549 = vshrl.u32 2131351028, %v2543
  %v2550 = vor.u32 %v2548, %v2549
  %v2551 = vshll.u32 2131351028, %v2542
  %v2552 = vshrl.u32 2102212464, %v2543
  %v2553 = vor.u32 %v2551, %v2552
  %v2554 = vshll.u32 2102212464, %v2542
  %v2555 = vshrl.u32 920167782, %v2543
  %v2556 = vor.u32 %v2554, %v2555
  %v2557 = vshll.u32 920167782, %v2542
  %v2558 = vshrl.u32 1326507024, %v2543
  %v2559 = vor.u32 %v2557, %v2558
  %vm2560 = vcmp.lt.s32.totalorder %v2541, 1
  %vm2561 = vcmp.lt.s32.totalorder %v2541, 2
  %vm2562 = vcmp.lt.s32.totalorder %v2541, 3
  %vm2563 = vcmp.lt.s32.totalorder %v2541, 4
  %v2564 = vsel %vm2560, %v2544, %v2547
  %v2565 = vsel %vm2563, %v2553, 2102212464
  %v2566 = vsel %vm2562, %v2550, %v2565
  %v2567 = vsel %vm2561, %v2564, %v2566
  %v2568 = vsel %vm2560, %v2547, %v2550
  %v2569 = vsel %vm2563, %v2556, 920167782
  %v2570 = vsel %vm2562, %v2553, %v2569
  %v2571 = vsel %vm2561, %v2568, %v2570
  %v2572 = vsel %vm2560, %v2550, %v2553
  %v2573 = vsel %vm2563, %v2559, 1326507024
  %v2574 = vsel %vm2562, %v2556, %v2573
  %v2575 = vsel %vm2561, %v2572, %v2574
  %v2576 = vshll.u32 %v2536, 8
  %v2577 = vand.u32 %v2576, 65535
  %v2578 = vshrl.u32 %v2576, 16
  %v2579 = vand.u32 %v2575, 65535
  %v2580 = vshrl.u32 %v2575, 16
  %v2581 = vmul.u32 %v2577, %v2579
  %v2582 = vmul.u32 %v2577, %v2580
  %v2583 = vmul.u32 %v2578, %v2579
  %v2584 = vmul.u32 %v2578, %v2580
  %v2585 = vshll.u32 %v2582, 16
  %v2586 = vshrl.u32 %v2582, 16
  %v2587 = vshll.u32 %v2583, 16
  %v2588 = vshrl.u32 %v2583, 16
  %vm2589 = vc.u32 %v2581, %v2585
  %v2590 = vsel %vm2589, 1, 0
  %v2591 = vadd.s32 %v2581, %v2585
  %v2592 = vadd.s32 %v2584, %v2590
  %vm2593 = vc.u32 %v2591, %v2587
  %v2594 = vsel %vm2593, 1, 0
  %v2595 = vadd.s32 %v2591, %v2587
  %v2596 = vadd.s32 %v2592, %v2594
  %v2597 = vadd.s32 %v2596, %v2586
  %v2598 = vadd.s32 %v2597, %v2588
  %v2599 = vand.u32 %v2576, 65535
  %v2600 = vshrl.u32 %v2576, 16
  %v2601 = vand.u32 %v2571, 65535
  %v2602 = vshrl.u32 %v2571, 16
  %v2603 = vmul.u32 %v2599, %v2601
  %v2604 = vmul.u32 %v2599, %v2602
  %v2605 = vmul.u32 %v2600, %v2601
  %v2606 = vmul.u32 %v2600, %v2602
  %v2607 = vshll.u32 %v2604, 16
  %v2608 = vshrl.u32 %v2604, 16
  %v2609 = vshll.u32 %v2605, 16
  %v2610 = vshrl.u32 %v2605, 16
  %vm2611 = vc.u32 %v2603, %v2607
  %v2612 = vsel %vm2611, 1, 0
  %v2613 = vadd.s32 %v2603, %v2607
  %v2614 = vadd.s32 %v2606, %v2612
  %vm2615 = vc.u32 %v2613, %v2609
  %v2616 = vsel %vm2615, 1, 0
  %v2617 = vadd.s32 %v2613, %v2609
  %v2618 = vadd.s32 %v2614, %v2616
  %v2619 = vadd.s32 %v2618, %v2608
  %v2620 = vadd.s32 %v2619, %v2610
  %v2621 = vmul.u32 %v2576, %v2567
  %v2622 = vadd.s32 %v2598, %v2617
  %vm2623 = vc.u32 %v2598, %v2617
  %v2624 = vadd.s32 %v2620, 1
  %v2625 = vsel %vm2623, %v2624, %v2620
  %v2626 = vadd.s32 %v2621, %v2625
  %v2627 = vadd.s32 %v2626, 536870912
  %v2628 = vshrl.u32 %v2627, 30
  %v2629 = vshll.u32 %v2628, 30
  %v2630 = vsub.s32 %v2626, %v2629
  %vm2631 = vcmp.lt.s32.totalorder %v2630, 0
  %v2632 = vsub.s32 0, %v2630
  %v2633 = vsel %vm2631, %v2632, %v2630
  %v2634 = vclz %v2633
  %v2635 = vsub.s32 %v2634, 2
  %vm2636 = vcmp.gt.s32.totalorder 0, %v2635
  %v2637 = vsel %vm2636, 0, %v2635
  %v2638 = vsub.s32 32, %v2637
  %v2639 = vshll.u32 %v2630, %v2637
  %v2640 = vshrl.u32 %v2622, %v2638
  %v2641 = vor.u32 %v2639, %v2640
  %v2642 = vsub.s32 4294967266, %v2637
  %v2643 = vadd.s32 %v2642, 127
  %v2644 = vshll.u32 %v2643, 23
  %v2645 = vor.u32 4788187, %v2644
  %v2646 = vand.u32 2147483647, %v2645
  %v2648 = vcvt.s32.f32 %v2641
  %v2649 = vmul.f32 %v2648, %v2646
  %v2650 = vxor.u32 %v2649, 2147483648
  %v2651 = vsel %vm2530, %v2650, %v2649
  %v2652 = vsub.s32 4, %v2628
  %v2653 = vsel %vm2530, %v2652, %v2628
  %v2654 = vsel %vm2529, %v960, %v2651
  %v2655 = vsel %vm2529, 0, %v2653
  %v2656 = vmul.f32 %v2654, %v2654
  %v2657 = vmul.f32 %v2656, -0.001358992
  %v2658 = vadd.f32 %v2657, 0.041655596
  %v2659 = vmul.f32 %v2656, %v2658
  %v2660 = vadd.f32 %v2659, -0.4999988
  %v2661 = vmul.f32 %v2656, %v2660
  %v2662 = vadd.f32 1.0, %v2661
  %v2663 = vmul.f32 %v2654, %v2654
  %v2664 = vmul.f32 %v2663, -0.00019511016
  %v2665 = vadd.f32 %v2664, 0.008332121
  %v2666 = vmul.f32 %v2663, %v2665
  %v2667 = vadd.f32 %v2666, -0.16666654
  %v2668 = vmul.f32 %v2663, %v2667
  %v2669 = vadd.f32 %v2668, 1.0
  %v2670 = vmul.f32 %v2669, %v2654
  %vm2671 = vweird.f32 %v960
  %v2672 = vadd.s32 %v2655, 3
  %v2673 = vand.u32 %v2672, 3
  %vm2674 = vcmp.lt.s32.totalorder %v2673, 2
  %vm2675 = vcmp.eq.s32.totalorder %v2673, 0
  %v2676 = vxor.u32 %v2670, 2147483648
  %v2677 = vsel %vm2675, %v2662, %v2676
  %vm2678 = vcmp.eq.s32.totalorder %v2673, 2
  %v2679 = vxor.u32 %v2662, 2147483648
  %v2680 = vsel %vm2678, %v2679, %v2670
  %v2681 = vsel %vm2674, %v2677, %v2680
  %v2682 = vsel %vm2671, nan, %v2681
  %v2683 = vand.u32 2147483647, %v961
  %vm2684 = vcmp.le.f32.partialorder %v2683, 0.7853982
  %vm2685 = vcmp.lt.s32.totalorder %v961, 0
  %v2686 = vand.u32 %v961, 2139095040
  %v2687 = vshrl.u32 %v2686, 23
  %v2688 = vsub.s32 %v2687, 127
  %v2689 = vand.u32 2147483647, %v961
  %v2690 = vand.u32 %v2689, 8388607
  %v2691 = vor.u32 %v2690, 8388608
  %v2692 = vsub.s32 0, %v2691
  %v2693 = vadd.s32 %v2688, 1
  %vm2694 = vcmp.gt.s32.totalorder %v2693, 0
  %v2695 = vsel %vm2694, %v2693, 0
  %v2696 = vshrl.u32 %v2695, 5
  %v2697 = vand.u32 %v2695, 31
  %v2698 = vsub.s32 32, %v2697
  %v2699 = vshrl.u32 683565275, %v2698
  %v2700 = vshll.u32 683565275, %v2697
  %v2701 = vshrl.u32 2475754826, %v2698
  %v2702 = vor.u32 %v2700, %v2701
  %v2703 = vshll.u32 2475754826, %v2697
  %v2704 = vshrl.u32 2131351028, %v2698
  %v2705 = vor.u32 %v2703, %v2704
  %v2706 = vshll.u32 2131351028, %v2697
  %v2707 = vshrl.u32 2102212464, %v2698
  %v2708 = vor.u32 %v2706, %v2707
  %v2709 = vshll.u32 2102212464, %v2697
  %v2710 = vshrl.u32 920167782, %v2698
  %v2711 = vor.u32 %v2709, %v2710
  %v2712 = vshll.u32 920167782, %v2697
  %v2713 = vshrl.u32 1326507024, %v2698
  %v2714 = vor.u32 %v2712, %v2713
  %vm2715 = vcmp.lt.s32.totalorder %v2696, 1
  %vm2716 = vcmp.lt.s32.totalorder %v2696, 2
  %vm2717 = vcmp.lt.s32.totalorder %v2696, 3
  %vm2718 = vcmp.lt.s32.totalorder %v2696, 4
  %v2719 = vsel %vm2715, %v2699, %v2702
  %v2720 = vsel %vm2718, %v2708, 2102212464
  %v2721 = vsel %vm2717, %v2705, %v2720
  %v2722 = vsel %vm2716, %v2719, %v2721
  %v2723 = vsel %vm2715, %v2702, %v2705
  %v2724 = vsel %vm2718, %v2711, 920167782
  %v2725 = vsel %vm2717, %v2708, %v2724
  %v2726 = vsel %vm2716, %v2723, %v2725
  %v2727 = vsel %vm2715, %v2705, %v2708
  %v2728 = vsel %vm2718, %v2714, 1326507024
  %v2729 = vsel %vm2717, %v2711, %v2728
  %v2730 = vsel %vm2716, %v2727, %v2729
  %v2731 = vshll.u32 %v2691, 8
  %v2732 = vand.u32 %v2731, 65535
  %v2733 = vshrl.u32 %v2731, 16
  %v2734 = vand.u32 %v2730, 65535
  %v2735 = vshrl.u32 %v2730, 16
  %v2736 = vmul.u32 %v2732, %v2734
  %v2737 = vmul.u32 %v2732, %v2735
  %v2738 = vmul.u32 %v2733, %v2734
  %v2739 = vmul.u32 %v2733, %v2735
  %v2740 = vshll.u32 %v2737, 16
  %v2741 = vshrl.u32 %v2737, 16
  %v2742 = vshll.u32 %v2738, 16
  %v2743 = vshrl.u32 %v2738, 16
  %vm2744 = vc.u32 %v2736, %v2740
  %v2745 = vsel %vm2744, 1, 0
  %v2746 = vadd.s32 %v2736, %v2740
  %v2747 = vadd.s32 %v2739, %v2745
  %vm2748 = vc.u32 %v2746, %v2742
  %v2749 = vsel %vm2748, 1, 0
  %v2750 = vadd.s32 %v2746, %v2742
  %v2751 = vadd.s32 %v2747, %v2749
  %v2752 = vadd.s32 %v2751, %v2741
  %v2753 = vadd.s32 %v2752, %v2743
  %v2754 = vand.u32 %v2731, 65535
  %v2755 = vshrl.u32 %v2731, 16
  %v2756 = vand.u32 %v2726, 65535
  %v2757 = vshrl.u32 %v2726, 16
  %v2758 = vmul.u32 %v2754, %v2756
  %v2759 = vmul.u32 %v2754, %v2757
  %v2760 = vmul.u32 %v2755, %v2756
  %v2761 = vmul.u32 %v2755, %v2757
  %v2762 = vshll.u32 %v2759, 16
  %v2763 = vshrl.u32 %v2759, 16
  %v2764 = vshll.u32 %v2760, 16
  %v2765 = vshrl.u32 %v2760, 16
  %vm2766 = vc.u32 %v2758, %v2762
  %v2767 = vsel %vm2766, 1, 0
  %v2768 = vadd.s32 %v2758, %v2762
  %v2769 = vadd.s32 %v2761, %v2767
  %vm2770 = vc.u32 %v2768, %v2764
  %v2771 = vsel %vm2770, 1, 0
  %v2772 = vadd.s32 %v2768, %v2764
  %v2773 = vadd.s32 %v2769, %v2771
  %v2774 = vadd.s32 %v2773, %v2763
  %v2775 = vadd.s32 %v2774, %v2765
  %v2776 = vmul.u32 %v2731, %v2722
  %v2777 = vadd.s32 %v2753, %v2772
  %vm2778 = vc.u32 %v2753, %v2772
  %v2779 = vadd.s32 %v2775, 1
  %v2780 = vsel %vm2778, %v2779, %v2775
  %v2781 = vadd.s32 %v2776, %v2780
  %v2782 = vadd.s32 %v2781, 536870912
  %v2783 = vshrl.u32 %v2782, 30
  %v2784 = vshll.u32 %v2783, 30
  %v2785 = vsub.s32 %v2781, %v2784
  %vm2786 = vcmp.lt.s32.totalorder %v2785, 0
  %v2787 = vsub.s32 0, %v2785
  %v2788 = vsel %vm2786, %v2787, %v2785
  %v2789 = vclz %v2788
  %v2790 = vsub.s32 %v2789, 2
  %vm2791 = vcmp.gt.s32.totalorder 0, %v2790
  %v2792 = vsel %vm2791, 0, %v2790
  %v2793 = vsub.s32 32, %v2792
  %v2794 = vshll.u32 %v2785, %v2792
  %v2795 = vshrl.u32 %v2777, %v2793
  %v2796 = vor.u32 %v2794, %v2795
  %v2797 = vsub.s32 4294967266, %v2792
  %v2798 = vadd.s32 %v2797, 127
  %v2799 = vshll.u32 %v2798, 23
  %v2800 = vor.u32 4788187, %v2799
  %v2801 = vand.u32 2147483647, %v2800
  %v2803 = vcvt.s32.f32 %v2796
  %v2804 = vmul.f32 %v2803, %v2801
  %v2805 = vxor.u32 %v2804, 2147483648
  %v2806 = vsel %vm2685, %v2805, %v2804
  %v2807 = vsub.s32 4, %v2783
  %v2808 = vsel %vm2685, %v2807, %v2783
  %v2809 = vsel %vm2684, %v961, %v2806
  %v2810 = vsel %vm2684, 0, %v2808
  %v2811 = vmul.f32 %v2809, %v2809
  %v2812 = vmul.f32 %v2811, -0.001358992
  %v2813 = vadd.f32 %v2812, 0.041655596
  %v2814 = vmul.f32 %v2811, %v2813
  %v2815 = vadd.f32 %v2814, -0.4999988
  %v2816 = vmul.f32 %v2811, %v2815
  %v2817 = vadd.f32 1.0, %v2816
  %v2818 = vmul.f32 %v2809, %v2809
  %v2819 = vmul.f32 %v2818, -0.00019511016
  %v2820 = vadd.f32 %v2819, 0.008332121
  %v2821 = vmul.f32 %v2818, %v2820
  %v2822 = vadd.f32 %v2821, -0.16666654
  %v2823 = vmul.f32 %v2818, %v2822
  %v2824 = vadd.f32 %v2823, 1.0
  %v2825 = vmul.f32 %v2824, %v2809
  %vm2826 = vweird.f32 %v961
  %v2827 = vadd.s32 %v2810, 3
  %v2828 = vand.u32 %v2827, 3
  %vm2829 = vcmp.lt.s32.totalorder %v2828, 2
  %vm2830 = vcmp.eq.s32.totalorder %v2828, 0
  %v2831 = vxor.u32 %v2825, 2147483648
  %v2832 = vsel %vm2830, %v2817, %v2831
  %vm2833 = vcmp.eq.s32.totalorder %v2828, 2
  %v2834 = vxor.u32 %v2817, 2147483648
  %v2835 = vsel %vm2833, %v2834, %v2825
  %v2836 = vsel %vm2829, %v2832, %v2835
  %v2837 = vsel %vm2826, nan, %v2836
  %v2838 = vand.u32 2147483647, %v962
  %vm2839 = vcmp.le.f32.partialorder %v2838, 0.7853982
  %vm2840 = vcmp.lt.s32.totalorder %v962, 0
  %v2841 = vand.u32 %v962, 2139095040
  %v2842 = vshrl.u32 %v2841, 23
  %v2843 = vsub.s32 %v2842, 127
  %v2844 = vand.u32 2147483647, %v962
  %v2845 = vand.u32 %v2844, 8388607
  %v2846 = vor.u32 %v2845, 8388608
  %v2847 = vsub.s32 0, %v2846
  %v2848 = vadd.s32 %v2843, 1
  %vm2849 = vcmp.gt.s32.totalorder %v2848, 0
  %v2850 = vsel %vm2849, %v2848, 0
  %v2851 = vshrl.u32 %v2850, 5
  %v2852 = vand.u32 %v2850, 31
  %v2853 = vsub.s32 32, %v2852
  %v2854 = vshrl.u32 683565275, %v2853
  %v2855 = vshll.u32 683565275, %v2852
  %v2856 = vshrl.u32 2475754826, %v2853
  %v2857 = vor.u32 %v2855, %v2856
  %v2858 = vshll.u32 2475754826, %v2852
  %v2859 = vshrl.u32 2131351028, %v2853
  %v2860 = vor.u32 %v2858, %v2859
  %v2861 = vshll.u32 2131351028, %v2852
  %v2862 = vshrl.u32 2102212464, %v2853
  %v2863 = vor.u32 %v2861, %v2862
  %v2864 = vshll.u32 2102212464, %v2852
  %v2865 = vshrl.u32 920167782, %v2853
  %v2866 = vor.u32 %v2864, %v2865
  %v2867 = vshll.u32 920167782, %v2852
  %v2868 = vshrl.u32 1326507024, %v2853
  %v2869 = vor.u32 %v2867, %v2868
  %vm2870 = vcmp.lt.s32.totalorder %v2851, 1
  %vm2871 = vcmp.lt.s32.totalorder %v2851, 2
  %vm2872 = vcmp.lt.s32.totalorder %v2851, 3
  %vm2873 = vcmp.lt.s32.totalorder %v2851, 4
  %v2874 = vsel %vm2870, %v2854, %v2857
  %v2875 = vsel %vm2873, %v2863, 2102212464
  %v2876 = vsel %vm2872, %v2860, %v2875
  %v2877 = vsel %vm2871, %v2874, %v2876
  %v2878 = vsel %vm2870, %v2857, %v2860
  %v2879 = vsel %vm2873, %v2866, 920167782
  %v2880 = vsel %vm2872, %v2863, %v2879
  %v2881 = vsel %vm2871, %v2878, %v2880
  %v2882 = vsel %vm2870, %v2860, %v2863
  %v2883 = vsel %vm2873, %v2869, 1326507024
  %v2884 = vsel %vm2872, %v2866, %v2883
  %v2885 = vsel %vm2871, %v2882, %v2884
  %v2886 = vshll.u32 %v2846, 8
  %v2887 = vand.u32 %v2886, 65535
  %v2888 = vshrl.u32 %v2886, 16
  %v2889 = vand.u32 %v2885, 65535
  %v2890 = vshrl.u32 %v2885, 16
  %v2891 = vmul.u32 %v2887, %v2889
  %v2892 = vmul.u32 %v2887, %v2890
  %v2893 = vmul.u32 %v2888, %v2889
  %v2894 = vmul.u32 %v2888, %v2890
  %v2895 = vshll.u32 %v2892, 16
  %v2896 = vshrl.u32 %v2892, 16
  %v2897 = vshll.u32 %v2893, 16
  %v2898 = vshrl.u32 %v2893, 16
  %vm2899 = vc.u32 %v2891, %v2895
  %v2900 = vsel %vm2899, 1, 0
  %v2901 = vadd.s32 %v2891, %v2895
  %v2902 = vadd.s32 %v2894, %v2900
  %vm2903 = vc.u32 %v2901, %v2897
  %v2904 = vsel %vm2903, 1, 0
  %v2905 = vadd.s32 %v2901, %v2897
  %v2906 = vadd.s32 %v2902, %v2904
  %v2907 = vadd.s32 %v2906, %v2896
  %v2908 = vadd.s32 %v2907, %v2898
  %v2909 = vand.u32 %v2886, 65535
  %v2910 = vshrl.u32 %v2886, 16
  %v2911 = vand.u32 %v2881, 65535
  %v2912 = vshrl.u32 %v2881, 16
  %v2913 = vmul.u32 %v2909, %v2911
  %v2914 = vmul.u32 %v2909, %v2912
  %v2915 = vmul.u32 %v2910, %v2911
  %v2916 = vmul.u32 %v2910, %v2912
  %v2917 = vshll.u32 %v2914, 16
  %v2918 = vshrl.u32 %v2914, 16
  %v2919 = vshll.u32 %v2915, 16
  %v2920 = vshrl.u32 %v2915, 16
  %vm2921 = vc.u32 %v2913, %v2917
  %v2922 = vsel %vm2921, 1, 0
  %v2923 = vadd.s32 %v2913, %v2917
  %v2924 = vadd.s32 %v2916, %v2922
  %vm2925 = vc.u32 %v2923, %v2919
  %v2926 = vsel %vm2925, 1, 0
  %v2927 = vadd.s32 %v2923, %v2919
  %v2928 = vadd.s32 %v2924, %v2926
  %v2929 = vadd.s32 %v2928, %v2918
  %v2930 = vadd.s32 %v2929, %v2920
  %v2931 = vmul.u32 %v2886, %v2877
  %v2932 = vadd.s32 %v2908, %v2927
  %vm2933 = vc.u32 %v2908, %v2927
  %v2934 = vadd.s32 %v2930, 1
  %v2935 = vsel %vm2933, %v2934, %v2930
  %v2936 = vadd.s32 %v2931, %v2935
  %v2937 = vadd.s32 %v2936, 536870912
  %v2938 = vshrl.u32 %v2937, 30
  %v2939 = vshll.u32 %v2938, 30
  %v2940 = vsub.s32 %v2936, %v2939
  %vm2941 = vcmp.lt.s32.totalorder %v2940, 0
  %v2942 = vsub.s32 0, %v2940
  %v2943 = vsel %vm2941, %v2942, %v2940
  %v2944 = vclz %v2943
  %v2945 = vsub.s32 %v2944, 2
  %vm2946 = vcmp.gt.s32.totalorder 0, %v2945
  %v2947 = vsel %vm2946, 0, %v2945
  %v2948 = vsub.s32 32, %v2947
  %v2949 = vshll.u32 %v2940, %v2947
  %v2950 = vshrl.u32 %v2932, %v2948
  %v2951 = vor.u32 %v2949, %v2950
  %v2952 = vsub.s32 4294967266, %v2947
  %v2953 = vadd.s32 %v2952, 127
  %v2954 = vshll.u32 %v2953, 23
  %v2955 = vor.u32 4788187, %v2954
  %v2956 = vand.u32 2147483647, %v2955
  %v2958 = vcvt.s32.f32 %v2951
  %v2959 = vmul.f32 %v2958, %v2956
  %v2960 = vxor.u32 %v2959, 2147483648
  %v2961 = vsel %vm2840, %v2960, %v2959
  %v2962 = vsub.s32 4, %v2938
  %v2963 = vsel %vm2840, %v2962, %v2938
  %v2964 = vsel %vm2839, %v962, %v2961
  %v2965 = vsel %vm2839, 0, %v2963
  %v2966 = vmul.f32 %v2964, %v2964
  %v2967 = vmul.f32 %v2966, -0.001358992
  %v2968 = vadd.f32 %v2967, 0.041655596
  %v2969 = vmul.f32 %v2966, %v2968
  %v2970 = vadd.f32 %v2969, -0.4999988
  %v2971 = vmul.f32 %v2966, %v2970
  %v2972 = vadd.f32 1.0, %v2971
  %v2973 = vmul.f32 %v2964, %v2964
  %v2974 = vmul.f32 %v2973, -0.00019511016
  %v2975 = vadd.f32 %v2974, 0.008332121
  %v2976 = vmul.f32 %v2973, %v2975
  %v2977 = vadd.f32 %v2976, -0.16666654
  %v2978 = vmul.f32 %v2973, %v2977
  %v2979 = vadd.f32 %v2978, 1.0
  %v2980 = vmul.f32 %v2979, %v2964
  %vm2981 = vweird.f32 %v962
  %v2982 = vadd.s32 %v2965, 3
  %v2983 = vand.u32 %v2982, 3
  %vm2984 = vcmp.lt.s32.totalorder %v2983, 2
  %vm2985 = vcmp.eq.s32.totalorder %v2983, 0
  %v2986 = vxor.u32 %v2980, 2147483648
  %v2987 = vsel %vm2985, %v2972, %v2986
  %vm2988 = vcmp.eq.s32.totalorder %v2983, 2
  %v2989 = vxor.u32 %v2972, 2147483648
  %v2990 = vsel %vm2988, %v2989, %v2980
  %v2991 = vsel %vm2984, %v2987, %v2990
  %v2992 = vsel %vm2981, nan, %v2991
  %v2993 = vand.u32 2147483647, %v963
  %vm2994 = vcmp.le.f32.partialorder %v2993, 0.7853982
  %vm2995 = vcmp.lt.s32.totalorder %v963, 0
  %v2996 = vand.u32 %v963, 2139095040
  %v2997 = vshrl.u32 %v2996, 23
  %v2998 = vsub.s32 %v2997, 127
  %v2999 = vand.u32 2147483647, %v963
  %v3000 = vand.u32 %v2999, 8388607
  %v3001 = vor.u32 %v3000, 8388608
  %v3002 = vsub.s32 0, %v3001
  %v3003 = vadd.s32 %v2998, 1
  %vm3004 = vcmp.gt.s32.totalorder %v3003, 0
  %v3005 = vsel %vm3004, %v3003, 0
  %v3006 = vshrl.u32 %v3005, 5
  %v3007 = vand.u32 %v3005, 31
  %v3008 = vsub.s32 32, %v3007
  %v3009 = vshrl.u32 683565275, %v3008
  %v3010 = vshll.u32 683565275, %v3007
  %v3011 = vshrl.u32 2475754826, %v3008
  %v3012 = vor.u32 %v3010, %v3011
  %v3013 = vshll.u32 2475754826, %v3007
  %v3014 = vshrl.u32 2131351028, %v3008
  %v3015 = vor.u32 %v3013, %v3014
  %v3016 = vshll.u32 2131351028, %v3007
  %v3017 = vshrl.u32 2102212464, %v3008
  %v3018 = vor.u32 %v3016, %v3017
  %v3019 = vshll.u32 2102212464, %v3007
  %v3020 = vshrl.u32 920167782, %v3008
  %v3021 = vor.u32 %v3019, %v3020
  %v3022 = vshll.u32 920167782, %v3007
  %v3023 = vshrl.u32 1326507024, %v3008
  %v3024 = vor.u32 %v3022, %v3023
  %vm3025 = vcmp.lt.s32.totalorder %v3006, 1
  %vm3026 = vcmp.lt.s32.totalorder %v3006, 2
  %vm3027 = vcmp.lt.s32.totalorder %v3006, 3
  %vm3028 = vcmp.lt.s32.totalorder %v3006, 4
  %v3029 = vsel %vm3025, %v3009, %v3012
  %v3030 = vsel %vm3028, %v3018, 2102212464
  %v3031 = vsel %vm3027, %v3015, %v3030
  %v3032 = vsel %vm3026, %v3029, %v3031
  %v3033 = vsel %vm3025, %v3012, %v3015
  %v3034 = vsel %vm3028, %v3021, 920167782
  %v3035 = vsel %vm3027, %v3018, %v3034
  %v3036 = vsel %vm3026, %v3033, %v3035
  %v3037 = vsel %vm3025, %v3015, %v3018
  %v3038 = vsel %vm3028, %v3024, 1326507024
  %v3039 = vsel %vm3027, %v3021, %v3038
  %v3040 = vsel %vm3026, %v3037, %v3039
  %v3041 = vshll.u32 %v3001, 8
  %v3042 = vand.u32 %v3041, 65535
  %v3043 = vshrl.u32 %v3041, 16
  %v3044 = vand.u32 %v3040, 65535
  %v3045 = vshrl.u32 %v3040, 16
  %v3046 = vmul.u32 %v3042, %v3044
  %v3047 = vmul.u32 %v3042, %v3045
  %v3048 = vmul.u32 %v3043, %v3044
  %v3049 = vmul.u32 %v3043, %v3045
  %v3050 = vshll.u32 %v3047, 16
  %v3051 = vshrl.u32 %v3047, 16
  %v3052 = vshll.u32 %v3048, 16
  %v3053 = vshrl.u32 %v3048, 16
  %vm3054 = vc.u32 %v3046, %v3050
  %v3055 = vsel %vm3054, 1, 0
  %v3056 = vadd.s32 %v3046, %v3050
  %v3057 = vadd.s32 %v3049, %v3055
  %vm3058 = vc.u32 %v3056, %v3052
  %v3059 = vsel %vm3058, 1, 0
  %v3060 = vadd.s32 %v3056, %v3052
  %v3061 = vadd.s32 %v3057, %v3059
  %v3062 = vadd.s32 %v3061, %v3051
  %v3063 = vadd.s32 %v3062, %v3053
  %v3064 = vand.u32 %v3041, 65535
  %v3065 = vshrl.u32 %v3041, 16
  %v3066 = vand.u32 %v3036, 65535
  %v3067 = vshrl.u32 %v3036, 16
  %v3068 = vmul.u32 %v3064, %v3066
  %v3069 = vmul.u32 %v3064, %v3067
  %v3070 = vmul.u32 %v3065, %v3066
  %v3071 = vmul.u32 %v3065, %v3067
  %v3072 = vshll.u32 %v3069, 16
  %v3073 = vshrl.u32 %v3069, 16
  %v3074 = vshll.u32 %v3070, 16
  %v3075 = vshrl.u32 %v3070, 16
  %vm3076 = vc.u32 %v3068, %v3072
  %v3077 = vsel %vm3076, 1, 0
  %v3078 = vadd.s32 %v3068, %v3072
  %v3079 = vadd.s32 %v3071, %v3077
  %vm3080 = vc.u32 %v3078, %v3074
  %v3081 = vsel %vm3080, 1, 0
  %v3082 = vadd.s32 %v3078, %v3074
  %v3083 = vadd.s32 %v3079, %v3081
  %v3084 = vadd.s32 %v3083, %v3073
  %v3085 = vadd.s32 %v3084, %v3075
  %v3086 = vmul.u32 %v3041, %v3032
  %v3087 = vadd.s32 %v3063, %v3082
  %vm3088 = vc.u32 %v3063, %v3082
  %v3089 = vadd.s32 %v3085, 1
  %v3090 = vsel %vm3088, %v3089, %v3085
  %v3091 = vadd.s32 %v3086, %v3090
  %v3092 = vadd.s32 %v3091, 536870912
  %v3093 = vshrl.u32 %v3092, 30
  %v3094 = vshll.u32 %v3093, 30
  %v3095 = vsub.s32 %v3091, %v3094
  %vm3096 = vcmp.lt.s32.totalorder %v3095, 0
  %v3097 = vsub.s32 0, %v3095
  %v3098 = vsel %vm3096, %v3097, %v3095
  %v3099 = vclz %v3098
  %v3100 = vsub.s32 %v3099, 2
  %vm3101 = vcmp.gt.s32.totalorder 0, %v3100
  %v3102 = vsel %vm3101, 0, %v3100
  %v3103 = vsub.s32 32, %v3102
  %v3104 = vshll.u32 %v3095, %v3102
  %v3105 = vshrl.u32 %v3087, %v3103
  %v3106 = vor.u32 %v3104, %v3105
  %v3107 = vsub.s32 4294967266, %v3102
  %v3108 = vadd.s32 %v3107, 127
  %v3109 = vshll.u32 %v3108, 23
  %v3110 = vor.u32 4788187, %v3109
  %v3111 = vand.u32 2147483647, %v3110
  %v3113 = vcvt.s32.f32 %v3106
  %v3114 = vmul.f32 %v3113, %v3111
  %v3115 = vxor.u32 %v3114, 2147483648
  %v3116 = vsel %vm2995, %v3115, %v3114
  %v3117 = vsub.s32 4, %v3093
  %v3118 = vsel %vm2995, %v3117, %v3093
  %v3119 = vsel %vm2994, %v963, %v3116
  %v3120 = vsel %vm2994, 0, %v3118
  %v3121 = vmul.f32 %v3119, %v3119
  %v3122 = vmul.f32 %v3121, -0.001358992
  %v3123 = vadd.f32 %v3122, 0.041655596
  %v3124 = vmul.f32 %v3121, %v3123
  %v3125 = vadd.f32 %v3124, -0.4999988
  %v3126 = vmul.f32 %v3121, %v3125
  %v3127 = vadd.f32 1.0, %v3126
  %v3128 = vmul.f32 %v3119, %v3119
  %v3129 = vmul.f32 %v3128, -0.00019511016
  %v3130 = vadd.f32 %v3129, 0.008332121
  %v3131 = vmul.f32 %v3128, %v3130
  %v3132 = vadd.f32 %v3131, -0.16666654
  %v3133 = vmul.f32 %v3128, %v3132
  %v3134 = vadd.f32 %v3133, 1.0
  %v3135 = vmul.f32 %v3134, %v3119
  %vm3136 = vweird.f32 %v963
  %v3137 = vadd.s32 %v3120, 3
  %v3138 = vand.u32 %v3137, 3
  %vm3139 = vcmp.lt.s32.totalorder %v3138, 2
  %vm3140 = vcmp.eq.s32.totalorder %v3138, 0
  %v3141 = vxor.u32 %v3135, 2147483648
  %v3142 = vsel %vm3140, %v3127, %v3141
  %vm3143 = vcmp.eq.s32.totalorder %v3138, 2
  %v3144 = vxor.u32 %v3127, 2147483648
  %v3145 = vsel %vm3143, %v3144, %v3135
  %v3146 = vsel %vm3139, %v3142, %v3145
  %v3147 = vsel %vm3136, nan, %v3146
  %v3148 = vand.u32 2147483647, %v964
  %vm3149 = vcmp.le.f32.partialorder %v3148, 0.7853982
  %vm3150 = vcmp.lt.s32.totalorder %v964, 0
  %v3151 = vand.u32 %v964, 2139095040
  %v3152 = vshrl.u32 %v3151, 23
  %v3153 = vsub.s32 %v3152, 127
  %v3154 = vand.u32 2147483647, %v964
  %v3155 = vand.u32 %v3154, 8388607
  %v3156 = vor.u32 %v3155, 8388608
  %v3157 = vsub.s32 0, %v3156
  %v3158 = vadd.s32 %v3153, 1
  %vm3159 = vcmp.gt.s32.totalorder %v3158, 0
  %v3160 = vsel %vm3159, %v3158, 0
  %v3161 = vshrl.u32 %v3160, 5
  %v3162 = vand.u32 %v3160, 31
  %v3163 = vsub.s32 32, %v3162
  %v3164 = vshrl.u32 683565275, %v3163
  %v3165 = vshll.u32 683565275, %v3162
  %v3166 = vshrl.u32 2475754826, %v3163
  %v3167 = vor.u32 %v3165, %v3166
  %v3168 = vshll.u32 2475754826, %v3162
  %v3169 = vshrl.u32 2131351028, %v3163
  %v3170 = vor.u32 %v3168, %v3169
  %v3171 = vshll.u32 2131351028, %v3162
  %v3172 = vshrl.u32 2102212464, %v3163
  %v3173 = vor.u32 %v3171, %v3172
  %v3174 = vshll.u32 2102212464, %v3162
  %v3175 = vshrl.u32 920167782, %v3163
  %v3176 = vor.u32 %v3174, %v3175
  %v3177 = vshll.u32 920167782, %v3162
  %v3178 = vshrl.u32 1326507024, %v3163
  %v3179 = vor.u32 %v3177, %v3178
  %vm3180 = vcmp.lt.s32.totalorder %v3161, 1
  %vm3181 = vcmp.lt.s32.totalorder %v3161, 2
  %vm3182 = vcmp.lt.s32.totalorder %v3161, 3
  %vm3183 = vcmp.lt.s32.totalorder %v3161, 4
  %v3184 = vsel %vm3180, %v3164, %v3167
  %v3185 = vsel %vm3183, %v3173, 2102212464
  %v3186 = vsel %vm3182, %v3170, %v3185
  %v3187 = vsel %vm3181, %v3184, %v3186
  %v3188 = vsel %vm3180, %v3167, %v3170
  %v3189 = vsel %vm3183, %v3176, 920167782
  %v3190 = vsel %vm3182, %v3173, %v3189
  %v3191 = vsel %vm3181, %v3188, %v3190
  %v3192 = vsel %vm3180, %v3170, %v3173
  %v3193 = vsel %vm3183, %v3179, 1326507024
  %v3194 = vsel %vm3182, %v3176, %v3193
  %v3195 = vsel %vm3181, %v3192, %v3194
  %v3196 = vshll.u32 %v3156, 8
  %v3197 = vand.u32 %v3196, 65535
  %v3198 = vshrl.u32 %v3196, 16
  %v3199 = vand.u32 %v3195, 65535
  %v3200 = vshrl.u32 %v3195, 16
  %v3201 = vmul.u32 %v3197, %v3199
  %v3202 = vmul.u32 %v3197, %v3200
  %v3203 = vmul.u32 %v3198, %v3199
  %v3204 = vmul.u32 %v3198, %v3200
  %v3205 = vshll.u32 %v3202, 16
  %v3206 = vshrl.u32 %v3202, 16
  %v3207 = vshll.u32 %v3203, 16
  %v3208 = vshrl.u32 %v3203, 16
  %vm3209 = vc.u32 %v3201, %v3205
  %v3210 = vsel %vm3209, 1, 0
  %v3211 = vadd.s32 %v3201, %v3205
  %v3212 = vadd.s32 %v3204, %v3210
  %vm3213 = vc.u32 %v3211, %v3207
  %v3214 = vsel %vm3213, 1, 0
  %v3215 = vadd.s32 %v3211, %v3207
  %v3216 = vadd.s32 %v3212, %v3214
  %v3217 = vadd.s32 %v3216, %v3206
  %v3218 = vadd.s32 %v3217, %v3208
  %v3219 = vand.u32 %v3196, 65535
  %v3220 = vshrl.u32 %v3196, 16
  %v3221 = vand.u32 %v3191, 65535
  %v3222 = vshrl.u32 %v3191, 16
  %v3223 = vmul.u32 %v3219, %v3221
  %v3224 = vmul.u32 %v3219, %v3222
  %v3225 = vmul.u32 %v3220, %v3221
  %v3226 = vmul.u32 %v3220, %v3222
  %v3227 = vshll.u32 %v3224, 16
  %v3228 = vshrl.u32 %v3224, 16
  %v3229 = vshll.u32 %v3225, 16
  %v3230 = vshrl.u32 %v3225, 16
  %vm3231 = vc.u32 %v3223, %v3227
  %v3232 = vsel %vm3231, 1, 0
  %v3233 = vadd.s32 %v3223, %v3227
  %v3234 = vadd.s32 %v3226, %v3232
  %vm3235 = vc.u32 %v3233, %v3229
  %v3236 = vsel %vm3235, 1, 0
  %v3237 = vadd.s32 %v3233, %v3229
  %v3238 = vadd.s32 %v3234, %v3236
  %v3239 = vadd.s32 %v3238, %v3228
  %v3240 = vadd.s32 %v3239, %v3230
  %v3241 = vmul.u32 %v3196, %v3187
  %v3242 = vadd.s32 %v3218, %v3237
  %vm3243 = vc.u32 %v3218, %v3237
  %v3244 = vadd.s32 %v3240, 1
  %v3245 = vsel %vm3243, %v3244, %v3240
  %v3246 = vadd.s32 %v3241, %v3245
  %v3247 = vadd.s32 %v3246, 536870912
  %v3248 = vshrl.u32 %v3247, 30
  %v3249 = vshll.u32 %v3248, 30
  %v3250 = vsub.s32 %v3246, %v3249
  %vm3251 = vcmp.lt.s32.totalorder %v3250, 0
  %v3252 = vsub.s32 0, %v3250
  %v3253 = vsel %vm3251, %v3252, %v3250
  %v3254 = vclz %v3253
  %v3255 = vsub.s32 %v3254, 2
  %vm3256 = vcmp.gt.s32.totalorder 0, %v3255
  %v3257 = vsel %vm3256, 0, %v3255
  %v3258 = vsub.s32 32, %v3257
  %v3259 = vshll.u32 %v3250, %v3257
  %v3260 = vshrl.u32 %v3242, %v3258
  %v3261 = vor.u32 %v3259, %v3260
  %v3262 = vsub.s32 4294967266, %v3257
  %v3263 = vadd.s32 %v3262, 127
  %v3264 = vshll.u32 %v3263, 23
  %v3265 = vor.u32 4788187, %v3264
  %v3266 = vand.u32 2147483647, %v3265
  %v3268 = vcvt.s32.f32 %v3261
  %v3269 = vmul.f32 %v3268, %v3266
  %v3270 = vxor.u32 %v3269, 2147483648
  %v3271 = vsel %vm3150, %v3270, %v3269
  %v3272 = vsub.s32 4, %v3248
  %v3273 = vsel %vm3150, %v3272, %v3248
  %v3274 = vsel %vm3149, %v964, %v3271
  %v3275 = vsel %vm3149, 0, %v3273
  %v3276 = vmul.f32 %v3274, %v3274
  %v3277 = vmul.f32 %v3276, -0.001358992
  %v3278 = vadd.f32 %v3277, 0.041655596
  %v3279 = vmul.f32 %v3276, %v3278
  %v3280 = vadd.f32 %v3279, -0.4999988
  %v3281 = vmul.f32 %v3276, %v3280
  %v3282 = vadd.f32 1.0, %v3281
  %v3283 = vmul.f32 %v3274, %v3274
  %v3284 = vmul.f32 %v3283, -0.00019511016
  %v3285 = vadd.f32 %v3284, 0.008332121
  %v3286 = vmul.f32 %v3283, %v3285
  %v3287 = vadd.f32 %v3286, -0.16666654
  %v3288 = vmul.f32 %v3283, %v3287
  %v3289 = vadd.f32 %v3288, 1.0
  %v3290 = vmul.f32 %v3289, %v3274
  %vm3291 = vweird.f32 %v964
  %v3292 = vadd.s32 %v3275, 3
  %v3293 = vand.u32 %v3292, 3
  %vm3294 = vcmp.lt.s32.totalorder %v3293, 2
  %vm3295 = vcmp.eq.s32.totalorder %v3293, 0
  %v3296 = vxor.u32 %v3290, 2147483648
  %v3297 = vsel %vm3295, %v3282, %v3296
  %vm3298 = vcmp.eq.s32.totalorder %v3293, 2
  %v3299 = vxor.u32 %v3282, 2147483648
  %v3300 = vsel %vm3298, %v3299, %v3290
  %v3301 = vsel %vm3294, %v3297, %v3300
  %v3302 = vsel %vm3291, nan, %v3301
  %v3303 = vand.u32 2147483647, %v965
  %vm3304 = vcmp.le.f32.partialorder %v3303, 0.7853982
  %vm3305 = vcmp.lt.s32.totalorder %v965, 0
  %v3306 = vand.u32 %v965, 2139095040
  %v3307 = vshrl.u32 %v3306, 23
  %v3308 = vsub.s32 %v3307, 127
  %v3309 = vand.u32 2147483647, %v965
  %v3310 = vand.u32 %v3309, 8388607
  %v3311 = vor.u32 %v3310, 8388608
  %v3312 = vsub.s32 0, %v3311
  %v3313 = vadd.s32 %v3308, 1
  %vm3314 = vcmp.gt.s32.totalorder %v3313, 0
  %v3315 = vsel %vm3314, %v3313, 0
  %v3316 = vshrl.u32 %v3315, 5
  %v3317 = vand.u32 %v3315, 31
  %v3318 = vsub.s32 32, %v3317
  %v3319 = vshrl.u32 683565275, %v3318
  %v3320 = vshll.u32 683565275, %v3317
  %v3321 = vshrl.u32 2475754826, %v3318
  %v3322 = vor.u32 %v3320, %v3321
  %v3323 = vshll.u32 2475754826, %v3317
  %v3324 = vshrl.u32 2131351028, %v3318
  %v3325 = vor.u32 %v3323, %v3324
  %v3326 = vshll.u32 2131351028, %v3317
  %v3327 = vshrl.u32 2102212464, %v3318
  %v3328 = vor.u32 %v3326, %v3327
  %v3329 = vshll.u32 2102212464, %v3317
  %v3330 = vshrl.u32 920167782, %v3318
  %v3331 = vor.u32 %v3329, %v3330
  %v3332 = vshll.u32 920167782, %v3317
  %v3333 = vshrl.u32 1326507024, %v3318
  %v3334 = vor.u32 %v3332, %v3333
  %vm3335 = vcmp.lt.s32.totalorder %v3316, 1
  %vm3336 = vcmp.lt.s32.totalorder %v3316, 2
  %vm3337 = vcmp.lt.s32.totalorder %v3316, 3
  %vm3338 = vcmp.lt.s32.totalorder %v3316, 4
  %v3339 = vsel %vm3335, %v3319, %v3322
  %v3340 = vsel %vm3338, %v3328, 2102212464
  %v3341 = vsel %vm3337, %v3325, %v3340
  %v3342 = vsel %vm3336, %v3339, %v3341
  %v3343 = vsel %vm3335, %v3322, %v3325
  %v3344 = vsel %vm3338, %v3331, 920167782
  %v3345 = vsel %vm3337, %v3328, %v3344
  %v3346 = vsel %vm3336, %v3343, %v3345
  %v3347 = vsel %vm3335, %v3325, %v3328
  %v3348 = vsel %vm3338, %v3334, 1326507024
  %v3349 = vsel %vm3337, %v3331, %v3348
  %v3350 = vsel %vm3336, %v3347, %v3349
  %v3351 = vshll.u32 %v3311, 8
  %v3352 = vand.u32 %v3351, 65535
  %v3353 = vshrl.u32 %v3351, 16
  %v3354 = vand.u32 %v3350, 65535
  %v3355 = vshrl.u32 %v3350, 16
  %v3356 = vmul.u32 %v3352, %v3354
  %v3357 = vmul.u32 %v3352, %v3355
  %v3358 = vmul.u32 %v3353, %v3354
  %v3359 = vmul.u32 %v3353, %v3355
  %v3360 = vshll.u32 %v3357, 16
  %v3361 = vshrl.u32 %v3357, 16
  %v3362 = vshll.u32 %v3358, 16
  %v3363 = vshrl.u32 %v3358, 16
  %vm3364 = vc.u32 %v3356, %v3360
  %v3365 = vsel %vm3364, 1, 0
  %v3366 = vadd.s32 %v3356, %v3360
  %v3367 = vadd.s32 %v3359, %v3365
  %vm3368 = vc.u32 %v3366, %v3362
  %v3369 = vsel %vm3368, 1, 0
  %v3370 = vadd.s32 %v3366, %v3362
  %v3371 = vadd.s32 %v3367, %v3369
  %v3372 = vadd.s32 %v3371, %v3361
  %v3373 = vadd.s32 %v3372, %v3363
  %v3374 = vand.u32 %v3351, 65535
  %v3375 = vshrl.u32 %v3351, 16
  %v3376 = vand.u32 %v3346, 65535
  %v3377 = vshrl.u32 %v3346, 16
  %v3378 = vmul.u32 %v3374, %v3376
  %v3379 = vmul.u32 %v3374, %v3377
  %v3380 = vmul.u32 %v3375, %v3376
  %v3381 = vmul.u32 %v3375, %v3377
  %v3382 = vshll.u32 %v3379, 16
  %v3383 = vshrl.u32 %v3379, 16
  %v3384 = vshll.u32 %v3380, 16
  %v3385 = vshrl.u32 %v3380, 16
  %vm3386 = vc.u32 %v3378, %v3382
  %v3387 = vsel %vm3386, 1, 0
  %v3388 = vadd.s32 %v3378, %v3382
  %v3389 = vadd.s32 %v3381, %v3387
  %vm3390 = vc.u32 %v3388, %v3384
  %v3391 = vsel %vm3390, 1, 0
  %v3392 = vadd.s32 %v3388, %v3384
  %v3393 = vadd.s32 %v3389, %v3391
  %v3394 = vadd.s32 %v3393, %v3383
  %v3395 = vadd.s32 %v3394, %v3385
  %v3396 = vmul.u32 %v3351, %v3342
  %v3397 = vadd.s32 %v3373, %v3392
  %vm3398 = vc.u32 %v3373, %v3392
  %v3399 = vadd.s32 %v3395, 1
  %v3400 = vsel %vm3398, %v3399, %v3395
  %v3401 = vadd.s32 %v3396, %v3400
  %v3402 = vadd.s32 %v3401, 536870912
  %v3403 = vshrl.u32 %v3402, 30
  %v3404 = vshll.u32 %v3403, 30
  %v3405 = vsub.s32 %v3401, %v3404
  %vm3406 = vcmp.lt.s32.totalorder %v3405, 0
  %v3407 = vsub.s32 0, %v3405
  %v3408 = vsel %vm3406, %v3407, %v3405
  %v3409 = vclz %v3408
  %v3410 = vsub.s32 %v3409, 2
  %vm3411 = vcmp.gt.s32.totalorder 0, %v3410
  %v3412 = vsel %vm3411, 0, %v3410
  %v3413 = vsub.s32 32, %v3412
  %v3414 = vshll.u32 %v3405, %v3412
  %v3415 = vshrl.u32 %v3397, %v3413
  %v3416 = vor.u32 %v3414, %v3415
  %v3417 = vsub.s32 4294967266, %v3412
  %v3418 = vadd.s32 %v3417, 127
  %v3419 = vshll.u32 %v3418, 23
  %v3420 = vor.u32 4788187, %v3419
  %v3421 = vand.u32 2147483647, %v3420
  %v3423 = vcvt.s32.f32 %v3416
  %v3424 = vmul.f32 %v3423, %v3421
  %v3425 = vxor.u32 %v3424, 2147483648
  %v3426 = vsel %vm3305, %v3425, %v3424
  %v3427 = vsub.s32 4, %v3403
  %v3428 = vsel %vm3305, %v3427, %v3403
  %v3429 = vsel %vm3304, %v965, %v3426
  %v3430 = vsel %vm3304, 0, %v3428
  %v3431 = vmul.f32 %v3429, %v3429
  %v3432 = vmul.f32 %v3431, -0.001358992
  %v3433 = vadd.f32 %v3432, 0.041655596
  %v3434 = vmul.f32 %v3431, %v3433
  %v3435 = vadd.f32 %v3434, -0.4999988
  %v3436 = vmul.f32 %v3431, %v3435
  %v3437 = vadd.f32 1.0, %v3436
  %v3438 = vmul.f32 %v3429, %v3429
  %v3439 = vmul.f32 %v3438, -0.00019511016
  %v3440 = vadd.f32 %v3439, 0.008332121
  %v3441 = vmul.f32 %v3438, %v3440
  %v3442 = vadd.f32 %v3441, -0.16666654
  %v3443 = vmul.f32 %v3438, %v3442
  %v3444 = vadd.f32 %v3443, 1.0
  %v3445 = vmul.f32 %v3444, %v3429
  %vm3446 = vweird.f32 %v965
  %v3447 = vadd.s32 %v3430, 3
  %v3448 = vand.u32 %v3447, 3
  %vm3449 = vcmp.lt.s32.totalorder %v3448, 2
  %vm3450 = vcmp.eq.s32.totalorder %v3448, 0
  %v3451 = vxor.u32 %v3445, 2147483648
  %v3452 = vsel %vm3450, %v3437, %v3451
  %vm3453 = vcmp.eq.s32.totalorder %v3448, 2
  %v3454 = vxor.u32 %v3437, 2147483648
  %v3455 = vsel %vm3453, %v3454, %v3445
  %v3456 = vsel %vm3449, %v3452, %v3455
  %v3457 = vsel %vm3446, nan, %v3456
  %v3458 = vand.u32 2147483647, %v966
  %vm3459 = vcmp.le.f32.partialorder %v3458, 0.7853982
  %vm3460 = vcmp.lt.s32.totalorder %v966, 0
  %v3461 = vand.u32 %v966, 2139095040
  %v3462 = vshrl.u32 %v3461, 23
  %v3463 = vsub.s32 %v3462, 127
  %v3464 = vand.u32 2147483647, %v966
  %v3465 = vand.u32 %v3464, 8388607
  %v3466 = vor.u32 %v3465, 8388608
  %v3467 = vsub.s32 0, %v3466
  %v3468 = vadd.s32 %v3463, 1
  %vm3469 = vcmp.gt.s32.totalorder %v3468, 0
  %v3470 = vsel %vm3469, %v3468, 0
  %v3471 = vshrl.u32 %v3470, 5
  %v3472 = vand.u32 %v3470, 31
  %v3473 = vsub.s32 32, %v3472
  %v3474 = vshrl.u32 683565275, %v3473
  %v3475 = vshll.u32 683565275, %v3472
  %v3476 = vshrl.u32 2475754826, %v3473
  %v3477 = vor.u32 %v3475, %v3476
  %v3478 = vshll.u32 2475754826, %v3472
  %v3479 = vshrl.u32 2131351028, %v3473
  %v3480 = vor.u32 %v3478, %v3479
  %v3481 = vshll.u32 2131351028, %v3472
  %v3482 = vshrl.u32 2102212464, %v3473
  %v3483 = vor.u32 %v3481, %v3482
  %v3484 = vshll.u32 2102212464, %v3472
  %v3485 = vshrl.u32 920167782, %v3473
  %v3486 = vor.u32 %v3484, %v3485
  %v3487 = vshll.u32 920167782, %v3472
  %v3488 = vshrl.u32 1326507024, %v3473
  %v3489 = vor.u32 %v3487, %v3488
  %vm3490 = vcmp.lt.s32.totalorder %v3471, 1
  %vm3491 = vcmp.lt.s32.totalorder %v3471, 2
  %vm3492 = vcmp.lt.s32.totalorder %v3471, 3
  %vm3493 = vcmp.lt.s32.totalorder %v3471, 4
  %v3494 = vsel %vm3490, %v3474, %v3477
  %v3495 = vsel %vm3493, %v3483, 2102212464
  %v3496 = vsel %vm3492, %v3480, %v3495
  %v3497 = vsel %vm3491, %v3494, %v3496
  %v3498 = vsel %vm3490, %v3477, %v3480
  %v3499 = vsel %vm3493, %v3486, 920167782
  %v3500 = vsel %vm3492, %v3483, %v3499
  %v3501 = vsel %vm3491, %v3498, %v3500
  %v3502 = vsel %vm3490, %v3480, %v3483
  %v3503 = vsel %vm3493, %v3489, 1326507024
  %v3504 = vsel %vm3492, %v3486, %v3503
  %v3505 = vsel %vm3491, %v3502, %v3504
  %v3506 = vshll.u32 %v3466, 8
  %v3507 = vand.u32 %v3506, 65535
  %v3508 = vshrl.u32 %v3506, 16
  %v3509 = vand.u32 %v3505, 65535
  %v3510 = vshrl.u32 %v3505, 16
  %v3511 = vmul.u32 %v3507, %v3509
  %v3512 = vmul.u32 %v3507, %v3510
  %v3513 = vmul.u32 %v3508, %v3509
  %v3514 = vmul.u32 %v3508, %v3510
  %v3515 = vshll.u32 %v3512, 16
  %v3516 = vshrl.u32 %v3512, 16
  %v3517 = vshll.u32 %v3513, 16
  %v3518 = vshrl.u32 %v3513, 16
  %vm3519 = vc.u32 %v3511, %v3515
  %v3520 = vsel %vm3519, 1, 0
  %v3521 = vadd.s32 %v3511, %v3515
  %v3522 = vadd.s32 %v3514, %v3520
  %vm3523 = vc.u32 %v3521, %v3517
  %v3524 = vsel %vm3523, 1, 0
  %v3525 = vadd.s32 %v3521, %v3517
  %v3526 = vadd.s32 %v3522, %v3524
  %v3527 = vadd.s32 %v3526, %v3516
  %v3528 = vadd.s32 %v3527, %v3518
  %v3529 = vand.u32 %v3506, 65535
  %v3530 = vshrl.u32 %v3506, 16
  %v3531 = vand.u32 %v3501, 65535
  %v3532 = vshrl.u32 %v3501, 16
  %v3533 = vmul.u32 %v3529, %v3531
  %v3534 = vmul.u32 %v3529, %v3532
  %v3535 = vmul.u32 %v3530, %v3531
  %v3536 = vmul.u32 %v3530, %v3532
  %v3537 = vshll.u32 %v3534, 16
  %v3538 = vshrl.u32 %v3534, 16
  %v3539 = vshll.u32 %v3535, 16
  %v3540 = vshrl.u32 %v3535, 16
  %vm3541 = vc.u32 %v3533, %v3537
  %v3542 = vsel %vm3541, 1, 0
  %v3543 = vadd.s32 %v3533, %v3537
  %v3544 = vadd.s32 %v3536, %v3542
  %vm3545 = vc.u32 %v3543, %v3539
  %v3546 = vsel %vm3545, 1, 0
  %v3547 = vadd.s32 %v3543, %v3539
  %v3548 = vadd.s32 %v3544, %v3546
  %v3549 = vadd.s32 %v3548, %v3538
  %v3550 = vadd.s32 %v3549, %v3540
  %v3551 = vmul.u32 %v3506, %v3497
  %v3552 = vadd.s32 %v3528, %v3547
  %vm3553 = vc.u32 %v3528, %v3547
  %v3554 = vadd.s32 %v3550, 1
  %v3555 = vsel %vm3553, %v3554, %v3550
  %v3556 = vadd.s32 %v3551, %v3555
  %v3557 = vadd.s32 %v3556, 536870912
  %v3558 = vshrl.u32 %v3557, 30
  %v3559 = vshll.u32 %v3558, 30
  %v3560 = vsub.s32 %v3556, %v3559
  %vm3561 = vcmp.lt.s32.totalorder %v3560, 0
  %v3562 = vsub.s32 0, %v3560
  %v3563 = vsel %vm3561, %v3562, %v3560
  %v3564 = vclz %v3563
  %v3565 = vsub.s32 %v3564, 2
  %vm3566 = vcmp.gt.s32.totalorder 0, %v3565
  %v3567 = vsel %vm3566, 0, %v3565
  %v3568 = vsub.s32 32, %v3567
  %v3569 = vshll.u32 %v3560, %v3567
  %v3570 = vshrl.u32 %v3552, %v3568
  %v3571 = vor.u32 %v3569, %v3570
  %v3572 = vsub.s32 4294967266, %v3567
  %v3573 = vadd.s32 %v3572, 127
  %v3574 = vshll.u32 %v3573, 23
  %v3575 = vor.u32 4788187, %v3574
  %v3576 = vand.u32 2147483647, %v3575
  %v3578 = vcvt.s32.f32 %v3571
  %v3579 = vmul.f32 %v3578, %v3576
  %v3580 = vxor.u32 %v3579, 2147483648
  %v3581 = vsel %vm3460, %v3580, %v3579
  %v3582 = vsub.s32 4, %v3558
  %v3583 = vsel %vm3460, %v3582, %v3558
  %v3584 = vsel %vm3459, %v966, %v3581
  %v3585 = vsel %vm3459, 0, %v3583
  %v3586 = vmul.f32 %v3584, %v3584
  %v3587 = vmul.f32 %v3586, -0.001358992
  %v3588 = vadd.f32 %v3587, 0.041655596
  %v3589 = vmul.f32 %v3586, %v3588
  %v3590 = vadd.f32 %v3589, -0.4999988
  %v3591 = vmul.f32 %v3586, %v3590
  %v3592 = vadd.f32 1.0, %v3591
  %v3593 = vmul.f32 %v3584, %v3584
  %v3594 = vmul.f32 %v3593, -0.00019511016
  %v3595 = vadd.f32 %v3594, 0.008332121
  %v3596 = vmul.f32 %v3593, %v3595
  %v3597 = vadd.f32 %v3596, -0.16666654
  %v3598 = vmul.f32 %v3593, %v3597
  %v3599 = vadd.f32 %v3598, 1.0
  %v3600 = vmul.f32 %v3599, %v3584
  %vm3601 = vweird.f32 %v966
  %v3602 = vadd.s32 %v3585, 3
  %v3603 = vand.u32 %v3602, 3
  %vm3604 = vcmp.lt.s32.totalorder %v3603, 2
  %vm3605 = vcmp.eq.s32.totalorder %v3603, 0
  %v3606 = vxor.u32 %v3600, 2147483648
  %v3607 = vsel %vm3605, %v3592, %v3606
  %vm3608 = vcmp.eq.s32.totalorder %v3603, 2
  %v3609 = vxor.u32 %v3592, 2147483648
  %v3610 = vsel %vm3608, %v3609, %v3600
  %v3611 = vsel %vm3604, %v3607, %v3610
  %v3612 = vsel %vm3601, nan, %v3611
  %v3613 = vand.u32 2147483647, %v967
  %vm3614 = vcmp.le.f32.partialorder %v3613, 0.7853982
  %vm3615 = vcmp.lt.s32.totalorder %v967, 0
  %v3616 = vand.u32 %v967, 2139095040
  %v3617 = vshrl.u32 %v3616, 23
  %v3618 = vsub.s32 %v3617, 127
  %v3619 = vand.u32 2147483647, %v967
  %v3620 = vand.u32 %v3619, 8388607
  %v3621 = vor.u32 %v3620, 8388608
  %v3622 = vsub.s32 0, %v3621
  %v3623 = vadd.s32 %v3618, 1
  %vm3624 = vcmp.gt.s32.totalorder %v3623, 0
  %v3625 = vsel %vm3624, %v3623, 0
  %v3626 = vshrl.u32 %v3625, 5
  %v3627 = vand.u32 %v3625, 31
  %v3628 = vsub.s32 32, %v3627
  %v3629 = vshrl.u32 683565275, %v3628
  %v3630 = vshll.u32 683565275, %v3627
  %v3631 = vshrl.u32 2475754826, %v3628
  %v3632 = vor.u32 %v3630, %v3631
  %v3633 = vshll.u32 2475754826, %v3627
  %v3634 = vshrl.u32 2131351028, %v3628
  %v3635 = vor.u32 %v3633, %v3634
  %v3636 = vshll.u32 2131351028, %v3627
  %v3637 = vshrl.u32 2102212464, %v3628
  %v3638 = vor.u32 %v3636, %v3637
  %v3639 = vshll.u32 2102212464, %v3627
  %v3640 = vshrl.u32 920167782, %v3628
  %v3641 = vor.u32 %v3639, %v3640
  %v3642 = vshll.u32 920167782, %v3627
  %v3643 = vshrl.u32 1326507024, %v3628
  %v3644 = vor.u32 %v3642, %v3643
  %vm3645 = vcmp.lt.s32.totalorder %v3626, 1
  %vm3646 = vcmp.lt.s32.totalorder %v3626, 2
  %vm3647 = vcmp.lt.s32.totalorder %v3626, 3
  %vm3648 = vcmp.lt.s32.totalorder %v3626, 4
  %v3649 = vsel %vm3645, %v3629, %v3632
  %v3650 = vsel %vm3648, %v3638, 2102212464
  %v3651 = vsel %vm3647, %v3635, %v3650
  %v3652 = vsel %vm3646, %v3649, %v3651
  %v3653 = vsel %vm3645, %v3632, %v3635
  %v3654 = vsel %vm3648, %v3641, 920167782
  %v3655 = vsel %vm3647, %v3638, %v3654
  %v3656 = vsel %vm3646, %v3653, %v3655
  %v3657 = vsel %vm3645, %v3635, %v3638
  %v3658 = vsel %vm3648, %v3644, 1326507024
  %v3659 = vsel %vm3647, %v3641, %v3658
  %v3660 = vsel %vm3646, %v3657, %v3659
  %v3661 = vshll.u32 %v3621, 8
  %v3662 = vand.u32 %v3661, 65535
  %v3663 = vshrl.u32 %v3661, 16
  %v3664 = vand.u32 %v3660, 65535
  %v3665 = vshrl.u32 %v3660, 16
  %v3666 = vmul.u32 %v3662, %v3664
  %v3667 = vmul.u32 %v3662, %v3665
  %v3668 = vmul.u32 %v3663, %v3664
  %v3669 = vmul.u32 %v3663, %v3665
  %v3670 = vshll.u32 %v3667, 16
  %v3671 = vshrl.u32 %v3667, 16
  %v3672 = vshll.u32 %v3668, 16
  %v3673 = vshrl.u32 %v3668, 16
  %vm3674 = vc.u32 %v3666, %v3670
  %v3675 = vsel %vm3674, 1, 0
  %v3676 = vadd.s32 %v3666, %v3670
  %v3677 = vadd.s32 %v3669, %v3675
  %vm3678 = vc.u32 %v3676, %v3672
  %v3679 = vsel %vm3678, 1, 0
  %v3680 = vadd.s32 %v3676, %v3672
  %v3681 = vadd.s32 %v3677, %v3679
  %v3682 = vadd.s32 %v3681, %v3671
  %v3683 = vadd.s32 %v3682, %v3673
  %v3684 = vand.u32 %v3661, 65535
  %v3685 = vshrl.u32 %v3661, 16
  %v3686 = vand.u32 %v3656, 65535
  %v3687 = vshrl.u32 %v3656, 16
  %v3688 = vmul.u32 %v3684, %v3686
  %v3689 = vmul.u32 %v3684, %v3687
  %v3690 = vmul.u32 %v3685, %v3686
  %v3691 = vmul.u32 %v3685, %v3687
  %v3692 = vshll.u32 %v3689, 16
  %v3693 = vshrl.u32 %v3689, 16
  %v3694 = vshll.u32 %v3690, 16
  %v3695 = vshrl.u32 %v3690, 16
  %vm3696 = vc.u32 %v3688, %v3692
  %v3697 = vsel %vm3696, 1, 0
  %v3698 = vadd.s32 %v3688, %v3692
  %v3699 = vadd.s32 %v3691, %v3697
  %vm3700 = vc.u32 %v3698, %v3694
  %v3701 = vsel %vm3700, 1, 0
  %v3702 = vadd.s32 %v3698, %v3694
  %v3703 = vadd.s32 %v3699, %v3701
  %v3704 = vadd.s32 %v3703, %v3693
  %v3705 = vadd.s32 %v3704, %v3695
  %v3706 = vmul.u32 %v3661, %v3652
  %v3707 = vadd.s32 %v3683, %v3702
  %vm3708 = vc.u32 %v3683, %v3702
  %v3709 = vadd.s32 %v3705, 1
  %v3710 = vsel %vm3708, %v3709, %v3705
  %v3711 = vadd.s32 %v3706, %v3710
  %v3712 = vadd.s32 %v3711, 536870912
  %v3713 = vshrl.u32 %v3712, 30
  %v3714 = vshll.u32 %v3713, 30
  %v3715 = vsub.s32 %v3711, %v3714
  %vm3716 = vcmp.lt.s32.totalorder %v3715, 0
  %v3717 = vsub.s32 0, %v3715
  %v3718 = vsel %vm3716, %v3717, %v3715
  %v3719 = vclz %v3718
  %v3720 = vsub.s32 %v3719, 2
  %vm3721 = vcmp.gt.s32.totalorder 0, %v3720
  %v3722 = vsel %vm3721, 0, %v3720
  %v3723 = vsub.s32 32, %v3722
  %v3724 = vshll.u32 %v3715, %v3722
  %v3725 = vshrl.u32 %v3707, %v3723
  %v3726 = vor.u32 %v3724, %v3725
  %v3727 = vsub.s32 4294967266, %v3722
  %v3728 = vadd.s32 %v3727, 127
  %v3729 = vshll.u32 %v3728, 23
  %v3730 = vor.u32 4788187, %v3729
  %v3731 = vand.u32 2147483647, %v3730
  %v3733 = vcvt.s32.f32 %v3726
  %v3734 = vmul.f32 %v3733, %v3731
  %v3735 = vxor.u32 %v3734, 2147483648
  %v3736 = vsel %vm3615, %v3735, %v3734
  %v3737 = vsub.s32 4, %v3713
  %v3738 = vsel %vm3615, %v3737, %v3713
  %v3739 = vsel %vm3614, %v967, %v3736
  %v3740 = vsel %vm3614, 0, %v3738
  %v3741 = vmul.f32 %v3739, %v3739
  %v3742 = vmul.f32 %v3741, -0.001358992
  %v3743 = vadd.f32 %v3742, 0.041655596
  %v3744 = vmul.f32 %v3741, %v3743
  %v3745 = vadd.f32 %v3744, -0.4999988
  %v3746 = vmul.f32 %v3741, %v3745
  %v3747 = vadd.f32 1.0, %v3746
  %v3748 = vmul.f32 %v3739, %v3739
  %v3749 = vmul.f32 %v3748, -0.00019511016
  %v3750 = vadd.f32 %v3749, 0.008332121
  %v3751 = vmul.f32 %v3748, %v3750
  %v3752 = vadd.f32 %v3751, -0.16666654
  %v3753 = vmul.f32 %v3748, %v3752
  %v3754 = vadd.f32 %v3753, 1.0
  %v3755 = vmul.f32 %v3754, %v3739
  %vm3756 = vweird.f32 %v967
  %v3757 = vadd.s32 %v3740, 3
  %v3758 = vand.u32 %v3757, 3
  %vm3759 = vcmp.lt.s32.totalorder %v3758, 2
  %vm3760 = vcmp.eq.s32.totalorder %v3758, 0
  %v3761 = vxor.u32 %v3755, 2147483648
  %v3762 = vsel %vm3760, %v3747, %v3761
  %vm3763 = vcmp.eq.s32.totalorder %v3758, 2
  %v3764 = vxor.u32 %v3747, 2147483648
  %v3765 = vsel %vm3763, %v3764, %v3755
  %v3766 = vsel %vm3759, %v3762, %v3765
  %v3767 = vsel %vm3756, nan, %v3766
  %v3768 = vand.u32 2147483647, %v968
  %vm3769 = vcmp.le.f32.partialorder %v3768, 0.7853982
  %vm3770 = vcmp.lt.s32.totalorder %v968, 0
  %v3771 = vand.u32 %v968, 2139095040
  %v3772 = vshrl.u32 %v3771, 23
  %v3773 = vsub.s32 %v3772, 127
  %v3774 = vand.u32 2147483647, %v968
  %v3775 = vand.u32 %v3774, 8388607
  %v3776 = vor.u32 %v3775, 8388608
  %v3777 = vsub.s32 0, %v3776
  %v3778 = vadd.s32 %v3773, 1
  %vm3779 = vcmp.gt.s32.totalorder %v3778, 0
  %v3780 = vsel %vm3779, %v3778, 0
  %v3781 = vshrl.u32 %v3780, 5
  %v3782 = vand.u32 %v3780, 31
  %v3783 = vsub.s32 32, %v3782
  %v3784 = vshrl.u32 683565275, %v3783
  %v3785 = vshll.u32 683565275, %v3782
  %v3786 = vshrl.u32 2475754826, %v3783
  %v3787 = vor.u32 %v3785, %v3786
  %v3788 = vshll.u32 2475754826, %v3782
  %v3789 = vshrl.u32 2131351028, %v3783
  %v3790 = vor.u32 %v3788, %v3789
  %v3791 = vshll.u32 2131351028, %v3782
  %v3792 = vshrl.u32 2102212464, %v3783
  %v3793 = vor.u32 %v3791, %v3792
  %v3794 = vshll.u32 2102212464, %v3782
  %v3795 = vshrl.u32 920167782, %v3783
  %v3796 = vor.u32 %v3794, %v3795
  %v3797 = vshll.u32 920167782, %v3782
  %v3798 = vshrl.u32 1326507024, %v3783
  %v3799 = vor.u32 %v3797, %v3798
  %vm3800 = vcmp.lt.s32.totalorder %v3781, 1
  %vm3801 = vcmp.lt.s32.totalorder %v3781, 2
  %vm3802 = vcmp.lt.s32.totalorder %v3781, 3
  %vm3803 = vcmp.lt.s32.totalorder %v3781, 4
  %v3804 = vsel %vm3800, %v3784, %v3787
  %v3805 = vsel %vm3803, %v3793, 2102212464
  %v3806 = vsel %vm3802, %v3790, %v3805
  %v3807 = vsel %vm3801, %v3804, %v3806
  %v3808 = vsel %vm3800, %v3787, %v3790
  %v3809 = vsel %vm3803, %v3796, 920167782
  %v3810 = vsel %vm3802, %v3793, %v3809
  %v3811 = vsel %vm3801, %v3808, %v3810
  %v3812 = vsel %vm3800, %v3790, %v3793
  %v3813 = vsel %vm3803, %v3799, 1326507024
  %v3814 = vsel %vm3802, %v3796, %v3813
  %v3815 = vsel %vm3801, %v3812, %v3814
  %v3816 = vshll.u32 %v3776, 8
  %v3817 = vand.u32 %v3816, 65535
  %v3818 = vshrl.u32 %v3816, 16
  %v3819 = vand.u32 %v3815, 65535
  %v3820 = vshrl.u32 %v3815, 16
  %v3821 = vmul.u32 %v3817, %v3819
  %v3822 = vmul.u32 %v3817, %v3820
  %v3823 = vmul.u32 %v3818, %v3819
  %v3824 = vmul.u32 %v3818, %v3820
  %v3825 = vshll.u32 %v3822, 16
  %v3826 = vshrl.u32 %v3822, 16
  %v3827 = vshll.u32 %v3823, 16
  %v3828 = vshrl.u32 %v3823, 16
  %vm3829 = vc.u32 %v3821, %v3825
  %v3830 = vsel %vm3829, 1, 0
  %v3831 = vadd.s32 %v3821, %v3825
  %v3832 = vadd.s32 %v3824, %v3830
  %vm3833 = vc.u32 %v3831, %v3827
  %v3834 = vsel %vm3833, 1, 0
  %v3835 = vadd.s32 %v3831, %v3827
  %v3836 = vadd.s32 %v3832, %v3834
  %v3837 = vadd.s32 %v3836, %v3826
  %v3838 = vadd.s32 %v3837, %v3828
  %v3839 = vand.u32 %v3816, 65535
  %v3840 = vshrl.u32 %v3816, 16
  %v3841 = vand.u32 %v3811, 65535
  %v3842 = vshrl.u32 %v3811, 16
  %v3843 = vmul.u32 %v3839, %v3841
  %v3844 = vmul.u32 %v3839, %v3842
  %v3845 = vmul.u32 %v3840, %v3841
  %v3846 = vmul.u32 %v3840, %v3842
  %v3847 = vshll.u32 %v3844, 16
  %v3848 = vshrl.u32 %v3844, 16
  %v3849 = vshll.u32 %v3845, 16
  %v3850 = vshrl.u32 %v3845, 16
  %vm3851 = vc.u32 %v3843, %v3847
  %v3852 = vsel %vm3851, 1, 0
  %v3853 = vadd.s32 %v3843, %v3847
  %v3854 = vadd.s32 %v3846, %v3852
  %vm3855 = vc.u32 %v3853, %v3849
  %v3856 = vsel %vm3855, 1, 0
  %v3857 = vadd.s32 %v3853, %v3849
  %v3858 = vadd.s32 %v3854, %v3856
  %v3859 = vadd.s32 %v3858, %v3848
  %v3860 = vadd.s32 %v3859, %v3850
  %v3861 = vmul.u32 %v3816, %v3807
  %v3862 = vadd.s32 %v3838, %v3857
  %vm3863 = vc.u32 %v3838, %v3857
  %v3864 = vadd.s32 %v3860, 1
  %v3865 = vsel %vm3863, %v3864, %v3860
  %v3866 = vadd.s32 %v3861, %v3865
  %v3867 = vadd.s32 %v3866, 536870912
  %v3868 = vshrl.u32 %v3867, 30
  %v3869 = vshll.u32 %v3868, 30
  %v3870 = vsub.s32 %v3866, %v3869
  %vm3871 = vcmp.lt.s32.totalorder %v3870, 0
  %v3872 = vsub.s32 0, %v3870
  %v3873 = vsel %vm3871, %v3872, %v3870
  %v3874 = vclz %v3873
  %v3875 = vsub.s32 %v3874, 2
  %vm3876 = vcmp.gt.s32.totalorder 0, %v3875
  %v3877 = vsel %vm3876, 0, %v3875
  %v3878 = vsub.s32 32, %v3877
  %v3879 = vshll.u32 %v3870, %v3877
  %v3880 = vshrl.u32 %v3862, %v3878
  %v3881 = vor.u32 %v3879, %v3880
  %v3882 = vsub.s32 4294967266, %v3877
  %v3883 = vadd.s32 %v3882, 127
  %v3884 = vshll.u32 %v3883, 23
  %v3885 = vor.u32 4788187, %v3884
  %v3886 = vand.u32 2147483647, %v3885
  %v3888 = vcvt.s32.f32 %v3881
  %v3889 = vmul.f32 %v3888, %v3886
  %v3890 = vxor.u32 %v3889, 2147483648
  %v3891 = vsel %vm3770, %v3890, %v3889
  %v3892 = vsub.s32 4, %v3868
  %v3893 = vsel %vm3770, %v3892, %v3868
  %v3894 = vsel %vm3769, %v968, %v3891
  %v3895 = vsel %vm3769, 0, %v3893
  %v3896 = vmul.f32 %v3894, %v3894
  %v3897 = vmul.f32 %v3896, -0.001358992
  %v3898 = vadd.f32 %v3897, 0.041655596
  %v3899 = vmul.f32 %v3896, %v3898
  %v3900 = vadd.f32 %v3899, -0.4999988
  %v3901 = vmul.f32 %v3896, %v3900
  %v3902 = vadd.f32 1.0, %v3901
  %v3903 = vmul.f32 %v3894, %v3894
  %v3904 = vmul.f32 %v3903, -0.00019511016
  %v3905 = vadd.f32 %v3904, 0.008332121
  %v3906 = vmul.f32 %v3903, %v3905
  %v3907 = vadd.f32 %v3906, -0.16666654
  %v3908 = vmul.f32 %v3903, %v3907
  %v3909 = vadd.f32 %v3908, 1.0
  %v3910 = vmul.f32 %v3909, %v3894
  %vm3911 = vweird.f32 %v968
  %v3912 = vadd.s32 %v3895, 3
  %v3913 = vand.u32 %v3912, 3
  %vm3914 = vcmp.lt.s32.totalorder %v3913, 2
  %vm3915 = vcmp.eq.s32.totalorder %v3913, 0
  %v3916 = vxor.u32 %v3910, 2147483648
  %v3917 = vsel %vm3915, %v3902, %v3916
  %vm3918 = vcmp.eq.s32.totalorder %v3913, 2
  %v3919 = vxor.u32 %v3902, 2147483648
  %v3920 = vsel %vm3918, %v3919, %v3910
  %v3921 = vsel %vm3914, %v3917, %v3920
  %v3922 = vsel %vm3911, nan, %v3921
  %v3923 = vand.u32 2147483647, %v969
  %vm3924 = vcmp.le.f32.partialorder %v3923, 0.7853982
  %vm3925 = vcmp.lt.s32.totalorder %v969, 0
  %v3926 = vand.u32 %v969, 2139095040
  %v3927 = vshrl.u32 %v3926, 23
  %v3928 = vsub.s32 %v3927, 127
  %v3929 = vand.u32 2147483647, %v969
  %v3930 = vand.u32 %v3929, 8388607
  %v3931 = vor.u32 %v3930, 8388608
  %v3932 = vsub.s32 0, %v3931
  %v3933 = vadd.s32 %v3928, 1
  %vm3934 = vcmp.gt.s32.totalorder %v3933, 0
  %v3935 = vsel %vm3934, %v3933, 0
  %v3936 = vshrl.u32 %v3935, 5
  %v3937 = vand.u32 %v3935, 31
  %v3938 = vsub.s32 32, %v3937
  %v3939 = vshrl.u32 683565275, %v3938
  %v3940 = vshll.u32 683565275, %v3937
  %v3941 = vshrl.u32 2475754826, %v3938
  %v3942 = vor.u32 %v3940, %v3941
  %v3943 = vshll.u32 2475754826, %v3937
  %v3944 = vshrl.u32 2131351028, %v3938
  %v3945 = vor.u32 %v3943, %v3944
  %v3946 = vshll.u32 2131351028, %v3937
  %v3947 = vshrl.u32 2102212464, %v3938
  %v3948 = vor.u32 %v3946, %v3947
  %v3949 = vshll.u32 2102212464, %v3937
  %v3950 = vshrl.u32 920167782, %v3938
  %v3951 = vor.u32 %v3949, %v3950
  %v3952 = vshll.u32 920167782, %v3937
  %v3953 = vshrl.u32 1326507024, %v3938
  %v3954 = vor.u32 %v3952, %v3953
  %vm3955 = vcmp.lt.s32.totalorder %v3936, 1
  %vm3956 = vcmp.lt.s32.totalorder %v3936, 2
  %vm3957 = vcmp.lt.s32.totalorder %v3936, 3
  %vm3958 = vcmp.lt.s32.totalorder %v3936, 4
  %v3959 = vsel %vm3955, %v3939, %v3942
  %v3960 = vsel %vm3958, %v3948, 2102212464
  %v3961 = vsel %vm3957, %v3945, %v3960
  %v3962 = vsel %vm3956, %v3959, %v3961
  %v3963 = vsel %vm3955, %v3942, %v3945
  %v3964 = vsel %vm3958, %v3951, 920167782
  %v3965 = vsel %vm3957, %v3948, %v3964
  %v3966 = vsel %vm3956, %v3963, %v3965
  %v3967 = vsel %vm3955, %v3945, %v3948
  %v3968 = vsel %vm3958, %v3954, 1326507024
  %v3969 = vsel %vm3957, %v3951, %v3968
  %v3970 = vsel %vm3956, %v3967, %v3969
  %v3971 = vshll.u32 %v3931, 8
  %v3972 = vand.u32 %v3971, 65535
  %v3973 = vshrl.u32 %v3971, 16
  %v3974 = vand.u32 %v3970, 65535
  %v3975 = vshrl.u32 %v3970, 16
  %v3976 = vmul.u32 %v3972, %v3974
  %v3977 = vmul.u32 %v3972, %v3975
  %v3978 = vmul.u32 %v3973, %v3974
  %v3979 = vmul.u32 %v3973, %v3975
  %v3980 = vshll.u32 %v3977, 16
  %v3981 = vshrl.u32 %v3977, 16
  %v3982 = vshll.u32 %v3978, 16
  %v3983 = vshrl.u32 %v3978, 16
  %vm3984 = vc.u32 %v3976, %v3980
  %v3985 = vsel %vm3984, 1, 0
  %v3986 = vadd.s32 %v3976, %v3980
  %v3987 = vadd.s32 %v3979, %v3985
  %vm3988 = vc.u32 %v3986, %v3982
  %v3989 = vsel %vm3988, 1, 0
  %v3990 = vadd.s32 %v3986, %v3982
  %v3991 = vadd.s32 %v3987, %v3989
  %v3992 = vadd.s32 %v3991, %v3981
  %v3993 = vadd.s32 %v3992, %v3983
  %v3994 = vand.u32 %v3971, 65535
  %v3995 = vshrl.u32 %v3971, 16
  %v3996 = vand.u32 %v3966, 65535
  %v3997 = vshrl.u32 %v3966, 16
  %v3998 = vmul.u32 %v3994, %v3996
  %v3999 = vmul.u32 %v3994, %v3997
  %v4000 = vmul.u32 %v3995, %v3996
  %v4001 = vmul.u32 %v3995, %v3997
  %v4002 = vshll.u32 %v3999, 16
  %v4003 = vshrl.u32 %v3999, 16
  %v4004 = vshll.u32 %v4000, 16
  %v4005 = vshrl.u32 %v4000, 16
  %vm4006 = vc.u32 %v3998, %v4002
  %v4007 = vsel %vm4006, 1, 0
  %v4008 = vadd.s32 %v3998, %v4002
  %v4009 = vadd.s32 %v4001, %v4007
  %vm4010 = vc.u32 %v4008, %v4004
  %v4011 = vsel %vm4010, 1, 0
  %v4012 = vadd.s32 %v4008, %v4004
  %v4013 = vadd.s32 %v4009, %v4011
  %v4014 = vadd.s32 %v4013, %v4003
  %v4015 = vadd.s32 %v4014, %v4005
  %v4016 = vmul.u32 %v3971, %v3962
  %v4017 = vadd.s32 %v3993, %v4012
  %vm4018 = vc.u32 %v3993, %v4012
  %v4019 = vadd.s32 %v4015, 1
  %v4020 = vsel %vm4018, %v4019, %v4015
  %v4021 = vadd.s32 %v4016, %v4020
  %v4022 = vadd.s32 %v4021, 536870912
  %v4023 = vshrl.u32 %v4022, 30
  %v4024 = vshll.u32 %v4023, 30
  %v4025 = vsub.s32 %v4021, %v4024
  %vm4026 = vcmp.lt.s32.totalorder %v4025, 0
  %v4027 = vsub.s32 0, %v4025
  %v4028 = vsel %vm4026, %v4027, %v4025
  %v4029 = vclz %v4028
  %v4030 = vsub.s32 %v4029, 2
  %vm4031 = vcmp.gt.s32.totalorder 0, %v4030
  %v4032 = vsel %vm4031, 0, %v4030
  %v4033 = vsub.s32 32, %v4032
  %v4034 = vshll.u32 %v4025, %v4032
  %v4035 = vshrl.u32 %v4017, %v4033
  %v4036 = vor.u32 %v4034, %v4035
  %v4037 = vsub.s32 4294967266, %v4032
  %v4038 = vadd.s32 %v4037, 127
  %v4039 = vshll.u32 %v4038, 23
  %v4040 = vor.u32 4788187, %v4039
  %v4041 = vand.u32 2147483647, %v4040
  %v4043 = vcvt.s32.f32 %v4036
  %v4044 = vmul.f32 %v4043, %v4041
  %v4045 = vxor.u32 %v4044, 2147483648
  %v4046 = vsel %vm3925, %v4045, %v4044
  %v4047 = vsub.s32 4, %v4023
  %v4048 = vsel %vm3925, %v4047, %v4023
  %v4049 = vsel %vm3924, %v969, %v4046
  %v4050 = vsel %vm3924, 0, %v4048
  %v4051 = vmul.f32 %v4049, %v4049
  %v4052 = vmul.f32 %v4051, -0.001358992
  %v4053 = vadd.f32 %v4052, 0.041655596
  %v4054 = vmul.f32 %v4051, %v4053
  %v4055 = vadd.f32 %v4054, -0.4999988
  %v4056 = vmul.f32 %v4051, %v4055
  %v4057 = vadd.f32 1.0, %v4056
  %v4058 = vmul.f32 %v4049, %v4049
  %v4059 = vmul.f32 %v4058, -0.00019511016
  %v4060 = vadd.f32 %v4059, 0.008332121
  %v4061 = vmul.f32 %v4058, %v4060
  %v4062 = vadd.f32 %v4061, -0.16666654
  %v4063 = vmul.f32 %v4058, %v4062
  %v4064 = vadd.f32 %v4063, 1.0
  %v4065 = vmul.f32 %v4064, %v4049
  %vm4066 = vweird.f32 %v969
  %v4067 = vadd.s32 %v4050, 3
  %v4068 = vand.u32 %v4067, 3
  %vm4069 = vcmp.lt.s32.totalorder %v4068, 2
  %vm4070 = vcmp.eq.s32.totalorder %v4068, 0
  %v4071 = vxor.u32 %v4065, 2147483648
  %v4072 = vsel %vm4070, %v4057, %v4071
  %vm4073 = vcmp.eq.s32.totalorder %v4068, 2
  %v4074 = vxor.u32 %v4057, 2147483648
  %v4075 = vsel %vm4073, %v4074, %v4065
  %v4076 = vsel %vm4069, %v4072, %v4075
  %v4077 = vsel %vm4066, nan, %v4076
  %v4078 = vand.u32 2147483647, %v970
  %vm4079 = vcmp.le.f32.partialorder %v4078, 0.7853982
  %vm4080 = vcmp.lt.s32.totalorder %v970, 0
  %v4081 = vand.u32 %v970, 2139095040
  %v4082 = vshrl.u32 %v4081, 23
  %v4083 = vsub.s32 %v4082, 127
  %v4084 = vand.u32 2147483647, %v970
  %v4085 = vand.u32 %v4084, 8388607
  %v4086 = vor.u32 %v4085, 8388608
  %v4087 = vsub.s32 0, %v4086
  %v4088 = vadd.s32 %v4083, 1
  %vm4089 = vcmp.gt.s32.totalorder %v4088, 0
  %v4090 = vsel %vm4089, %v4088, 0
  %v4091 = vshrl.u32 %v4090, 5
  %v4092 = vand.u32 %v4090, 31
  %v4093 = vsub.s32 32, %v4092
  %v4094 = vshrl.u32 683565275, %v4093
  %v4095 = vshll.u32 683565275, %v4092
  %v4096 = vshrl.u32 2475754826, %v4093
  %v4097 = vor.u32 %v4095, %v4096
  %v4098 = vshll.u32 2475754826, %v4092
  %v4099 = vshrl.u32 2131351028, %v4093
  %v4100 = vor.u32 %v4098, %v4099
  %v4101 = vshll.u32 2131351028, %v4092
  %v4102 = vshrl.u32 2102212464, %v4093
  %v4103 = vor.u32 %v4101, %v4102
  %v4104 = vshll.u32 2102212464, %v4092
  %v4105 = vshrl.u32 920167782, %v4093
  %v4106 = vor.u32 %v4104, %v4105
  %v4107 = vshll.u32 920167782, %v4092
  %v4108 = vshrl.u32 1326507024, %v4093
  %v4109 = vor.u32 %v4107, %v4108
  %vm4110 = vcmp.lt.s32.totalorder %v4091, 1
  %vm4111 = vcmp.lt.s32.totalorder %v4091, 2
  %vm4112 = vcmp.lt.s32.totalorder %v4091, 3
  %vm4113 = vcmp.lt.s32.totalorder %v4091, 4
  %v4114 = vsel %vm4110, %v4094, %v4097
  %v4115 = vsel %vm4113, %v4103, 2102212464
  %v4116 = vsel %vm4112, %v4100, %v4115
  %v4117 = vsel %vm4111, %v4114, %v4116
  %v4118 = vsel %vm4110, %v4097, %v4100
  %v4119 = vsel %vm4113, %v4106, 920167782
  %v4120 = vsel %vm4112, %v4103, %v4119
  %v4121 = vsel %vm4111, %v4118, %v4120
  %v4122 = vsel %vm4110, %v4100, %v4103
  %v4123 = vsel %vm4113, %v4109, 1326507024
  %v4124 = vsel %vm4112, %v4106, %v4123
  %v4125 = vsel %vm4111, %v4122, %v4124
  %v4126 = vshll.u32 %v4086, 8
  %v4127 = vand.u32 %v4126, 65535
  %v4128 = vshrl.u32 %v4126, 16
  %v4129 = vand.u32 %v4125, 65535
  %v4130 = vshrl.u32 %v4125, 16
  %v4131 = vmul.u32 %v4127, %v4129
  %v4132 = vmul.u32 %v4127, %v4130
  %v4133 = vmul.u32 %v4128, %v4129
  %v4134 = vmul.u32 %v4128, %v4130
  %v4135 = vshll.u32 %v4132, 16
  %v4136 = vshrl.u32 %v4132, 16
  %v4137 = vshll.u32 %v4133, 16
  %v4138 = vshrl.u32 %v4133, 16
  %vm4139 = vc.u32 %v4131, %v4135
  %v4140 = vsel %vm4139, 1, 0
  %v4141 = vadd.s32 %v4131, %v4135
  %v4142 = vadd.s32 %v4134, %v4140
  %vm4143 = vc.u32 %v4141, %v4137
  %v4144 = vsel %vm4143, 1, 0
  %v4145 = vadd.s32 %v4141, %v4137
  %v4146 = vadd.s32 %v4142, %v4144
  %v4147 = vadd.s32 %v4146, %v4136
  %v4148 = vadd.s32 %v4147, %v4138
  %v4149 = vand.u32 %v4126, 65535
  %v4150 = vshrl.u32 %v4126, 16
  %v4151 = vand.u32 %v4121, 65535
  %v4152 = vshrl.u32 %v4121, 16
  %v4153 = vmul.u32 %v4149, %v4151
  %v4154 = vmul.u32 %v4149, %v4152
  %v4155 = vmul.u32 %v4150, %v4151
  %v4156 = vmul.u32 %v4150, %v4152
  %v4157 = vshll.u32 %v4154, 16
  %v4158 = vshrl.u32 %v4154, 16
  %v4159 = vshll.u32 %v4155, 16
  %v4160 = vshrl.u32 %v4155, 16
  %vm4161 = vc.u32 %v4153, %v4157
  %v4162 = vsel %vm4161, 1, 0
  %v4163 = vadd.s32 %v4153, %v4157
  %v4164 = vadd.s32 %v4156, %v4162
  %vm4165 = vc.u32 %v4163, %v4159
  %v4166 = vsel %vm4165, 1, 0
  %v4167 = vadd.s32 %v4163, %v4159
  %v4168 = vadd.s32 %v4164, %v4166
  %v4169 = vadd.s32 %v4168, %v4158
  %v4170 = vadd.s32 %v4169, %v4160
  %v4171 = vmul.u32 %v4126, %v4117
  %v4172 = vadd.s32 %v4148, %v4167
  %vm4173 = vc.u32 %v4148, %v4167
  %v4174 = vadd.s32 %v4170, 1
  %v4175 = vsel %vm4173, %v4174, %v4170
  %v4176 = vadd.s32 %v4171, %v4175
  %v4177 = vadd.s32 %v4176, 536870912
  %v4178 = vshrl.u32 %v4177, 30
  %v4179 = vshll.u32 %v4178, 30
  %v4180 = vsub.s32 %v4176, %v4179
  %vm4181 = vcmp.lt.s32.totalorder %v4180, 0
  %v4182 = vsub.s32 0, %v4180
  %v4183 = vsel %vm4181, %v4182, %v4180
  %v4184 = vclz %v4183
  %v4185 = vsub.s32 %v4184, 2
  %vm4186 = vcmp.gt.s32.totalorder 0, %v4185
  %v4187 = vsel %vm4186, 0, %v4185
  %v4188 = vsub.s32 32, %v4187
  %v4189 = vshll.u32 %v4180, %v4187
  %v4190 = vshrl.u32 %v4172, %v4188
  %v4191 = vor.u32 %v4189, %v4190
  %v4192 = vsub.s32 4294967266, %v4187
  %v4193 = vadd.s32 %v4192, 127
  %v4194 = vshll.u32 %v4193, 23
  %v4195 = vor.u32 4788187, %v4194
  %v4196 = vand.u32 2147483647, %v4195
  %v4198 = vcvt.s32.f32 %v4191
  %v4199 = vmul.f32 %v4198, %v4196
  %v4200 = vxor.u32 %v4199, 2147483648
  %v4201 = vsel %vm4080, %v4200, %v4199
  %v4202 = vsub.s32 4, %v4178
  %v4203 = vsel %vm4080, %v4202, %v4178
  %v4204 = vsel %vm4079, %v970, %v4201
  %v4205 = vsel %vm4079, 0, %v4203
  %v4206 = vmul.f32 %v4204, %v4204
  %v4207 = vmul.f32 %v4206, -0.001358992
  %v4208 = vadd.f32 %v4207, 0.041655596
  %v4209 = vmul.f32 %v4206, %v4208
  %v4210 = vadd.f32 %v4209, -0.4999988
  %v4211 = vmul.f32 %v4206, %v4210
  %v4212 = vadd.f32 1.0, %v4211
  %v4213 = vmul.f32 %v4204, %v4204
  %v4214 = vmul.f32 %v4213, -0.00019511016
  %v4215 = vadd.f32 %v4214, 0.008332121
  %v4216 = vmul.f32 %v4213, %v4215
  %v4217 = vadd.f32 %v4216, -0.16666654
  %v4218 = vmul.f32 %v4213, %v4217
  %v4219 = vadd.f32 %v4218, 1.0
  %v4220 = vmul.f32 %v4219, %v4204
  %vm4221 = vweird.f32 %v970
  %v4222 = vadd.s32 %v4205, 3
  %v4223 = vand.u32 %v4222, 3
  %vm4224 = vcmp.lt.s32.totalorder %v4223, 2
  %vm4225 = vcmp.eq.s32.totalorder %v4223, 0
  %v4226 = vxor.u32 %v4220, 2147483648
  %v4227 = vsel %vm4225, %v4212, %v4226
  %vm4228 = vcmp.eq.s32.totalorder %v4223, 2
  %v4229 = vxor.u32 %v4212, 2147483648
  %v4230 = vsel %vm4228, %v4229, %v4220
  %v4231 = vsel %vm4224, %v4227, %v4230
  %v4232 = vsel %vm4221, nan, %v4231
  %v4233 = vand.u32 2147483647, %v971
  %vm4234 = vcmp.le.f32.partialorder %v4233, 0.7853982
  %vm4235 = vcmp.lt.s32.totalorder %v971, 0
  %v4236 = vand.u32 %v971, 2139095040
  %v4237 = vshrl.u32 %v4236, 23
  %v4238 = vsub.s32 %v4237, 127
  %v4239 = vand.u32 2147483647, %v971
  %v4240 = vand.u32 %v4239, 8388607
  %v4241 = vor.u32 %v4240, 8388608
  %v4242 = vsub.s32 0, %v4241
  %v4243 = vadd.s32 %v4238, 1
  %vm4244 = vcmp.gt.s32.totalorder %v4243, 0
  %v4245 = vsel %vm4244, %v4243, 0
  %v4246 = vshrl.u32 %v4245, 5
  %v4247 = vand.u32 %v4245, 31
  %v4248 = vsub.s32 32, %v4247
  %v4249 = vshrl.u32 683565275, %v4248
  %v4250 = vshll.u32 683565275, %v4247
  %v4251 = vshrl.u32 2475754826, %v4248
  %v4252 = vor.u32 %v4250, %v4251
  %v4253 = vshll.u32 2475754826, %v4247
  %v4254 = vshrl.u32 2131351028, %v4248
  %v4255 = vor.u32 %v4253, %v4254
  %v4256 = vshll.u32 2131351028, %v4247
  %v4257 = vshrl.u32 2102212464, %v4248
  %v4258 = vor.u32 %v4256, %v4257
  %v4259 = vshll.u32 2102212464, %v4247
  %v4260 = vshrl.u32 920167782, %v4248
  %v4261 = vor.u32 %v4259, %v4260
  %v4262 = vshll.u32 920167782, %v4247
  %v4263 = vshrl.u32 1326507024, %v4248
  %v4264 = vor.u32 %v4262, %v4263
  %vm4265 = vcmp.lt.s32.totalorder %v4246, 1
  %vm4266 = vcmp.lt.s32.totalorder %v4246, 2
  %vm4267 = vcmp.lt.s32.totalorder %v4246, 3
  %vm4268 = vcmp.lt.s32.totalorder %v4246, 4
  %v4269 = vsel %vm4265, %v4249, %v4252
  %v4270 = vsel %vm4268, %v4258, 2102212464
  %v4271 = vsel %vm4267, %v4255, %v4270
  %v4272 = vsel %vm4266, %v4269, %v4271
  %v4273 = vsel %vm4265, %v4252, %v4255
  %v4274 = vsel %vm4268, %v4261, 920167782
  %v4275 = vsel %vm4267, %v4258, %v4274
  %v4276 = vsel %vm4266, %v4273, %v4275
  %v4277 = vsel %vm4265, %v4255, %v4258
  %v4278 = vsel %vm4268, %v4264, 1326507024
  %v4279 = vsel %vm4267, %v4261, %v4278
  %v4280 = vsel %vm4266, %v4277, %v4279
  %v4281 = vshll.u32 %v4241, 8
  %v4282 = vand.u32 %v4281, 65535
  %v4283 = vshrl.u32 %v4281, 16
  %v4284 = vand.u32 %v4280, 65535
  %v4285 = vshrl.u32 %v4280, 16
  %v4286 = vmul.u32 %v4282, %v4284
  %v4287 = vmul.u32 %v4282, %v4285
  %v4288 = vmul.u32 %v4283, %v4284
  %v4289 = vmul.u32 %v4283, %v4285
  %v4290 = vshll.u32 %v4287, 16
  %v4291 = vshrl.u32 %v4287, 16
  %v4292 = vshll.u32 %v4288, 16
  %v4293 = vshrl.u32 %v4288, 16
  %vm4294 = vc.u32 %v4286, %v4290
  %v4295 = vsel %vm4294, 1, 0
  %v4296 = vadd.s32 %v4286, %v4290
  %v4297 = vadd.s32 %v4289, %v4295
  %vm4298 = vc.u32 %v4296, %v4292
  %v4299 = vsel %vm4298, 1, 0
  %v4300 = vadd.s32 %v4296, %v4292
  %v4301 = vadd.s32 %v4297, %v4299
  %v4302 = vadd.s32 %v4301, %v4291
  %v4303 = vadd.s32 %v4302, %v4293
  %v4304 = vand.u32 %v4281, 65535
  %v4305 = vshrl.u32 %v4281, 16
  %v4306 = vand.u32 %v4276, 65535
  %v4307 = vshrl.u32 %v4276, 16
  %v4308 = vmul.u32 %v4304, %v4306
  %v4309 = vmul.u32 %v4304, %v4307
  %v4310 = vmul.u32 %v4305, %v4306
  %v4311 = vmul.u32 %v4305, %v4307
  %v4312 = vshll.u32 %v4309, 16
  %v4313 = vshrl.u32 %v4309, 16
  %v4314 = vshll.u32 %v4310, 16
  %v4315 = vshrl.u32 %v4310, 16
  %vm4316 = vc.u32 %v4308, %v4312
  %v4317 = vsel %vm4316, 1, 0
  %v4318 = vadd.s32 %v4308, %v4312
  %v4319 = vadd.s32 %v4311, %v4317
  %vm4320 = vc.u32 %v4318, %v4314
  %v4321 = vsel %vm4320, 1, 0
  %v4322 = vadd.s32 %v4318, %v4314
  %v4323 = vadd.s32 %v4319, %v4321
  %v4324 = vadd.s32 %v4323, %v4313
  %v4325 = vadd.s32 %v4324, %v4315
  %v4326 = vmul.u32 %v4281, %v4272
  %v4327 = vadd.s32 %v4303, %v4322
  %vm4328 = vc.u32 %v4303, %v4322
  %v4329 = vadd.s32 %v4325, 1
  %v4330 = vsel %vm4328, %v4329, %v4325
  %v4331 = vadd.s32 %v4326, %v4330
  %v4332 = vadd.s32 %v4331, 536870912
  %v4333 = vshrl.u32 %v4332, 30
  %v4334 = vshll.u32 %v4333, 30
  %v4335 = vsub.s32 %v4331, %v4334
  %vm4336 = vcmp.lt.s32.totalorder %v4335, 0
  %v4337 = vsub.s32 0, %v4335
  %v4338 = vsel %vm4336, %v4337, %v4335
  %v4339 = vclz %v4338
  %v4340 = vsub.s32 %v4339, 2
  %vm4341 = vcmp.gt.s32.totalorder 0, %v4340
  %v4342 = vsel %vm4341, 0, %v4340
  %v4343 = vsub.s32 32, %v4342
  %v4344 = vshll.u32 %v4335, %v4342
  %v4345 = vshrl.u32 %v4327, %v4343
  %v4346 = vor.u32 %v4344, %v4345
  %v4347 = vsub.s32 4294967266, %v4342
  %v4348 = vadd.s32 %v4347, 127
  %v4349 = vshll.u32 %v4348, 23
  %v4350 = vor.u32 4788187, %v4349
  %v4351 = vand.u32 2147483647, %v4350
  %v4353 = vcvt.s32.f32 %v4346
  %v4354 = vmul.f32 %v4353, %v4351
  %v4355 = vxor.u32 %v4354, 2147483648
  %v4356 = vsel %vm4235, %v4355, %v4354
  %v4357 = vsub.s32 4, %v4333
  %v4358 = vsel %vm4235, %v4357, %v4333
  %v4359 = vsel %vm4234, %v971, %v4356
  %v4360 = vsel %vm4234, 0, %v4358
  %v4361 = vmul.f32 %v4359, %v4359
  %v4362 = vmul.f32 %v4361, -0.001358992
  %v4363 = vadd.f32 %v4362, 0.041655596
  %v4364 = vmul.f32 %v4361, %v4363
  %v4365 = vadd.f32 %v4364, -0.4999988
  %v4366 = vmul.f32 %v4361, %v4365
  %v4367 = vadd.f32 1.0, %v4366
  %v4368 = vmul.f32 %v4359, %v4359
  %v4369 = vmul.f32 %v4368, -0.00019511016
  %v4370 = vadd.f32 %v4369, 0.008332121
  %v4371 = vmul.f32 %v4368, %v4370
  %v4372 = vadd.f32 %v4371, -0.16666654
  %v4373 = vmul.f32 %v4368, %v4372
  %v4374 = vadd.f32 %v4373, 1.0
  %v4375 = vmul.f32 %v4374, %v4359
  %vm4376 = vweird.f32 %v971
  %v4377 = vadd.s32 %v4360, 3
  %v4378 = vand.u32 %v4377, 3
  %vm4379 = vcmp.lt.s32.totalorder %v4378, 2
  %vm4380 = vcmp.eq.s32.totalorder %v4378, 0
  %v4381 = vxor.u32 %v4375, 2147483648
  %v4382 = vsel %vm4380, %v4367, %v4381
  %vm4383 = vcmp.eq.s32.totalorder %v4378, 2
  %v4384 = vxor.u32 %v4367, 2147483648
  %v4385 = vsel %vm4383, %v4384, %v4375
  %v4386 = vsel %vm4379, %v4382, %v4385
  %v4387 = vsel %vm4376, nan, %v4386
  %v4388 = vand.u32 2147483647, %v972
  %vm4389 = vcmp.le.f32.partialorder %v4388, 0.7853982
  %vm4390 = vcmp.lt.s32.totalorder %v972, 0
  %v4391 = vand.u32 %v972, 2139095040
  %v4392 = vshrl.u32 %v4391, 23
  %v4393 = vsub.s32 %v4392, 127
  %v4394 = vand.u32 2147483647, %v972
  %v4395 = vand.u32 %v4394, 8388607
  %v4396 = vor.u32 %v4395, 8388608
  %v4397 = vsub.s32 0, %v4396
  %v4398 = vadd.s32 %v4393, 1
  %vm4399 = vcmp.gt.s32.totalorder %v4398, 0
  %v4400 = vsel %vm4399, %v4398, 0
  %v4401 = vshrl.u32 %v4400, 5
  %v4402 = vand.u32 %v4400, 31
  %v4403 = vsub.s32 32, %v4402
  %v4404 = vshrl.u32 683565275, %v4403
  %v4405 = vshll.u32 683565275, %v4402
  %v4406 = vshrl.u32 2475754826, %v4403
  %v4407 = vor.u32 %v4405, %v4406
  %v4408 = vshll.u32 2475754826, %v4402
  %v4409 = vshrl.u32 2131351028, %v4403
  %v4410 = vor.u32 %v4408, %v4409
  %v4411 = vshll.u32 2131351028, %v4402
  %v4412 = vshrl.u32 2102212464, %v4403
  %v4413 = vor.u32 %v4411, %v4412
  %v4414 = vshll.u32 2102212464, %v4402
  %v4415 = vshrl.u32 920167782, %v4403
  %v4416 = vor.u32 %v4414, %v4415
  %v4417 = vshll.u32 920167782, %v4402
  %v4418 = vshrl.u32 1326507024, %v4403
  %v4419 = vor.u32 %v4417, %v4418
  %vm4420 = vcmp.lt.s32.totalorder %v4401, 1
  %vm4421 = vcmp.lt.s32.totalorder %v4401, 2
  %vm4422 = vcmp.lt.s32.totalorder %v4401, 3
  %vm4423 = vcmp.lt.s32.totalorder %v4401, 4
  %v4424 = vsel %vm4420, %v4404, %v4407
  %v4425 = vsel %vm4423, %v4413, 2102212464
  %v4426 = vsel %vm4422, %v4410, %v4425
  %v4427 = vsel %vm4421, %v4424, %v4426
  %v4428 = vsel %vm4420, %v4407, %v4410
  %v4429 = vsel %vm4423, %v4416, 920167782
  %v4430 = vsel %vm4422, %v4413, %v4429
  %v4431 = vsel %vm4421, %v4428, %v4430
  %v4432 = vsel %vm4420, %v4410, %v4413
  %v4433 = vsel %vm4423, %v4419, 1326507024
  %v4434 = vsel %vm4422, %v4416, %v4433
  %v4435 = vsel %vm4421, %v4432, %v4434
  %v4436 = vshll.u32 %v4396, 8
  %v4437 = vand.u32 %v4436, 65535
  %v4438 = vshrl.u32 %v4436, 16
  %v4439 = vand.u32 %v4435, 65535
  %v4440 = vshrl.u32 %v4435, 16
  %v4441 = vmul.u32 %v4437, %v4439
  %v4442 = vmul.u32 %v4437, %v4440
  %v4443 = vmul.u32 %v4438, %v4439
  %v4444 = vmul.u32 %v4438, %v4440
  %v4445 = vshll.u32 %v4442, 16
  %v4446 = vshrl.u32 %v4442, 16
  %v4447 = vshll.u32 %v4443, 16
  %v4448 = vshrl.u32 %v4443, 16
  %vm4449 = vc.u32 %v4441, %v4445
  %v4450 = vsel %vm4449, 1, 0
  %v4451 = vadd.s32 %v4441, %v4445
  %v4452 = vadd.s32 %v4444, %v4450
  %vm4453 = vc.u32 %v4451, %v4447
  %v4454 = vsel %vm4453, 1, 0
  %v4455 = vadd.s32 %v4451, %v4447
  %v4456 = vadd.s32 %v4452, %v4454
  %v4457 = vadd.s32 %v4456, %v4446
  %v4458 = vadd.s32 %v4457, %v4448
  %v4459 = vand.u32 %v4436, 65535
  %v4460 = vshrl.u32 %v4436, 16
  %v4461 = vand.u32 %v4431, 65535
  %v4462 = vshrl.u32 %v4431, 16
  %v4463 = vmul.u32 %v4459, %v4461
  %v4464 = vmul.u32 %v4459, %v4462
  %v4465 = vmul.u32 %v4460, %v4461
  %v4466 = vmul.u32 %v4460, %v4462
  %v4467 = vshll.u32 %v4464, 16
  %v4468 = vshrl.u32 %v4464, 16
  %v4469 = vshll.u32 %v4465, 16
  %v4470 = vshrl.u32 %v4465, 16
  %vm4471 = vc.u32 %v4463, %v4467
  %v4472 = vsel %vm4471, 1, 0
  %v4473 = vadd.s32 %v4463, %v4467
  %v4474 = vadd.s32 %v4466, %v4472
  %vm4475 = vc.u32 %v4473, %v4469
  %v4476 = vsel %vm4475, 1, 0
  %v4477 = vadd.s32 %v4473, %v4469
  %v4478 = vadd.s32 %v4474, %v4476
  %v4479 = vadd.s32 %v4478, %v4468
  %v4480 = vadd.s32 %v4479, %v4470
  %v4481 = vmul.u32 %v4436, %v4427
  %v4482 = vadd.s32 %v4458, %v4477
  %vm4483 = vc.u32 %v4458, %v4477
  %v4484 = vadd.s32 %v4480, 1
  %v4485 = vsel %vm4483, %v4484, %v4480
  %v4486 = vadd.s32 %v4481, %v4485
  %v4487 = vadd.s32 %v4486, 536870912
  %v4488 = vshrl.u32 %v4487, 30
  %v4489 = vshll.u32 %v4488, 30
  %v4490 = vsub.s32 %v4486, %v4489
  %vm4491 = vcmp.lt.s32.totalorder %v4490, 0
  %v4492 = vsub.s32 0, %v4490
  %v4493 = vsel %vm4491, %v4492, %v4490
  %v4494 = vclz %v4493
  %v4495 = vsub.s32 %v4494, 2
  %vm4496 = vcmp.gt.s32.totalorder 0, %v4495
  %v4497 = vsel %vm4496, 0, %v4495
  %v4498 = vsub.s32 32, %v4497
  %v4499 = vshll.u32 %v4490, %v4497
  %v4500 = vshrl.u32 %v4482, %v4498
  %v4501 = vor.u32 %v4499, %v4500
  %v4502 = vsub.s32 4294967266, %v4497
  %v4503 = vadd.s32 %v4502, 127
  %v4504 = vshll.u32 %v4503, 23
  %v4505 = vor.u32 4788187, %v4504
  %v4506 = vand.u32 2147483647, %v4505
  %v4508 = vcvt.s32.f32 %v4501
  %v4509 = vmul.f32 %v4508, %v4506
  %v4510 = vxor.u32 %v4509, 2147483648
  %v4511 = vsel %vm4390, %v4510, %v4509
  %v4512 = vsub.s32 4, %v4488
  %v4513 = vsel %vm4390, %v4512, %v4488
  %v4514 = vsel %vm4389, %v972, %v4511
  %v4515 = vsel %vm4389, 0, %v4513
  %v4516 = vmul.f32 %v4514, %v4514
  %v4517 = vmul.f32 %v4516, -0.001358992
  %v4518 = vadd.f32 %v4517, 0.041655596
  %v4519 = vmul.f32 %v4516, %v4518
  %v4520 = vadd.f32 %v4519, -0.4999988
  %v4521 = vmul.f32 %v4516, %v4520
  %v4522 = vadd.f32 1.0, %v4521
  %v4523 = vmul.f32 %v4514, %v4514
  %v4524 = vmul.f32 %v4523, -0.00019511016
  %v4525 = vadd.f32 %v4524, 0.008332121
  %v4526 = vmul.f32 %v4523, %v4525
  %v4527 = vadd.f32 %v4526, -0.16666654
  %v4528 = vmul.f32 %v4523, %v4527
  %v4529 = vadd.f32 %v4528, 1.0
  %v4530 = vmul.f32 %v4529, %v4514
  %vm4531 = vweird.f32 %v972
  %v4532 = vadd.s32 %v4515, 3
  %v4533 = vand.u32 %v4532, 3
  %vm4534 = vcmp.lt.s32.totalorder %v4533, 2
  %vm4535 = vcmp.eq.s32.totalorder %v4533, 0
  %v4536 = vxor.u32 %v4530, 2147483648
  %v4537 = vsel %vm4535, %v4522, %v4536
  %vm4538 = vcmp.eq.s32.totalorder %v4533, 2
  %v4539 = vxor.u32 %v4522, 2147483648
  %v4540 = vsel %vm4538, %v4539, %v4530
  %v4541 = vsel %vm4534, %v4537, %v4540
  %v4542 = vsel %vm4531, nan, %v4541
  %v4543 = vand.u32 2147483647, %v973
  %vm4544 = vcmp.le.f32.partialorder %v4543, 0.7853982
  %vm4545 = vcmp.lt.s32.totalorder %v973, 0
  %v4546 = vand.u32 %v973, 2139095040
  %v4547 = vshrl.u32 %v4546, 23
  %v4548 = vsub.s32 %v4547, 127
  %v4549 = vand.u32 2147483647, %v973
  %v4550 = vand.u32 %v4549, 8388607
  %v4551 = vor.u32 %v4550, 8388608
  %v4552 = vsub.s32 0, %v4551
  %v4553 = vadd.s32 %v4548, 1
  %vm4554 = vcmp.gt.s32.totalorder %v4553, 0
  %v4555 = vsel %vm4554, %v4553, 0
  %v4556 = vshrl.u32 %v4555, 5
  %v4557 = vand.u32 %v4555, 31
  %v4558 = vsub.s32 32, %v4557
  %v4559 = vshrl.u32 683565275, %v4558
  %v4560 = vshll.u32 683565275, %v4557
  %v4561 = vshrl.u32 2475754826, %v4558
  %v4562 = vor.u32 %v4560, %v4561
  %v4563 = vshll.u32 2475754826, %v4557
  %v4564 = vshrl.u32 2131351028, %v4558
  %v4565 = vor.u32 %v4563, %v4564
  %v4566 = vshll.u32 2131351028, %v4557
  %v4567 = vshrl.u32 2102212464, %v4558
  %v4568 = vor.u32 %v4566, %v4567
  %v4569 = vshll.u32 2102212464, %v4557
  %v4570 = vshrl.u32 920167782, %v4558
  %v4571 = vor.u32 %v4569, %v4570
  %v4572 = vshll.u32 920167782, %v4557
  %v4573 = vshrl.u32 1326507024, %v4558
  %v4574 = vor.u32 %v4572, %v4573
  %vm4575 = vcmp.lt.s32.totalorder %v4556, 1
  %vm4576 = vcmp.lt.s32.totalorder %v4556, 2
  %vm4577 = vcmp.lt.s32.totalorder %v4556, 3
  %vm4578 = vcmp.lt.s32.totalorder %v4556, 4
  %v4579 = vsel %vm4575, %v4559, %v4562
  %v4580 = vsel %vm4578, %v4568, 2102212464
  %v4581 = vsel %vm4577, %v4565, %v4580
  %v4582 = vsel %vm4576, %v4579, %v4581
  %v4583 = vsel %vm4575, %v4562, %v4565
  %v4584 = vsel %vm4578, %v4571, 920167782
  %v4585 = vsel %vm4577, %v4568, %v4584
  %v4586 = vsel %vm4576, %v4583, %v4585
  %v4587 = vsel %vm4575, %v4565, %v4568
  %v4588 = vsel %vm4578, %v4574, 1326507024
  %v4589 = vsel %vm4577, %v4571, %v4588
  %v4590 = vsel %vm4576, %v4587, %v4589
  %v4591 = vshll.u32 %v4551, 8
  %v4592 = vand.u32 %v4591, 65535
  %v4593 = vshrl.u32 %v4591, 16
  %v4594 = vand.u32 %v4590, 65535
  %v4595 = vshrl.u32 %v4590, 16
  %v4596 = vmul.u32 %v4592, %v4594
  %v4597 = vmul.u32 %v4592, %v4595
  %v4598 = vmul.u32 %v4593, %v4594
  %v4599 = vmul.u32 %v4593, %v4595
  %v4600 = vshll.u32 %v4597, 16
  %v4601 = vshrl.u32 %v4597, 16
  %v4602 = vshll.u32 %v4598, 16
  %v4603 = vshrl.u32 %v4598, 16
  %vm4604 = vc.u32 %v4596, %v4600
  %v4605 = vsel %vm4604, 1, 0
  %v4606 = vadd.s32 %v4596, %v4600
  %v4607 = vadd.s32 %v4599, %v4605
  %vm4608 = vc.u32 %v4606, %v4602
  %v4609 = vsel %vm4608, 1, 0
  %v4610 = vadd.s32 %v4606, %v4602
  %v4611 = vadd.s32 %v4607, %v4609
  %v4612 = vadd.s32 %v4611, %v4601
  %v4613 = vadd.s32 %v4612, %v4603
  %v4614 = vand.u32 %v4591, 65535
  %v4615 = vshrl.u32 %v4591, 16
  %v4616 = vand.u32 %v4586, 65535
  %v4617 = vshrl.u32 %v4586, 16
  %v4618 = vmul.u32 %v4614, %v4616
  %v4619 = vmul.u32 %v4614, %v4617
  %v4620 = vmul.u32 %v4615, %v4616
  %v4621 = vmul.u32 %v4615, %v4617
  %v4622 = vshll.u32 %v4619, 16
  %v4623 = vshrl.u32 %v4619, 16
  %v4624 = vshll.u32 %v4620, 16
  %v4625 = vshrl.u32 %v4620, 16
  %vm4626 = vc.u32 %v4618, %v4622
  %v4627 = vsel %vm4626, 1, 0
  %v4628 = vadd.s32 %v4618, %v4622
  %v4629 = vadd.s32 %v4621, %v4627
  %vm4630 = vc.u32 %v4628, %v4624
  %v4631 = vsel %vm4630, 1, 0
  %v4632 = vadd.s32 %v4628, %v4624
  %v4633 = vadd.s32 %v4629, %v4631
  %v4634 = vadd.s32 %v4633, %v4623
  %v4635 = vadd.s32 %v4634, %v4625
  %v4636 = vmul.u32 %v4591, %v4582
  %v4637 = vadd.s32 %v4613, %v4632
  %vm4638 = vc.u32 %v4613, %v4632
  %v4639 = vadd.s32 %v4635, 1
  %v4640 = vsel %vm4638, %v4639, %v4635
  %v4641 = vadd.s32 %v4636, %v4640
  %v4642 = vadd.s32 %v4641, 536870912
  %v4643 = vshrl.u32 %v4642, 30
  %v4644 = vshll.u32 %v4643, 30
  %v4645 = vsub.s32 %v4641, %v4644
  %vm4646 = vcmp.lt.s32.totalorder %v4645, 0
  %v4647 = vsub.s32 0, %v4645
  %v4648 = vsel %vm4646, %v4647, %v4645
  %v4649 = vclz %v4648
  %v4650 = vsub.s32 %v4649, 2
  %vm4651 = vcmp.gt.s32.totalorder 0, %v4650
  %v4652 = vsel %vm4651, 0, %v4650
  %v4653 = vsub.s32 32, %v4652
  %v4654 = vshll.u32 %v4645, %v4652
  %v4655 = vshrl.u32 %v4637, %v4653
  %v4656 = vor.u32 %v4654, %v4655
  %v4657 = vsub.s32 4294967266, %v4652
  %v4658 = vadd.s32 %v4657, 127
  %v4659 = vshll.u32 %v4658, 23
  %v4660 = vor.u32 4788187, %v4659
  %v4661 = vand.u32 2147483647, %v4660
  %v4663 = vcvt.s32.f32 %v4656
  %v4664 = vmul.f32 %v4663, %v4661
  %v4665 = vxor.u32 %v4664, 2147483648
  %v4666 = vsel %vm4545, %v4665, %v4664
  %v4667 = vsub.s32 4, %v4643
  %v4668 = vsel %vm4545, %v4667, %v4643
  %v4669 = vsel %vm4544, %v973, %v4666
  %v4670 = vsel %vm4544, 0, %v4668
  %v4671 = vmul.f32 %v4669, %v4669
  %v4672 = vmul.f32 %v4671, -0.001358992
  %v4673 = vadd.f32 %v4672, 0.041655596
  %v4674 = vmul.f32 %v4671, %v4673
  %v4675 = vadd.f32 %v4674, -0.4999988
  %v4676 = vmul.f32 %v4671, %v4675
  %v4677 = vadd.f32 1.0, %v4676
  %v4678 = vmul.f32 %v4669, %v4669
  %v4679 = vmul.f32 %v4678, -0.00019511016
  %v4680 = vadd.f32 %v4679, 0.008332121
  %v4681 = vmul.f32 %v4678, %v4680
  %v4682 = vadd.f32 %v4681, -0.16666654
  %v4683 = vmul.f32 %v4678, %v4682
  %v4684 = vadd.f32 %v4683, 1.0
  %v4685 = vmul.f32 %v4684, %v4669
  %vm4686 = vweird.f32 %v973
  %v4687 = vadd.s32 %v4670, 3
  %v4688 = vand.u32 %v4687, 3
  %vm4689 = vcmp.lt.s32.totalorder %v4688, 2
  %vm4690 = vcmp.eq.s32.totalorder %v4688, 0
  %v4691 = vxor.u32 %v4685, 2147483648
  %v4692 = vsel %vm4690, %v4677, %v4691
  %vm4693 = vcmp.eq.s32.totalorder %v4688, 2
  %v4694 = vxor.u32 %v4677, 2147483648
  %v4695 = vsel %vm4693, %v4694, %v4685
  %v4696 = vsel %vm4689, %v4692, %v4695
  %v4697 = vsel %vm4686, nan, %v4696
  %v4698 = vand.u32 2147483647, %v974
  %vm4699 = vcmp.le.f32.partialorder %v4698, 0.7853982
  %vm4700 = vcmp.lt.s32.totalorder %v974, 0
  %v4701 = vand.u32 %v974, 2139095040
  %v4702 = vshrl.u32 %v4701, 23
  %v4703 = vsub.s32 %v4702, 127
  %v4704 = vand.u32 2147483647, %v974
  %v4705 = vand.u32 %v4704, 8388607
  %v4706 = vor.u32 %v4705, 8388608
  %v4707 = vsub.s32 0, %v4706
  %v4708 = vadd.s32 %v4703, 1
  %vm4709 = vcmp.gt.s32.totalorder %v4708, 0
  %v4710 = vsel %vm4709, %v4708, 0
  %v4711 = vshrl.u32 %v4710, 5
  %v4712 = vand.u32 %v4710, 31
  %v4713 = vsub.s32 32, %v4712
  %v4714 = vshrl.u32 683565275, %v4713
  %v4715 = vshll.u32 683565275, %v4712
  %v4716 = vshrl.u32 2475754826, %v4713
  %v4717 = vor.u32 %v4715, %v4716
  %v4718 = vshll.u32 2475754826, %v4712
  %v4719 = vshrl.u32 2131351028, %v4713
  %v4720 = vor.u32 %v4718, %v4719
  %v4721 = vshll.u32 2131351028, %v4712
  %v4722 = vshrl.u32 2102212464, %v4713
  %v4723 = vor.u32 %v4721, %v4722
  %v4724 = vshll.u32 2102212464, %v4712
  %v4725 = vshrl.u32 920167782, %v4713
  %v4726 = vor.u32 %v4724, %v4725
  %v4727 = vshll.u32 920167782, %v4712
  %v4728 = vshrl.u32 1326507024, %v4713
  %v4729 = vor.u32 %v4727, %v4728
  %vm4730 = vcmp.lt.s32.totalorder %v4711, 1
  %vm4731 = vcmp.lt.s32.totalorder %v4711, 2
  %vm4732 = vcmp.lt.s32.totalorder %v4711, 3
  %vm4733 = vcmp.lt.s32.totalorder %v4711, 4
  %v4734 = vsel %vm4730, %v4714, %v4717
  %v4735 = vsel %vm4733, %v4723, 2102212464
  %v4736 = vsel %vm4732, %v4720, %v4735
  %v4737 = vsel %vm4731, %v4734, %v4736
  %v4738 = vsel %vm4730, %v4717, %v4720
  %v4739 = vsel %vm4733, %v4726, 920167782
  %v4740 = vsel %vm4732, %v4723, %v4739
  %v4741 = vsel %vm4731, %v4738, %v4740
  %v4742 = vsel %vm4730, %v4720, %v4723
  %v4743 = vsel %vm4733, %v4729, 1326507024
  %v4744 = vsel %vm4732, %v4726, %v4743
  %v4745 = vsel %vm4731, %v4742, %v4744
  %v4746 = vshll.u32 %v4706, 8
  %v4747 = vand.u32 %v4746, 65535
  %v4748 = vshrl.u32 %v4746, 16
  %v4749 = vand.u32 %v4745, 65535
  %v4750 = vshrl.u32 %v4745, 16
  %v4751 = vmul.u32 %v4747, %v4749
  %v4752 = vmul.u32 %v4747, %v4750
  %v4753 = vmul.u32 %v4748, %v4749
  %v4754 = vmul.u32 %v4748, %v4750
  %v4755 = vshll.u32 %v4752, 16
  %v4756 = vshrl.u32 %v4752, 16
  %v4757 = vshll.u32 %v4753, 16
  %v4758 = vshrl.u32 %v4753, 16
  %vm4759 = vc.u32 %v4751, %v4755
  %v4760 = vsel %vm4759, 1, 0
  %v4761 = vadd.s32 %v4751, %v4755
  %v4762 = vadd.s32 %v4754, %v4760
  %vm4763 = vc.u32 %v4761, %v4757
  %v4764 = vsel %vm4763, 1, 0
  %v4765 = vadd.s32 %v4761, %v4757
  %v4766 = vadd.s32 %v4762, %v4764
  %v4767 = vadd.s32 %v4766, %v4756
  %v4768 = vadd.s32 %v4767, %v4758
  %v4769 = vand.u32 %v4746, 65535
  %v4770 = vshrl.u32 %v4746, 16
  %v4771 = vand.u32 %v4741, 65535
  %v4772 = vshrl.u32 %v4741, 16
  %v4773 = vmul.u32 %v4769, %v4771
  %v4774 = vmul.u32 %v4769, %v4772
  %v4775 = vmul.u32 %v4770, %v4771
  %v4776 = vmul.u32 %v4770, %v4772
  %v4777 = vshll.u32 %v4774, 16
  %v4778 = vshrl.u32 %v4774, 16
  %v4779 = vshll.u32 %v4775, 16
  %v4780 = vshrl.u32 %v4775, 16
  %vm4781 = vc.u32 %v4773, %v4777
  %v4782 = vsel %vm4781, 1, 0
  %v4783 = vadd.s32 %v4773, %v4777
  %v4784 = vadd.s32 %v4776, %v4782
  %vm4785 = vc.u32 %v4783, %v4779
  %v4786 = vsel %vm4785, 1, 0
  %v4787 = vadd.s32 %v4783, %v4779
  %v4788 = vadd.s32 %v4784, %v4786
  %v4789 = vadd.s32 %v4788, %v4778
  %v4790 = vadd.s32 %v4789, %v4780
  %v4791 = vmul.u32 %v4746, %v4737
  %v4792 = vadd.s32 %v4768, %v4787
  %vm4793 = vc.u32 %v4768, %v4787
  %v4794 = vadd.s32 %v4790, 1
  %v4795 = vsel %vm4793, %v4794, %v4790
  %v4796 = vadd.s32 %v4791, %v4795
  %v4797 = vadd.s32 %v4796, 536870912
  %v4798 = vshrl.u32 %v4797, 30
  %v4799 = vshll.u32 %v4798, 30
  %v4800 = vsub.s32 %v4796, %v4799
  %vm4801 = vcmp.lt.s32.totalorder %v4800, 0
  %v4802 = vsub.s32 0, %v4800
  %v4803 = vsel %vm4801, %v4802, %v4800
  %v4804 = vclz %v4803
  %v4805 = vsub.s32 %v4804, 2
  %vm4806 = vcmp.gt.s32.totalorder 0, %v4805
  %v4807 = vsel %vm4806, 0, %v4805
  %v4808 = vsub.s32 32, %v4807
  %v4809 = vshll.u32 %v4800, %v4807
  %v4810 = vshrl.u32 %v4792, %v4808
  %v4811 = vor.u32 %v4809, %v4810
  %v4812 = vsub.s32 4294967266, %v4807
  %v4813 = vadd.s32 %v4812, 127
  %v4814 = vshll.u32 %v4813, 23
  %v4815 = vor.u32 4788187, %v4814
  %v4816 = vand.u32 2147483647, %v4815
  %v4818 = vcvt.s32.f32 %v4811
  %v4819 = vmul.f32 %v4818, %v4816
  %v4820 = vxor.u32 %v4819, 2147483648
  %v4821 = vsel %vm4700, %v4820, %v4819
  %v4822 = vsub.s32 4, %v4798
  %v4823 = vsel %vm4700, %v4822, %v4798
  %v4824 = vsel %vm4699, %v974, %v4821
  %v4825 = vsel %vm4699, 0, %v4823
  %v4826 = vmul.f32 %v4824, %v4824
  %v4827 = vmul.f32 %v4826, -0.001358992
  %v4828 = vadd.f32 %v4827, 0.041655596
  %v4829 = vmul.f32 %v4826, %v4828
  %v4830 = vadd.f32 %v4829, -0.4999988
  %v4831 = vmul.f32 %v4826, %v4830
  %v4832 = vadd.f32 1.0, %v4831
  %v4833 = vmul.f32 %v4824, %v4824
  %v4834 = vmul.f32 %v4833, -0.00019511016
  %v4835 = vadd.f32 %v4834, 0.008332121
  %v4836 = vmul.f32 %v4833, %v4835
  %v4837 = vadd.f32 %v4836, -0.16666654
  %v4838 = vmul.f32 %v4833, %v4837
  %v4839 = vadd.f32 %v4838, 1.0
  %v4840 = vmul.f32 %v4839, %v4824
  %vm4841 = vweird.f32 %v974
  %v4842 = vadd.s32 %v4825, 3
  %v4843 = vand.u32 %v4842, 3
  %vm4844 = vcmp.lt.s32.totalorder %v4843, 2
  %vm4845 = vcmp.eq.s32.totalorder %v4843, 0
  %v4846 = vxor.u32 %v4840, 2147483648
  %v4847 = vsel %vm4845, %v4832, %v4846
  %vm4848 = vcmp.eq.s32.totalorder %v4843, 2
  %v4849 = vxor.u32 %v4832, 2147483648
  %v4850 = vsel %vm4848, %v4849, %v4840
  %v4851 = vsel %vm4844, %v4847, %v4850
  %v4852 = vsel %vm4841, nan, %v4851
  %v4853 = vsel %vm977, %v950, %v1132
  %v4854 = vsel %vm977, %v951, %v1287
  %v4855 = vsel %vm977, %v952, %v1442
  %v4856 = vsel %vm977, %v953, %v1597
  %v4857 = vsel %vm977, %v954, %v1752
  %v4858 = vsel %vm977, %v955, %v1907
  %v4859 = vsel %vm977, %v956, %v2062
  %v4860 = vsel %vm977, %v957, %v2217
  %v4861 = vsel %vm977, %v958, %v2372
  %v4862 = vsel %vm977, %v959, %v2527
  %v4863 = vsel %vm977, %v960, %v2682
  %v4864 = vsel %vm977, %v961, %v2837
  %v4865 = vsel %vm977, %v962, %v2992
  %v4866 = vsel %vm977, %v963, %v3147
  %v4867 = vsel %vm977, %v964, %v3302
  %v4868 = vsel %vm977, %v965, %v3457
  %v4869 = vsel %vm977, %v966, %v3612
  %v4870 = vsel %vm977, %v967, %v3767
  %v4871 = vsel %vm977, %v968, %v3922
  %v4872 = vsel %vm977, %v969, %v4077
  %v4873 = vsel %vm977, %v970, %v4232
  %v4874 = vsel %vm977, %v971, %v4387
  %v4875 = vsel %vm977, %v972, %v4542
  %v4876 = vsel %vm977, %v973, %v4697
  %v4877 = vsel %vm977, %v974, %v4852
  %v4878 = vpack.c.bf16 %v4854, %v4853
  %v4879 = vpack.c.bf16 %v4856, %v4855
  %v4880 = vpack.c.bf16 %v4858, %v4857
  %v4881 = vpack.c.bf16 %v4860, %v4859
  %v4882 = vpack.c.bf16 %v4862, %v4861
  %v4883 = vpack.c.bf16 %v4864, %v4863
  %v4884 = vpack.c.bf16 %v4866, %v4865
  %v4885 = vpack.c.bf16 %v4868, %v4867
  %v4886 = vpack.c.bf16 %v4870, %v4869
  %v4887 = vpack.c.bf16 %v4872, %v4871
  %v4888 = vpack.c.bf16 %v4874, %v4873
  %v4889 = vpack.c.bf16 %v4876, %v4875
  %v4890 = vpack.c.bf16 %v4877, %v4877
  %v4891 = vld [vmem:[%s1] sm:$0xf]
  %v4892 = vld [vmem:[%s1 + $0x4] sm:$0xf]
  %v4893 = vld [vmem:[%s1 + $0x8] sm:$0xf]
  %v4894 = vld [vmem:[%s1 + $0xc] sm:$0xf]
  %v4895 = vld [vmem:[%s1 + $0x10] sm:$0xf]
  %v4896 = vld [vmem:[%s1 + $0x14] sm:$0xf]
  %v4897 = vld [vmem:[%s1 + $0x18] sm:$0xf]
  %v4898 = vld [vmem:[%s1 + $0x1c] sm:$0xf]
  %v4899 = vld [vmem:[%s1 + $0x20] sm:$0xf]
  %v4900 = vld [vmem:[%s1 + $0x24] sm:$0xf]
  %v4901 = vld [vmem:[%s1 + $0x28] sm:$0xf]
  %v4902 = vld [vmem:[%s1 + $0x2c] sm:$0xf]
  %v4903 = vld [vmem:[%s1 + $0x30] sm:$0xf]
  %v4904 = vld [vmem:[%s1 + $0x34] sm:$0xf]
  %v4905 = vld [vmem:[%s1 + $0x38] sm:$0xf]
  %v4906 = vld [vmem:[%s1 + $0x3c] sm:$0xf]
  %v4907 = vld [vmem:[%s2] sm:$0x1]
  %v4909 = vperm.slane %v4907, 0
  %v4927 = vunpack.c.l.b16 %v4891
  %v4928 = vunpack.c.l.b16 %v4892
  %v4929 = vunpack.c.l.b16 %v4893
  %v4930 = vunpack.c.l.b16 %v4894
  %v4931 = vunpack.c.l.b16 %v4895
  %v4932 = vunpack.c.l.b16 %v4896
  %v4933 = vunpack.c.l.b16 %v4897
  %v4934 = vunpack.c.l.b16 %v4898
  %v4935 = vunpack.c.l.b16 %v4899
  %v4936 = vunpack.c.l.b16 %v4900
  %v4937 = vunpack.c.l.b16 %v4901
  %v4938 = vunpack.c.l.b16 %v4902
  %v4939 = vunpack.c.l.b16 %v4903
  %v4940 = vunpack.c.l.b16 %v4904
  %v4941 = vunpack.c.l.b16 %v4905
  %v4942 = vunpack.c.l.b16 %v4906
  %v4943 = vpack.c.b16 %v4928, %v4927
  %v4944 = vpack.c.b16 %v4930, %v4929
  %v4945 = vpack.c.b16 %v4932, %v4931
  %v4946 = vpack.c.b16 %v4934, %v4933
  %v4947 = vpack.c.b16 %v4936, %v4935
  %v4948 = vpack.c.b16 %v4938, %v4937
  %v4949 = vpack.c.b16 %v4940, %v4939
  %v4950 = vpack.c.b16 %v4942, %v4941
  %4959 = vmatpush.bf16.msra.mxu0 %v4950
  %4960 = vmatpush.bf16.msra.mxu0 %v4949
  %4961 = vmatpush.bf16.msra.mxu0 %v4948
  %4962 = vmatpush.bf16.msra.mxu0 %v4947
  %4963 = vmatpush.bf16.msra.mxu0 %v4946
  %4964 = vmatpush.bf16.msra.mxu0 %v4945
  %4965 = vmatpush.bf16.msra.mxu0 %v4944
  %4966 = vmatpush.bf16.msra.mxu0 %v4943
  %4967 = vmatmul.bf16.gmra.mxu0 %v4878
  %v4968 = vpop.f32.mrf.mxu0
  %v4969 = vadd.f32 %v4909, %v4968
  %v4970 = vpop.f32.mrf.mxu0
  %v4971 = vadd.f32 %v4909, %v4970
  %4972 = vmatmul.bf16.gmra.mxu0 %v4879
  %v4973 = vpop.f32.mrf.mxu0
  %v4974 = vadd.f32 %v4909, %v4973
  %v4975 = vpop.f32.mrf.mxu0
  %v4976 = vadd.f32 %v4909, %v4975
  %4977 = vmatmul.bf16.gmra.mxu0 %v4880
  %v4978 = vpop.f32.mrf.mxu0
  %v4979 = vadd.f32 %v4909, %v4978
  %v4980 = vpop.f32.mrf.mxu0
  %v4981 = vadd.f32 %v4909, %v4980
  %4982 = vmatmul.bf16.gmra.mxu0 %v4881
  %v4983 = vpop.f32.mrf.mxu0
  %v4984 = vadd.f32 %v4909, %v4983
  %v4985 = vpop.f32.mrf.mxu0
  %v4986 = vadd.f32 %v4909, %v4985
  %4987 = vmatmul.bf16.gmra.mxu0 %v4882
  %v4988 = vpop.f32.mrf.mxu0
  %v4989 = vadd.f32 %v4909, %v4988
  %v4990 = vpop.f32.mrf.mxu0
  %v4991 = vadd.f32 %v4909, %v4990
  %4992 = vmatmul.bf16.gmra.mxu0 %v4883
  %v4993 = vpop.f32.mrf.mxu0
  %v4994 = vadd.f32 %v4909, %v4993
  %v4995 = vpop.f32.mrf.mxu0
  %v4996 = vadd.f32 %v4909, %v4995
  %4997 = vmatmul.bf16.gmra.mxu0 %v4884
  %v4998 = vpop.f32.mrf.mxu0
  %v4999 = vadd.f32 %v4909, %v4998
  %v5000 = vpop.f32.mrf.mxu0
  %v5001 = vadd.f32 %v4909, %v5000
  %5002 = vmatmul.bf16.gmra.mxu0 %v4885
  %v5003 = vpop.f32.mrf.mxu0
  %v5004 = vadd.f32 %v4909, %v5003
  %v5005 = vpop.f32.mrf.mxu0
  %v5006 = vadd.f32 %v4909, %v5005
  %5007 = vmatmul.bf16.gmra.mxu0 %v4886
  %v5008 = vpop.f32.mrf.mxu0
  %v5009 = vadd.f32 %v4909, %v5008
  %v5010 = vpop.f32.mrf.mxu0
  %v5011 = vadd.f32 %v4909, %v5010
  %5012 = vmatmul.bf16.gmra.mxu0 %v4887
  %v5013 = vpop.f32.mrf.mxu0
  %v5014 = vadd.f32 %v4909, %v5013
  %v5015 = vpop.f32.mrf.mxu0
  %v5016 = vadd.f32 %v4909, %v5015
  %5017 = vmatmul.bf16.gmra.mxu0 %v4888
  %v5018 = vpop.f32.mrf.mxu0
  %v5019 = vadd.f32 %v4909, %v5018
  %v5020 = vpop.f32.mrf.mxu0
  %v5021 = vadd.f32 %v4909, %v5020
  %5022 = vmatmul.bf16.gmra.mxu0 %v4889
  %v5023 = vpop.f32.mrf.mxu0
  %v5024 = vadd.f32 %v4909, %v5023
  %v5025 = vpop.f32.mrf.mxu0
  %v5026 = vadd.f32 %v4909, %v5025
  %5027 = vmatmul.bf16.gmra.mxu0 %v4890
  %v5028 = vpop.f32.mrf.mxu0
  %v5029 = vadd.f32 %v4909, %v5028
  %v5030 = vpop.f32.mrf.mxu0
  %5031 = vdwg.mxu0
  %v5032 = vmax.f32 %v4969, 0.0
  %v5033 = vmax.f32 %v4971, 0.0
  %v5034 = vmax.f32 %v4974, 0.0
  %v5035 = vmax.f32 %v4976, 0.0
  %v5036 = vmax.f32 %v4979, 0.0
  %v5037 = vmax.f32 %v4981, 0.0
  %v5038 = vmax.f32 %v4984, 0.0
  %v5039 = vmax.f32 %v4986, 0.0
  %v5040 = vmax.f32 %v4989, 0.0
  %v5041 = vmax.f32 %v4991, 0.0
  %v5042 = vmax.f32 %v4994, 0.0
  %v5043 = vmax.f32 %v4996, 0.0
  %v5044 = vmax.f32 %v4999, 0.0
  %v5045 = vmax.f32 %v5001, 0.0
  %v5046 = vmax.f32 %v5004, 0.0
  %v5047 = vmax.f32 %v5006, 0.0
  %v5048 = vmax.f32 %v5009, 0.0
  %v5049 = vmax.f32 %v5011, 0.0
  %v5050 = vmax.f32 %v5014, 0.0
  %v5051 = vmax.f32 %v5016, 0.0
  %v5052 = vmax.f32 %v5019, 0.0
  %v5053 = vmax.f32 %v5021, 0.0
  %v5054 = vmax.f32 %v5024, 0.0
  %v5055 = vmax.f32 %v5026, 0.0
  %v5056 = vmax.f32 %v5029, 0.0
  %v5057 = vpack.c.bf16 %v5033, %v5032
  %v5058 = vpack.c.bf16 %v5035, %v5034
  %v5059 = vpack.c.bf16 %v5037, %v5036
  %v5060 = vpack.c.bf16 %v5039, %v5038
  %v5061 = vpack.c.bf16 %v5041, %v5040
  %v5062 = vpack.c.bf16 %v5043, %v5042
  %v5063 = vpack.c.bf16 %v5045, %v5044
  %v5064 = vpack.c.bf16 %v5047, %v5046
  %v5065 = vpack.c.bf16 %v5049, %v5048
  %v5066 = vpack.c.bf16 %v5051, %v5050
  %v5067 = vpack.c.bf16 %v5053, %v5052
  %v5068 = vpack.c.bf16 %v5055, %v5054
  %v5069 = vpack.c.bf16 %v5056, %v5056
  %s5070 = scalar_lea.vmem %s1, 64
  %v5071 = vld [vmem:[%s5070] sm:$0xf]
  %v5072 = vld [vmem:[%s5070 + $0x4] sm:$0xf]
  %v5073 = vld [vmem:[%s5070 + $0x8] sm:$0xf]
  %v5074 = vld [vmem:[%s5070 + $0xc] sm:$0xf]
  %v5075 = vld [vmem:[%s5070 + $0x10] sm:$0xf]
  %v5076 = vld [vmem:[%s5070 + $0x14] sm:$0xf]
  %v5077 = vld [vmem:[%s5070 + $0x18] sm:$0xf]
  %v5078 = vld [vmem:[%s5070 + $0x1c] sm:$0xf]
  %v5079 = vld [vmem:[%s5070 + $0x20] sm:$0xf]
  %v5080 = vld [vmem:[%s5070 + $0x24] sm:$0xf]
  %v5081 = vld [vmem:[%s5070 + $0x28] sm:$0xf]
  %v5082 = vld [vmem:[%s5070 + $0x2c] sm:$0xf]
  %v5083 = vld [vmem:[%s5070 + $0x30] sm:$0xf]
  %v5084 = vld [vmem:[%s5070 + $0x34] sm:$0xf]
  %v5085 = vld [vmem:[%s5070 + $0x38] sm:$0xf]
  %v5086 = vld [vmem:[%s5070 + $0x3c] sm:$0xf]
  %s5087 = scalar_lea.vmem %s2, 1
  %v5088 = vld [vmem:[%s5087] sm:$0x1]
  %v5090 = vperm.slane %v5088, 0
  %v5108 = vunpack.c.l.b16 %v5071
  %v5109 = vunpack.c.l.b16 %v5072
  %v5110 = vunpack.c.l.b16 %v5073
  %v5111 = vunpack.c.l.b16 %v5074
  %v5112 = vunpack.c.l.b16 %v5075
  %v5113 = vunpack.c.l.b16 %v5076
  %v5114 = vunpack.c.l.b16 %v5077
  %v5115 = vunpack.c.l.b16 %v5078
  %v5116 = vunpack.c.l.b16 %v5079
  %v5117 = vunpack.c.l.b16 %v5080
  %v5118 = vunpack.c.l.b16 %v5081
  %v5119 = vunpack.c.l.b16 %v5082
  %v5120 = vunpack.c.l.b16 %v5083
  %v5121 = vunpack.c.l.b16 %v5084
  %v5122 = vunpack.c.l.b16 %v5085
  %v5123 = vunpack.c.l.b16 %v5086
  %v5124 = vpack.c.b16 %v5109, %v5108
  %v5125 = vpack.c.b16 %v5111, %v5110
  %v5126 = vpack.c.b16 %v5113, %v5112
  %v5127 = vpack.c.b16 %v5115, %v5114
  %v5128 = vpack.c.b16 %v5117, %v5116
  %v5129 = vpack.c.b16 %v5119, %v5118
  %v5130 = vpack.c.b16 %v5121, %v5120
  %v5131 = vpack.c.b16 %v5123, %v5122
  %5140 = vmatpush.bf16.msra.mxu0 %v5131
  %5141 = vmatpush.bf16.msra.mxu0 %v5130
  %5142 = vmatpush.bf16.msra.mxu0 %v5129
  %5143 = vmatpush.bf16.msra.mxu0 %v5128
  %5144 = vmatpush.bf16.msra.mxu0 %v5127
  %5145 = vmatpush.bf16.msra.mxu0 %v5126
  %5146 = vmatpush.bf16.msra.mxu0 %v5125
  %5147 = vmatpush.bf16.msra.mxu0 %v5124
  %5148 = vmatmul.bf16.gmra.mxu0 %v5057
  %v5149 = vpop.f32.mrf.mxu0
  %v5150 = vadd.f32 %v5090, %v5149
  %v5151 = vpop.f32.mrf.mxu0
  %v5152 = vadd.f32 %v5090, %v5151
  %5153 = vmatmul.bf16.gmra.mxu0 %v5058
  %v5154 = vpop.f32.mrf.mxu0
  %v5155 = vadd.f32 %v5090, %v5154
  %v5156 = vpop.f32.mrf.mxu0
  %v5157 = vadd.f32 %v5090, %v5156
  %5158 = vmatmul.bf16.gmra.mxu0 %v5059
  %v5159 = vpop.f32.mrf.mxu0
  %v5160 = vadd.f32 %v5090, %v5159
  %v5161 = vpop.f32.mrf.mxu0
  %v5162 = vadd.f32 %v5090, %v5161
  %5163 = vmatmul.bf16.gmra.mxu0 %v5060
  %v5164 = vpop.f32.mrf.mxu0
  %v5165 = vadd.f32 %v5090, %v5164
  %v5166 = vpop.f32.mrf.mxu0
  %v5167 = vadd.f32 %v5090, %v5166
  %5168 = vmatmul.bf16.gmra.mxu0 %v5061
  %v5169 = vpop.f32.mrf.mxu0
  %v5170 = vadd.f32 %v5090, %v5169
  %v5171 = vpop.f32.mrf.mxu0
  %v5172 = vadd.f32 %v5090, %v5171
  %5173 = vmatmul.bf16.gmra.mxu0 %v5062
  %v5174 = vpop.f32.mrf.mxu0
  %v5175 = vadd.f32 %v5090, %v5174
  %v5176 = vpop.f32.mrf.mxu0
  %v5177 = vadd.f32 %v5090, %v5176
  %5178 = vmatmul.bf16.gmra.mxu0 %v5063
  %v5179 = vpop.f32.mrf.mxu0
  %v5180 = vadd.f32 %v5090, %v5179
  %v5181 = vpop.f32.mrf.mxu0
  %v5182 = vadd.f32 %v5090, %v5181
  %5183 = vmatmul.bf16.gmra.mxu0 %v5064
  %v5184 = vpop.f32.mrf.mxu0
  %v5185 = vadd.f32 %v5090, %v5184
  %v5186 = vpop.f32.mrf.mxu0
  %v5187 = vadd.f32 %v5090, %v5186
  %5188 = vmatmul.bf16.gmra.mxu0 %v5065
  %v5189 = vpop.f32.mrf.mxu0
  %v5190 = vadd.f32 %v5090, %v5189
  %v5191 = vpop.f32.mrf.mxu0
  %v5192 = vadd.f32 %v5090, %v5191
  %5193 = vmatmul.bf16.gmra.mxu0 %v5066
  %v5194 = vpop.f32.mrf.mxu0
  %v5195 = vadd.f32 %v5090, %v5194
  %v5196 = vpop.f32.mrf.mxu0
  %v5197 = vadd.f32 %v5090, %v5196
  %5198 = vmatmul.bf16.gmra.mxu0 %v5067
  %v5199 = vpop.f32.mrf.mxu0
  %v5200 = vadd.f32 %v5090, %v5199
  %v5201 = vpop.f32.mrf.mxu0
  %v5202 = vadd.f32 %v5090, %v5201
  %5203 = vmatmul.bf16.gmra.mxu0 %v5068
  %v5204 = vpop.f32.mrf.mxu0
  %v5205 = vadd.f32 %v5090, %v5204
  %v5206 = vpop.f32.mrf.mxu0
  %v5207 = vadd.f32 %v5090, %v5206
  %5208 = vmatmul.bf16.gmra.mxu0 %v5069
  %v5209 = vpop.f32.mrf.mxu0
  %v5210 = vadd.f32 %v5090, %v5209
  %v5211 = vpop.f32.mrf.mxu0
  %5212 = vdwg.mxu0
  %v5213 = vmax.f32 %v5150, 0.0
  %v5214 = vmax.f32 %v5152, 0.0
  %v5215 = vmax.f32 %v5155, 0.0
  %v5216 = vmax.f32 %v5157, 0.0
  %v5217 = vmax.f32 %v5160, 0.0
  %v5218 = vmax.f32 %v5162, 0.0
  %v5219 = vmax.f32 %v5165, 0.0
  %v5220 = vmax.f32 %v5167, 0.0
  %v5221 = vmax.f32 %v5170, 0.0
  %v5222 = vmax.f32 %v5172, 0.0
  %v5223 = vmax.f32 %v5175, 0.0
  %v5224 = vmax.f32 %v5177, 0.0
  %v5225 = vmax.f32 %v5180, 0.0
  %v5226 = vmax.f32 %v5182, 0.0
  %v5227 = vmax.f32 %v5185, 0.0
  %v5228 = vmax.f32 %v5187, 0.0
  %v5229 = vmax.f32 %v5190, 0.0
  %v5230 = vmax.f32 %v5192, 0.0
  %v5231 = vmax.f32 %v5195, 0.0
  %v5232 = vmax.f32 %v5197, 0.0
  %v5233 = vmax.f32 %v5200, 0.0
  %v5234 = vmax.f32 %v5202, 0.0
  %v5235 = vmax.f32 %v5205, 0.0
  %v5236 = vmax.f32 %v5207, 0.0
  %v5237 = vmax.f32 %v5210, 0.0
  %v5238 = vpack.c.bf16 %v5214, %v5213
  %v5239 = vpack.c.bf16 %v5216, %v5215
  %v5240 = vpack.c.bf16 %v5218, %v5217
  %v5241 = vpack.c.bf16 %v5220, %v5219
  %v5242 = vpack.c.bf16 %v5222, %v5221
  %v5243 = vpack.c.bf16 %v5224, %v5223
  %v5244 = vpack.c.bf16 %v5226, %v5225
  %v5245 = vpack.c.bf16 %v5228, %v5227
  %v5246 = vpack.c.bf16 %v5230, %v5229
  %v5247 = vpack.c.bf16 %v5232, %v5231
  %v5248 = vpack.c.bf16 %v5234, %v5233
  %v5249 = vpack.c.bf16 %v5236, %v5235
  %v5250 = vpack.c.bf16 %v5237, %v5237
  %s5251 = scalar_lea.vmem %s1, 128
  %v5252 = vld [vmem:[%s5251] sm:$0xf]
  %v5253 = vld [vmem:[%s5251 + $0x4] sm:$0xf]
  %v5254 = vld [vmem:[%s5251 + $0x8] sm:$0xf]
  %v5255 = vld [vmem:[%s5251 + $0xc] sm:$0xf]
  %v5256 = vld [vmem:[%s5251 + $0x10] sm:$0xf]
  %v5257 = vld [vmem:[%s5251 + $0x14] sm:$0xf]
  %v5258 = vld [vmem:[%s5251 + $0x18] sm:$0xf]
  %v5259 = vld [vmem:[%s5251 + $0x1c] sm:$0xf]
  %v5260 = vld [vmem:[%s5251 + $0x20] sm:$0xf]
  %v5261 = vld [vmem:[%s5251 + $0x24] sm:$0xf]
  %v5262 = vld [vmem:[%s5251 + $0x28] sm:$0xf]
  %v5263 = vld [vmem:[%s5251 + $0x2c] sm:$0xf]
  %v5264 = vld [vmem:[%s5251 + $0x30] sm:$0xf]
  %v5265 = vld [vmem:[%s5251 + $0x34] sm:$0xf]
  %v5266 = vld [vmem:[%s5251 + $0x38] sm:$0xf]
  %v5267 = vld [vmem:[%s5251 + $0x3c] sm:$0xf]
  %s5268 = scalar_lea.vmem %s2, 2
  %v5269 = vld [vmem:[%s5268] sm:$0x1]
  %v5271 = vperm.slane %v5269, 0
  %v5289 = vunpack.c.l.b16 %v5252
  %v5290 = vunpack.c.l.b16 %v5253
  %v5291 = vunpack.c.l.b16 %v5254
  %v5292 = vunpack.c.l.b16 %v5255
  %v5293 = vunpack.c.l.b16 %v5256
  %v5294 = vunpack.c.l.b16 %v5257
  %v5295 = vunpack.c.l.b16 %v5258
  %v5296 = vunpack.c.l.b16 %v5259
  %v5297 = vunpack.c.l.b16 %v5260
  %v5298 = vunpack.c.l.b16 %v5261
  %v5299 = vunpack.c.l.b16 %v5262
  %v5300 = vunpack.c.l.b16 %v5263
  %v5301 = vunpack.c.l.b16 %v5264
  %v5302 = vunpack.c.l.b16 %v5265
  %v5303 = vunpack.c.l.b16 %v5266
  %v5304 = vunpack.c.l.b16 %v5267
  %v5305 = vpack.c.b16 %v5290, %v5289
  %v5306 = vpack.c.b16 %v5292, %v5291
  %v5307 = vpack.c.b16 %v5294, %v5293
  %v5308 = vpack.c.b16 %v5296, %v5295
  %v5309 = vpack.c.b16 %v5298, %v5297
  %v5310 = vpack.c.b16 %v5300, %v5299
  %v5311 = vpack.c.b16 %v5302, %v5301
  %v5312 = vpack.c.b16 %v5304, %v5303
  %5321 = vmatpush.bf16.msra.mxu0 %v5312
  %5322 = vmatpush.bf16.msra.mxu0 %v5311
  %5323 = vmatpush.bf16.msra.mxu0 %v5310
  %5324 = vmatpush.bf16.msra.mxu0 %v5309
  %5325 = vmatpush.bf16.msra.mxu0 %v5308
  %5326 = vmatpush.bf16.msra.mxu0 %v5307
  %5327 = vmatpush.bf16.msra.mxu0 %v5306
  %5328 = vmatpush.bf16.msra.mxu0 %v5305
  %5329 = vmatmul.bf16.gmra.mxu0 %v5238
  %v5330 = vpop.f32.mrf.mxu0
  %v5331 = vadd.f32 %v5271, %v5330
  %v5332 = vpop.f32.mrf.mxu0
  %v5333 = vadd.f32 %v5271, %v5332
  %5334 = vmatmul.bf16.gmra.mxu0 %v5239
  %v5335 = vpop.f32.mrf.mxu0
  %v5336 = vadd.f32 %v5271, %v5335
  %v5337 = vpop.f32.mrf.mxu0
  %v5338 = vadd.f32 %v5271, %v5337
  %5339 = vmatmul.bf16.gmra.mxu0 %v5240
  %v5340 = vpop.f32.mrf.mxu0
  %v5341 = vadd.f32 %v5271, %v5340
  %v5342 = vpop.f32.mrf.mxu0
  %v5343 = vadd.f32 %v5271, %v5342
  %5344 = vmatmul.bf16.gmra.mxu0 %v5241
  %v5345 = vpop.f32.mrf.mxu0
  %v5346 = vadd.f32 %v5271, %v5345
  %v5347 = vpop.f32.mrf.mxu0
  %v5348 = vadd.f32 %v5271, %v5347
  %5349 = vmatmul.bf16.gmra.mxu0 %v5242
  %v5350 = vpop.f32.mrf.mxu0
  %v5351 = vadd.f32 %v5271, %v5350
  %v5352 = vpop.f32.mrf.mxu0
  %v5353 = vadd.f32 %v5271, %v5352
  %5354 = vmatmul.bf16.gmra.mxu0 %v5243
  %v5355 = vpop.f32.mrf.mxu0
  %v5356 = vadd.f32 %v5271, %v5355
  %v5357 = vpop.f32.mrf.mxu0
  %v5358 = vadd.f32 %v5271, %v5357
  %5359 = vmatmul.bf16.gmra.mxu0 %v5244
  %v5360 = vpop.f32.mrf.mxu0
  %v5361 = vadd.f32 %v5271, %v5360
  %v5362 = vpop.f32.mrf.mxu0
  %v5363 = vadd.f32 %v5271, %v5362
  %5364 = vmatmul.bf16.gmra.mxu0 %v5245
  %v5365 = vpop.f32.mrf.mxu0
  %v5366 = vadd.f32 %v5271, %v5365
  %v5367 = vpop.f32.mrf.mxu0
  %v5368 = vadd.f32 %v5271, %v5367
  %5369 = vmatmul.bf16.gmra.mxu0 %v5246
  %v5370 = vpop.f32.mrf.mxu0
  %v5371 = vadd.f32 %v5271, %v5370
  %v5372 = vpop.f32.mrf.mxu0
  %v5373 = vadd.f32 %v5271, %v5372
  %5374 = vmatmul.bf16.gmra.mxu0 %v5247
  %v5375 = vpop.f32.mrf.mxu0
  %v5376 = vadd.f32 %v5271, %v5375
  %v5377 = vpop.f32.mrf.mxu0
  %v5378 = vadd.f32 %v5271, %v5377
  %5379 = vmatmul.bf16.gmra.mxu0 %v5248
  %v5380 = vpop.f32.mrf.mxu0
  %v5381 = vadd.f32 %v5271, %v5380
  %v5382 = vpop.f32.mrf.mxu0
  %v5383 = vadd.f32 %v5271, %v5382
  %5384 = vmatmul.bf16.gmra.mxu0 %v5249
  %v5385 = vpop.f32.mrf.mxu0
  %v5386 = vadd.f32 %v5271, %v5385
  %v5387 = vpop.f32.mrf.mxu0
  %v5388 = vadd.f32 %v5271, %v5387
  %5389 = vmatmul.bf16.gmra.mxu0 %v5250
  %v5390 = vpop.f32.mrf.mxu0
  %v5391 = vadd.f32 %v5271, %v5390
  %v5392 = vpop.f32.mrf.mxu0
  %5393 = vdwg.mxu0
  %v5394 = vmax.f32 %v5331, 0.0
  %v5395 = vmax.f32 %v5333, 0.0
  %v5396 = vmax.f32 %v5336, 0.0
  %v5397 = vmax.f32 %v5338, 0.0
  %v5398 = vmax.f32 %v5341, 0.0
  %v5399 = vmax.f32 %v5343, 0.0
  %v5400 = vmax.f32 %v5346, 0.0
  %v5401 = vmax.f32 %v5348, 0.0
  %v5402 = vmax.f32 %v5351, 0.0
  %v5403 = vmax.f32 %v5353, 0.0
  %v5404 = vmax.f32 %v5356, 0.0
  %v5405 = vmax.f32 %v5358, 0.0
  %v5406 = vmax.f32 %v5361, 0.0
  %v5407 = vmax.f32 %v5363, 0.0
  %v5408 = vmax.f32 %v5366, 0.0
  %v5409 = vmax.f32 %v5368, 0.0
  %v5410 = vmax.f32 %v5371, 0.0
  %v5411 = vmax.f32 %v5373, 0.0
  %v5412 = vmax.f32 %v5376, 0.0
  %v5413 = vmax.f32 %v5378, 0.0
  %v5414 = vmax.f32 %v5381, 0.0
  %v5415 = vmax.f32 %v5383, 0.0
  %v5416 = vmax.f32 %v5386, 0.0
  %v5417 = vmax.f32 %v5388, 0.0
  %v5418 = vmax.f32 %v5391, 0.0
  %v5419 = vpack.c.bf16 %v5395, %v5394
  %v5420 = vpack.c.bf16 %v5397, %v5396
  %v5421 = vpack.c.bf16 %v5399, %v5398
  %v5422 = vpack.c.bf16 %v5401, %v5400
  %v5423 = vpack.c.bf16 %v5403, %v5402
  %v5424 = vpack.c.bf16 %v5405, %v5404
  %v5425 = vpack.c.bf16 %v5407, %v5406
  %v5426 = vpack.c.bf16 %v5409, %v5408
  %v5427 = vpack.c.bf16 %v5411, %v5410
  %v5428 = vpack.c.bf16 %v5413, %v5412
  %v5429 = vpack.c.bf16 %v5415, %v5414
  %v5430 = vpack.c.bf16 %v5417, %v5416
  %v5431 = vpack.c.bf16 %v5418, %v5418
  %s5432 = scalar_lea.vmem %s1, 192
  %v5433 = vld [vmem:[%s5432] sm:$0xf]
  %v5434 = vld [vmem:[%s5432 + $0x4] sm:$0xf]
  %v5435 = vld [vmem:[%s5432 + $0x8] sm:$0xf]
  %v5436 = vld [vmem:[%s5432 + $0xc] sm:$0xf]
  %v5437 = vld [vmem:[%s5432 + $0x10] sm:$0xf]
  %v5438 = vld [vmem:[%s5432 + $0x14] sm:$0xf]
  %v5439 = vld [vmem:[%s5432 + $0x18] sm:$0xf]
  %v5440 = vld [vmem:[%s5432 + $0x1c] sm:$0xf]
  %v5441 = vld [vmem:[%s5432 + $0x20] sm:$0xf]
  %v5442 = vld [vmem:[%s5432 + $0x24] sm:$0xf]
  %v5443 = vld [vmem:[%s5432 + $0x28] sm:$0xf]
  %v5444 = vld [vmem:[%s5432 + $0x2c] sm:$0xf]
  %v5445 = vld [vmem:[%s5432 + $0x30] sm:$0xf]
  %v5446 = vld [vmem:[%s5432 + $0x34] sm:$0xf]
  %v5447 = vld [vmem:[%s5432 + $0x38] sm:$0xf]
  %v5448 = vld [vmem:[%s5432 + $0x3c] sm:$0xf]
  %s5449 = scalar_lea.vmem %s2, 3
  %v5450 = vld [vmem:[%s5449] sm:$0x1]
  %v5452 = vperm.slane %v5450, 0
  %v5470 = vunpack.c.l.b16 %v5433
  %v5471 = vunpack.c.l.b16 %v5434
  %v5472 = vunpack.c.l.b16 %v5435
  %v5473 = vunpack.c.l.b16 %v5436
  %v5474 = vunpack.c.l.b16 %v5437
  %v5475 = vunpack.c.l.b16 %v5438
  %v5476 = vunpack.c.l.b16 %v5439
  %v5477 = vunpack.c.l.b16 %v5440
  %v5478 = vunpack.c.l.b16 %v5441
  %v5479 = vunpack.c.l.b16 %v5442
  %v5480 = vunpack.c.l.b16 %v5443
  %v5481 = vunpack.c.l.b16 %v5444
  %v5482 = vunpack.c.l.b16 %v5445
  %v5483 = vunpack.c.l.b16 %v5446
  %v5484 = vunpack.c.l.b16 %v5447
  %v5485 = vunpack.c.l.b16 %v5448
  %v5486 = vpack.c.b16 %v5471, %v5470
  %v5487 = vpack.c.b16 %v5473, %v5472
  %v5488 = vpack.c.b16 %v5475, %v5474
  %v5489 = vpack.c.b16 %v5477, %v5476
  %v5490 = vpack.c.b16 %v5479, %v5478
  %v5491 = vpack.c.b16 %v5481, %v5480
  %v5492 = vpack.c.b16 %v5483, %v5482
  %v5493 = vpack.c.b16 %v5485, %v5484
  %5502 = vmatpush.bf16.msra.mxu0 %v5493
  %5503 = vmatpush.bf16.msra.mxu0 %v5492
  %5504 = vmatpush.bf16.msra.mxu0 %v5491
  %5505 = vmatpush.bf16.msra.mxu0 %v5490
  %5506 = vmatpush.bf16.msra.mxu0 %v5489
  %5507 = vmatpush.bf16.msra.mxu0 %v5488
  %5508 = vmatpush.bf16.msra.mxu0 %v5487
  %5509 = vmatpush.bf16.msra.mxu0 %v5486
  %5510 = vmatmul.bf16.gmra.mxu0 %v5419
  %v5511 = vpop.f32.mrf.mxu0
  %v5512 = vadd.f32 %v5452, %v5511
  %v5513 = vpop.f32.mrf.mxu0
  %v5514 = vadd.f32 %v5452, %v5513
  %5515 = vmatmul.bf16.gmra.mxu0 %v5420
  %v5516 = vpop.f32.mrf.mxu0
  %v5517 = vadd.f32 %v5452, %v5516
  %v5518 = vpop.f32.mrf.mxu0
  %v5519 = vadd.f32 %v5452, %v5518
  %5520 = vmatmul.bf16.gmra.mxu0 %v5421
  %v5521 = vpop.f32.mrf.mxu0
  %v5522 = vadd.f32 %v5452, %v5521
  %v5523 = vpop.f32.mrf.mxu0
  %v5524 = vadd.f32 %v5452, %v5523
  %5525 = vmatmul.bf16.gmra.mxu0 %v5422
  %v5526 = vpop.f32.mrf.mxu0
  %v5527 = vadd.f32 %v5452, %v5526
  %v5528 = vpop.f32.mrf.mxu0
  %v5529 = vadd.f32 %v5452, %v5528
  %5530 = vmatmul.bf16.gmra.mxu0 %v5423
  %v5531 = vpop.f32.mrf.mxu0
  %v5532 = vadd.f32 %v5452, %v5531
  %v5533 = vpop.f32.mrf.mxu0
  %v5534 = vadd.f32 %v5452, %v5533
  %5535 = vmatmul.bf16.gmra.mxu0 %v5424
  %v5536 = vpop.f32.mrf.mxu0
  %v5537 = vadd.f32 %v5452, %v5536
  %v5538 = vpop.f32.mrf.mxu0
  %v5539 = vadd.f32 %v5452, %v5538
  %5540 = vmatmul.bf16.gmra.mxu0 %v5425
  %v5541 = vpop.f32.mrf.mxu0
  %v5542 = vadd.f32 %v5452, %v5541
  %v5543 = vpop.f32.mrf.mxu0
  %v5544 = vadd.f32 %v5452, %v5543
  %5545 = vmatmul.bf16.gmra.mxu0 %v5426
  %v5546 = vpop.f32.mrf.mxu0
  %v5547 = vadd.f32 %v5452, %v5546
  %v5548 = vpop.f32.mrf.mxu0
  %v5549 = vadd.f32 %v5452, %v5548
  %5550 = vmatmul.bf16.gmra.mxu0 %v5427
  %v5551 = vpop.f32.mrf.mxu0
  %v5552 = vadd.f32 %v5452, %v5551
  %v5553 = vpop.f32.mrf.mxu0
  %v5554 = vadd.f32 %v5452, %v5553
  %5555 = vmatmul.bf16.gmra.mxu0 %v5428
  %v5556 = vpop.f32.mrf.mxu0
  %v5557 = vadd.f32 %v5452, %v5556
  %v5558 = vpop.f32.mrf.mxu0
  %v5559 = vadd.f32 %v5452, %v5558
  %5560 = vmatmul.bf16.gmra.mxu0 %v5429
  %v5561 = vpop.f32.mrf.mxu0
  %v5562 = vadd.f32 %v5452, %v5561
  %v5563 = vpop.f32.mrf.mxu0
  %v5564 = vadd.f32 %v5452, %v5563
  %5565 = vmatmul.bf16.gmra.mxu0 %v5430
  %v5566 = vpop.f32.mrf.mxu0
  %v5567 = vadd.f32 %v5452, %v5566
  %v5568 = vpop.f32.mrf.mxu0
  %v5569 = vadd.f32 %v5452, %v5568
  %5570 = vmatmul.bf16.gmra.mxu0 %v5431
  %v5571 = vpop.f32.mrf.mxu0
  %v5572 = vadd.f32 %v5452, %v5571
  %v5573 = vpop.f32.mrf.mxu0
  %5574 = vdwg.mxu0
  %v5575 = vmax.f32 %v5512, 0.0
  %v5576 = vmax.f32 %v5514, 0.0
  %v5577 = vmax.f32 %v5517, 0.0
  %v5578 = vmax.f32 %v5519, 0.0
  %v5579 = vmax.f32 %v5522, 0.0
  %v5580 = vmax.f32 %v5524, 0.0
  %v5581 = vmax.f32 %v5527, 0.0
  %v5582 = vmax.f32 %v5529, 0.0
  %v5583 = vmax.f32 %v5532, 0.0
  %v5584 = vmax.f32 %v5534, 0.0
  %v5585 = vmax.f32 %v5537, 0.0
  %v5586 = vmax.f32 %v5539, 0.0
  %v5587 = vmax.f32 %v5542, 0.0
  %v5588 = vmax.f32 %v5544, 0.0
  %v5589 = vmax.f32 %v5547, 0.0
  %v5590 = vmax.f32 %v5549, 0.0
  %v5591 = vmax.f32 %v5552, 0.0
  %v5592 = vmax.f32 %v5554, 0.0
  %v5593 = vmax.f32 %v5557, 0.0
  %v5594 = vmax.f32 %v5559, 0.0
  %v5595 = vmax.f32 %v5562, 0.0
  %v5596 = vmax.f32 %v5564, 0.0
  %v5597 = vmax.f32 %v5567, 0.0
  %v5598 = vmax.f32 %v5569, 0.0
  %v5599 = vmax.f32 %v5572, 0.0
  %v5600 = vpack.c.bf16 %v5576, %v5575
  %v5601 = vpack.c.bf16 %v5578, %v5577
  %v5602 = vpack.c.bf16 %v5580, %v5579
  %v5603 = vpack.c.bf16 %v5582, %v5581
  %v5604 = vpack.c.bf16 %v5584, %v5583
  %v5605 = vpack.c.bf16 %v5586, %v5585
  %v5606 = vpack.c.bf16 %v5588, %v5587
  %v5607 = vpack.c.bf16 %v5590, %v5589
  %v5608 = vpack.c.bf16 %v5592, %v5591
  %v5609 = vpack.c.bf16 %v5594, %v5593
  %v5610 = vpack.c.bf16 %v5596, %v5595
  %v5611 = vpack.c.bf16 %v5598, %v5597
  %v5612 = vpack.c.bf16 %v5599, %v5599
  %s5613 = scalar_lea.vmem %s1, 256
  %v5614 = vld [vmem:[%s5613] sm:$0xf]
  %v5615 = vld [vmem:[%s5613 + $0x4] sm:$0xf]
  %v5616 = vld [vmem:[%s5613 + $0x8] sm:$0xf]
  %v5617 = vld [vmem:[%s5613 + $0xc] sm:$0xf]
  %v5618 = vld [vmem:[%s5613 + $0x10] sm:$0xf]
  %v5619 = vld [vmem:[%s5613 + $0x14] sm:$0xf]
  %v5620 = vld [vmem:[%s5613 + $0x18] sm:$0xf]
  %v5621 = vld [vmem:[%s5613 + $0x1c] sm:$0xf]
  %v5622 = vld [vmem:[%s5613 + $0x20] sm:$0xf]
  %v5623 = vld [vmem:[%s5613 + $0x24] sm:$0xf]
  %v5624 = vld [vmem:[%s5613 + $0x28] sm:$0xf]
  %v5625 = vld [vmem:[%s5613 + $0x2c] sm:$0xf]
  %v5626 = vld [vmem:[%s5613 + $0x30] sm:$0xf]
  %v5627 = vld [vmem:[%s5613 + $0x34] sm:$0xf]
  %v5628 = vld [vmem:[%s5613 + $0x38] sm:$0xf]
  %v5629 = vld [vmem:[%s5613 + $0x3c] sm:$0xf]
  %s5630 = scalar_lea.vmem %s2, 4
  %v5631 = vld [vmem:[%s5630] sm:$0x1]
  %v5633 = vperm.slane %v5631, 0
  %v5651 = vunpack.c.l.b16 %v5614
  %v5652 = vunpack.c.l.b16 %v5615
  %v5653 = vunpack.c.l.b16 %v5616
  %v5654 = vunpack.c.l.b16 %v5617
  %v5655 = vunpack.c.l.b16 %v5618
  %v5656 = vunpack.c.l.b16 %v5619
  %v5657 = vunpack.c.l.b16 %v5620
  %v5658 = vunpack.c.l.b16 %v5621
  %v5659 = vunpack.c.l.b16 %v5622
  %v5660 = vunpack.c.l.b16 %v5623
  %v5661 = vunpack.c.l.b16 %v5624
  %v5662 = vunpack.c.l.b16 %v5625
  %v5663 = vunpack.c.l.b16 %v5626
  %v5664 = vunpack.c.l.b16 %v5627
  %v5665 = vunpack.c.l.b16 %v5628
  %v5666 = vunpack.c.l.b16 %v5629
  %v5667 = vpack.c.b16 %v5652, %v5651
  %v5668 = vpack.c.b16 %v5654, %v5653
  %v5669 = vpack.c.b16 %v5656, %v5655
  %v5670 = vpack.c.b16 %v5658, %v5657
  %v5671 = vpack.c.b16 %v5660, %v5659
  %v5672 = vpack.c.b16 %v5662, %v5661
  %v5673 = vpack.c.b16 %v5664, %v5663
  %v5674 = vpack.c.b16 %v5666, %v5665
  %5683 = vmatpush.bf16.msra.mxu0 %v5674
  %5684 = vmatpush.bf16.msra.mxu0 %v5673
  %5685 = vmatpush.bf16.msra.mxu0 %v5672
  %5686 = vmatpush.bf16.msra.mxu0 %v5671
  %5687 = vmatpush.bf16.msra.mxu0 %v5670
  %5688 = vmatpush.bf16.msra.mxu0 %v5669
  %5689 = vmatpush.bf16.msra.mxu0 %v5668
  %5690 = vmatpush.bf16.msra.mxu0 %v5667
  %5691 = vmatmul.bf16.gmra.mxu0 %v5600
  %v5692 = vpop.f32.mrf.mxu0
  %v5693 = vadd.f32 %v5633, %v5692
  %v5694 = vpop.f32.mrf.mxu0
  %v5695 = vadd.f32 %v5633, %v5694
  %5696 = vmatmul.bf16.gmra.mxu0 %v5601
  %v5697 = vpop.f32.mrf.mxu0
  %v5698 = vadd.f32 %v5633, %v5697
  %v5699 = vpop.f32.mrf.mxu0
  %v5700 = vadd.f32 %v5633, %v5699
  %5701 = vmatmul.bf16.gmra.mxu0 %v5602
  %v5702 = vpop.f32.mrf.mxu0
  %v5703 = vadd.f32 %v5633, %v5702
  %v5704 = vpop.f32.mrf.mxu0
  %v5705 = vadd.f32 %v5633, %v5704
  %5706 = vmatmul.bf16.gmra.mxu0 %v5603
  %v5707 = vpop.f32.mrf.mxu0
  %v5708 = vadd.f32 %v5633, %v5707
  %v5709 = vpop.f32.mrf.mxu0
  %v5710 = vadd.f32 %v5633, %v5709
  %5711 = vmatmul.bf16.gmra.mxu0 %v5604
  %v5712 = vpop.f32.mrf.mxu0
  %v5713 = vadd.f32 %v5633, %v5712
  %v5714 = vpop.f32.mrf.mxu0
  %v5715 = vadd.f32 %v5633, %v5714
  %5716 = vmatmul.bf16.gmra.mxu0 %v5605
  %v5717 = vpop.f32.mrf.mxu0
  %v5718 = vadd.f32 %v5633, %v5717
  %v5719 = vpop.f32.mrf.mxu0
  %v5720 = vadd.f32 %v5633, %v5719
  %5721 = vmatmul.bf16.gmra.mxu0 %v5606
  %v5722 = vpop.f32.mrf.mxu0
  %v5723 = vadd.f32 %v5633, %v5722
  %v5724 = vpop.f32.mrf.mxu0
  %v5725 = vadd.f32 %v5633, %v5724
  %5726 = vmatmul.bf16.gmra.mxu0 %v5607
  %v5727 = vpop.f32.mrf.mxu0
  %v5728 = vadd.f32 %v5633, %v5727
  %v5729 = vpop.f32.mrf.mxu0
  %v5730 = vadd.f32 %v5633, %v5729
  %5731 = vmatmul.bf16.gmra.mxu0 %v5608
  %v5732 = vpop.f32.mrf.mxu0
  %v5733 = vadd.f32 %v5633, %v5732
  %v5734 = vpop.f32.mrf.mxu0
  %v5735 = vadd.f32 %v5633, %v5734
  %5736 = vmatmul.bf16.gmra.mxu0 %v5609
  %v5737 = vpop.f32.mrf.mxu0
  %v5738 = vadd.f32 %v5633, %v5737
  %v5739 = vpop.f32.mrf.mxu0
  %v5740 = vadd.f32 %v5633, %v5739
  %5741 = vmatmul.bf16.gmra.mxu0 %v5610
  %v5742 = vpop.f32.mrf.mxu0
  %v5743 = vadd.f32 %v5633, %v5742
  %v5744 = vpop.f32.mrf.mxu0
  %v5745 = vadd.f32 %v5633, %v5744
  %5746 = vmatmul.bf16.gmra.mxu0 %v5611
  %v5747 = vpop.f32.mrf.mxu0
  %v5748 = vadd.f32 %v5633, %v5747
  %v5749 = vpop.f32.mrf.mxu0
  %v5750 = vadd.f32 %v5633, %v5749
  %5751 = vmatmul.bf16.gmra.mxu0 %v5612
  %v5752 = vpop.f32.mrf.mxu0
  %v5753 = vadd.f32 %v5633, %v5752
  %v5754 = vpop.f32.mrf.mxu0
  %5755 = vdwg.mxu0
  %vm5756 = vcmask 15360
  %5757 = vst.msk [vmem:[%s4] sm:$0xff] %vm5756, %v5693
  %5758 = vst.msk [vmem:[%s4 + $0x8] sm:$0xff] %vm5756, %v5695
  %5759 = vst.msk [vmem:[%s4 + $0x10] sm:$0xff] %vm5756, %v5698
  %5760 = vst.msk [vmem:[%s4 + $0x18] sm:$0xff] %vm5756, %v5700
  %5761 = vst.msk [vmem:[%s4 + $0x20] sm:$0xff] %vm5756, %v5703
  %5762 = vst.msk [vmem:[%s4 + $0x28] sm:$0xff] %vm5756, %v5705
  %5763 = vst.msk [vmem:[%s4 + $0x30] sm:$0xff] %vm5756, %v5708
  %5764 = vst.msk [vmem:[%s4 + $0x38] sm:$0xff] %vm5756, %v5710
  %5765 = vst.msk [vmem:[%s4 + $0x40] sm:$0xff] %vm5756, %v5713
  %5766 = vst.msk [vmem:[%s4 + $0x48] sm:$0xff] %vm5756, %v5715
  %5767 = vst.msk [vmem:[%s4 + $0x50] sm:$0xff] %vm5756, %v5718
  %5768 = vst.msk [vmem:[%s4 + $0x58] sm:$0xff] %vm5756, %v5720
  %5769 = vst.msk [vmem:[%s4 + $0x60] sm:$0xff] %vm5756, %v5723
  %5770 = vst.msk [vmem:[%s4 + $0x68] sm:$0xff] %vm5756, %v5725
  %5771 = vst.msk [vmem:[%s4 + $0x70] sm:$0xff] %vm5756, %v5728
  %5772 = vst.msk [vmem:[%s4 + $0x78] sm:$0xff] %vm5756, %v5730
  %5773 = vst.msk [vmem:[%s4 + $0x80] sm:$0xff] %vm5756, %v5733
  %5774 = vst.msk [vmem:[%s4 + $0x88] sm:$0xff] %vm5756, %v5735
  %5775 = vst.msk [vmem:[%s4 + $0x90] sm:$0xff] %vm5756, %v5738
  %5776 = vst.msk [vmem:[%s4 + $0x98] sm:$0xff] %vm5756, %v5740
  %5777 = vst.msk [vmem:[%s4 + $0xa0] sm:$0xff] %vm5756, %v5743
  %5778 = vst.msk [vmem:[%s4 + $0xa8] sm:$0xff] %vm5756, %v5745
  %5779 = vst.msk [vmem:[%s4 + $0xb0] sm:$0xff] %vm5756, %v5748
  %5780 = vst.msk [vmem:[%s4 + $0xb8] sm:$0xff] %vm5756, %v5750
  %5781 = vst.msk [vmem:[%s4 + $0xc0] sm:$0xff] %vm5756, %v5753
  // Predicated region
  $region18: #{vis_network.1} parent=0 // pred_check
    _
  $region19: #{vis_network.1} parent=0 // pred_check_branch
    %5783 = sbr.rel (0) target = $region21
  $region20: #{vis_network.1} parent=0 // pred_region
    _
  $region21: #{vis_network.1} parent=0 // pred_fallthru
    _
  // Predicated region
  $region22: #{vis_network.1} parent=0 // pred_check
    _
  $region23: #{vis_network.1} parent=0 // pred_check_branch
    %5785 = sbr.rel (0) target = $region25
  $region24: #{vis_network.1} parent=0 // pred_region
    _
  $region25: #{vis_network.1} parent=0 // pred_fallthru
    _

</llo_original>
